<compile_context>
chip_gen: v7x
topology: tpu7x:2x2x1
jax: 0.10.0
libtpu: 0.0.40
codegen_flags: <defaults>
</compile_context>

<pallas_src>
import jax
import jax.numpy as jnp
from jax import lax
from jax.experimental import pallas as pl
from jax.experimental.pallas import tpu as pltpu

hidden_dim = 20
input_dim = 1
look_back = 24
look_forward = 6
output_dim = 1


def lstm_linear_kernel(x_ref, wih_ref, b_ref, whh_ref, wlin_ref, blin_ref, out_ref):
    # x_ref:    (Bt, T)        lane-dense input block (D == 1 squeezed)
    # wih_ref:  (1, 4H)  f32   input->gate weights (g-gate entries pre-scaled by 2)
    # b_ref:    (1, 4H)  f32   combined bias b_ih + b_hh (g entries pre-scaled by 2)
    # whh_ref:  (H, 4H)  bf16  weight-stationary recurrent weights (g cols pre-scaled)
    # wlin_ref: (T, H, O) f32  final Linear weights, one (H, O) slice per timestep
    # blin_ref: (1, O)   f32
    # out_ref:  (Bt, O)  f32   doubles as the VMEM accumulator for the Linear layer
    Bt, T = x_ref.shape
    H = whh_ref.shape[0]

    # Linear bias -> output accumulator (lives in VMEM, off the vreg budget).
    out_ref[...] = jnp.broadcast_to(blin_ref[...], out_ref.shape)

    wih = wih_ref[...]
    b = b_ref[...]
    whh = whh_ref[...]          # constant MXU RHS, reused every step

    h = jnp.zeros((Bt, H), jnp.float32)
    c = jnp.zeros((Bt, H), jnp.float32)

    # Statically unrolled recurrence: critical path per step is
    #   1 bf16 MXU matmul + 1 fused sigmoid + 1 tanh + VPU elementwise.
    for t in range(T):
        # Input projection + bias: independent of h/c, so the LLO scheduler
        # overlaps it with the previous step's chain work.
        xw_t = x_ref[:, t:t + 1] * wih + b                       # (Bt, 4H)
        if t == 0:
            gates = xw_t                                         # h_0 == 0
        else:
            gates = xw_t + jnp.dot(hb, whh,
                                   preferred_element_type=jnp.float32)
        s = jax.nn.sigmoid(gates)                                # one fused EUP pass
        i_g = s[:, 0 * H:1 * H]
        f_g = s[:, 1 * H:2 * H]
        g_g = 2.0 * s[:, 2 * H:3 * H] - 1.0                      # tanh(x) = 2*sig(2x)-1
        o_g = s[:, 3 * H:4 * H]
        c = f_g * c + i_g * g_g
        h = o_g * jnp.tanh(c)
        hb = h.astype(jnp.bfloat16)                              # MXU operand, next step
        # Fused Linear contribution: tiny off-chain f32 matmul accumulated in VMEM.
        out_ref[...] += jnp.dot(h, wlin_ref[t],
                                preferred_element_type=jnp.float32)


def init_params(key):
    """Deterministic parameters with PyTorch-native shapes (gate order i,f,g,o)."""
    H, D = hidden_dim, input_dim
    O = look_forward * output_dim
    k = 1.0 / jnp.sqrt(jnp.float32(H))
    ks = jax.random.split(key, 6)
    return {
        "weight_ih": jax.random.uniform(ks[0], (4 * H, D), jnp.float32, -k, k),
        "weight_hh": jax.random.uniform(ks[1], (4 * H, H), jnp.float32, -k, k),
        "bias_ih":   jax.random.uniform(ks[2], (4 * H,),   jnp.float32, -k, k),
        "bias_hh":   jax.random.uniform(ks[3], (4 * H,),   jnp.float32, -k, k),
        "lin_w":     jax.random.uniform(ks[4], (O, look_back * H), jnp.float32, -k, k),
        "lin_b":     jax.random.uniform(ks[5], (O,),       jnp.float32, -k, k),
    }


def pack_params_for_kernel(p):
    H, T = hidden_dim, look_back
    O = look_forward * output_dim
    G = 4 * H
    # Pre-scale the g-gate (cell candidate) pre-activations by 2 so the kernel can run
    # ONE sigmoid over all four gates and recover tanh(x) = 2*sigmoid(2x) - 1.
    gate_scale = jnp.ones((G,), jnp.float32).at[2 * H:3 * H].set(2.0)
    # D == 1, so x_t @ W_ih.T == x_t * W_ih[:, 0]   (gate order i,f,g,o preserved).
    wih_row = (p["weight_ih"][:, 0] * gate_scale).reshape(1, G)            # (1, 4H)
    bias = ((p["bias_ih"] + p["bias_hh"]) * gate_scale).reshape(1, G)      # (1, 4H)
    # Weight-stationary recurrent matrix; bf16 because it only feeds the MXU
    # (scale-by-2 is exact in bf16).
    whh = (p["weight_hh"].T * gate_scale[None, :]).astype(jnp.bfloat16)    # (H, 4H)
    # Final Linear weight in PyTorch flatten order (t major, h minor), per-step slices.
    # Kept f32: its matmul is off the critical chain, so f32 MXU passes are free.
    wlin = p["lin_w"].T.reshape(T, H, O)                                   # (T, H, O)
    blin = p["lin_b"].reshape(1, O)                                        # (1, O)
    return wih_row, bias, whh, wlin, blin


def lstm_model_forward(x, p):
    """x: (B, T=look_back, D=input_dim) batch-first, like the PyTorch module."""
    B, T, D = x.shape
    assert T == look_back and D == input_dim
    H = hidden_dim
    O = look_forward * output_dim
    G = 4 * H

    wih_row, bias, whh, wlin, blin = pack_params_for_kernel(p)
    x2d = x[:, :, 0].astype(jnp.float32)                # (B, T): lane-dense, D squeezed

    # Batch block: the 24-step serial latency is a fixed cost per grid step, so use
    # blocks as large as the vreg budget allows (h + c = 32 vregs at bt=128) while
    # keeping >= 2 grid steps for B > 8 so both v7x TensorCores get work.
    if B <= 8:
        bt = B
    else:
        bt = min(128, ((-(-B // 2) + 7) // 8) * 8)
    nb = pl.cdiv(B, bt)

    out = pl.pallas_call(
        lstm_linear_kernel,
        out_shape=jax.ShapeDtypeStruct((B, O), jnp.float32),
        grid=(nb,),
        in_specs=[
            pl.BlockSpec((bt, T), lambda i: (i, 0)),        # x, batch-blocked
            pl.BlockSpec((1, G), lambda i: (0, 0)),         # W_ih row (g pre-scaled)
            pl.BlockSpec((1, G), lambda i: (0, 0)),         # combined bias (g pre-scaled)
            pl.BlockSpec((H, G), lambda i: (0, 0)),         # W_hh^T (bf16, stationary)
            pl.BlockSpec((T, H, O), lambda i: (0, 0, 0)),   # Linear weights per step
            pl.BlockSpec((1, O), lambda i: (0, 0)),         # Linear bias
        ],
        out_specs=pl.BlockSpec((bt, O), lambda i: (i, 0)),
        compiler_params=pltpu.CompilerParams(
            dimension_semantics=("parallel",)),
    )(x2d, wih_row, bias, whh, wlin, blin)
    return out.reshape(B, look_forward, output_dim)


def reference_forward(x, p):
    """Pure-JAX (f32) replica of the PyTorch forward for validation."""
    B, T, D = x.shape
    H = hidden_dim
    W_ih, W_hh = p["weight_ih"], p["weight_hh"]
    b = p["bias_ih"] + p["bias_hh"]

    def step(carry, x_t):
        h, c = carry
        gates = x_t @ W_ih.T + h @ W_hh.T + b
        i, f, g, o = jnp.split(gates, 4, axis=-1)
        i, f, o = jax.nn.sigmoid(i), jax.nn.sigmoid(f), jax.nn.sigmoid(o)
        g = jnp.tanh(g)
        c = f * c + i * g
        h = o * jnp.tanh(c)
        return (h, c), h

    h0 = jnp.zeros((B, H), jnp.float32)
    c0 = jnp.zeros((B, H), jnp.float32)
    _, hs = lax.scan(step, (h0, c0), jnp.transpose(x, (1, 0, 2)))       # (T, B, H)
    flat = jnp.transpose(hs, (1, 0, 2)).reshape(B, -1)                  # (B, T*H)
    out = flat @ p["lin_w"].T + p["lin_b"]
    return out.reshape(B, look_forward, output_dim)


if __name__ == "__main__":
    key = jax.random.PRNGKey(0)
    k_param, k_x = jax.random.split(key)
    params = init_params(k_param)

    B = 2
    x = jax.random.normal(k_x, (B, look_back, input_dim), jnp.float32)

    fwd = jax.jit(lstm_model_forward)
    out = jax.block_until_ready(fwd(x, params))

    ref = jax.block_until_ready(reference_forward(x, params))
    assert out.shape == (B, look_forward, output_dim)
    # Recurrent weights feed the MXU in bf16, so compare against the f32 reference
    # with a correspondingly loosened tolerance.
    assert jnp.allclose(out, ref, rtol=5e-2, atol=5e-2), (out, ref)

    print("KERNEL_OK")
</pallas_src>

<mosaic_0001>
module attributes {stable_mosaic.version = 11 : i64} {
  func.func @lstm_linear_kernel(%arg0: i32, %arg1: memref<2x24xf32, #tpu.memory_space<vmem>>, %arg2: memref<1x80xf32, #tpu.memory_space<vmem>>, %arg3: memref<1x80xf32, #tpu.memory_space<vmem>>, %arg4: memref<20x80xbf16, #tpu.memory_space<vmem>>, %arg5: memref<24x20x6xf32, #tpu.memory_space<vmem>>, %arg6: memref<1x6xf32, #tpu.memory_space<vmem>>, %arg7: memref<2x6xf32, #tpu.memory_space<vmem>>) attributes {dimension_semantics = [#tpu.dimension_semantics<parallel>], iteration_bounds = array<i64: 1>, scalar_prefetch = 0 : i64, scratch_operands = 0 : i64, tpu.core_type = #tpu.core_type<tc>, window_params = [{transform_indices = @transform_0, window_bounds = array<i64: 2, 24>}, {pipeline_mode = #tpu.pipeline_mode<synchronous>, transform_indices = @transform_1, window_bounds = array<i64: 1, 80>}, {pipeline_mode = #tpu.pipeline_mode<synchronous>, transform_indices = @transform_2, window_bounds = array<i64: 1, 80>}, {pipeline_mode = #tpu.pipeline_mode<synchronous>, transform_indices = @transform_3, window_bounds = array<i64: 20, 80>}, {pipeline_mode = #tpu.pipeline_mode<synchronous>, transform_indices = @transform_4, window_bounds = array<i64: 24, 20, 6>}, {pipeline_mode = #tpu.pipeline_mode<synchronous>, transform_indices = @transform_5, window_bounds = array<i64: 1, 6>}, {transform_indices = @transform_6, window_bounds = array<i64: 2, 6>}]} {
    %c0 = arith.constant 0 : index
    %c0_0 = arith.constant 0 : index
    %0 = vector.load %arg6[%c0, %c0_0] : memref<1x6xf32, #tpu.memory_space<vmem>>, vector<1x6xf32>
    %1 = vector.shape_cast %0 : vector<1x6xf32> to vector<1x6xf32>
    %2 = vector.broadcast %1 : vector<1x6xf32> to vector<2x6xf32>
    %c0_1 = arith.constant 0 : index
    %c0_2 = arith.constant 0 : index
    %3 = vector.load %arg7[%c0_1, %c0_2] : memref<2x6xf32, #tpu.memory_space<vmem>>, vector<2x6xf32>
    tpu.vector_store %arg7[%c0_1, %c0_2], %2 {strides = array<i32>} : memref<2x6xf32, #tpu.memory_space<vmem>>, vector<2x6xf32>,
    %c0_3 = arith.constant 0 : index
    %c0_4 = arith.constant 0 : index
    %4 = vector.load %arg2[%c0_3, %c0_4] : memref<1x80xf32, #tpu.memory_space<vmem>>, vector<1x80xf32>
    %c0_5 = arith.constant 0 : index
    %c0_6 = arith.constant 0 : index
    %5 = vector.load %arg3[%c0_5, %c0_6] : memref<1x80xf32, #tpu.memory_space<vmem>>, vector<1x80xf32>
    %c0_7 = arith.constant 0 : index
    %c0_8 = arith.constant 0 : index
    %6 = vector.load %arg4[%c0_7, %c0_8] : memref<20x80xbf16, #tpu.memory_space<vmem>>, vector<20x80xbf16>
    %cst = arith.constant 0.000000e+00 : f32
    %7 = vector.broadcast %cst : f32 to vector<2x20xf32>
    %c0_9 = arith.constant 0 : index
    %c0_10 = arith.constant 0 : index
    %8 = vector.load %arg1[%c0_9, %c0_10] : memref<2x24xf32, #tpu.memory_space<vmem>>, vector<2x1xf32>
    %9 = vector.broadcast %8 : vector<2x1xf32> to vector<2x80xf32>
    %10 = vector.broadcast %4 : vector<1x80xf32> to vector<2x80xf32>
    %11 = arith.mulf %9, %10 : vector<2x80xf32>
    %12 = vector.broadcast %5 : vector<1x80xf32> to vector<2x80xf32>
    %13 = arith.addf %11, %12 : vector<2x80xf32>
    %14 = arith.negf %13 : vector<2x80xf32>
    %15 = math.exp %14 : vector<2x80xf32>
    %cst_11 = arith.constant 1.000000e+00 : f32
    %16 = vector.broadcast %cst_11 : f32 to vector<2x80xf32>
    %17 = arith.addf %16, %15 : vector<2x80xf32>
    %18 = arith.divf %16, %17 : vector<2x80xf32>
    %19 = vector.extract_strided_slice %18 {offsets = [0, 0], sizes = [2, 20], strides = [1, 1]} : vector<2x80xf32> to vector<2x20xf32>
    %20 = vector.extract_strided_slice %18 {offsets = [0, 20], sizes = [2, 20], strides = [1, 1]} : vector<2x80xf32> to vector<2x20xf32>
    %21 = vector.extract_strided_slice %18 {offsets = [0, 40], sizes = [2, 20], strides = [1, 1]} : vector<2x80xf32> to vector<2x20xf32>
    %cst_12 = arith.constant 2.000000e+00 : f32
    %22 = vector.broadcast %cst_12 : f32 to vector<2x20xf32>
    %23 = arith.mulf %22, %21 : vector<2x20xf32>
    %cst_13 = arith.constant 1.000000e+00 : f32
    %24 = vector.broadcast %cst_13 : f32 to vector<2x20xf32>
    %25 = arith.subf %23, %24 : vector<2x20xf32>
    %26 = vector.extract_strided_slice %18 {offsets = [0, 60], sizes = [2, 20], strides = [1, 1]} : vector<2x80xf32> to vector<2x20xf32>
    %27 = arith.mulf %20, %7 : vector<2x20xf32>
    %28 = arith.mulf %19, %25 : vector<2x20xf32>
    %29 = arith.addf %27, %28 : vector<2x20xf32>
    %30 = math.tanh %29 : vector<2x20xf32>
    %31 = arith.mulf %26, %30 : vector<2x20xf32>
    %32 = arith.truncf %31 : vector<2x20xf32> to vector<2x20xbf16>
    %c0_14 = arith.constant 0 : index
    %c0_15 = arith.constant 0 : index
    %33 = vector.load %arg7[%c0_14, %c0_15] : memref<2x6xf32, #tpu.memory_space<vmem>>, vector<2x6xf32>
    %c0_16 = arith.constant 0 : index
    %c0_17 = arith.constant 0 : index
    %c0_18 = arith.constant 0 : index
    %34 = vector.load %arg5[%c0_16, %c0_17, %c0_18] : memref<24x20x6xf32, #tpu.memory_space<vmem>>, vector<1x20x6xf32>
    %35 = vector.shape_cast %34 : vector<1x20x6xf32> to vector<20x6xf32>
    %cst_19 = arith.constant dense<0.000000e+00> : vector<2x6xf32>
    %36 = tpu.matmul %31, %35, %cst_19 {dimension_numbers = #tpu.dot_dimension_numbers<[1], [0], [0], [1], [0, 0, 1, 1], [], []>} : vector<2x20xf32>, vector<20x6xf32>, vector<2x6xf32> -> vector<2x6xf32>
    %37 = arith.addf %33, %36 : vector<2x6xf32>
    %c0_20 = arith.constant 0 : index
    %c0_21 = arith.constant 0 : index
    %38 = vector.load %arg7[%c0_20, %c0_21] : memref<2x6xf32, #tpu.memory_space<vmem>>, vector<2x6xf32>
    tpu.vector_store %arg7[%c0_20, %c0_21], %37 {strides = array<i32>} : memref<2x6xf32, #tpu.memory_space<vmem>>, vector<2x6xf32>,
    %c0_22 = arith.constant 0 : index
    %c1 = arith.constant 1 : index
    %39 = vector.load %arg1[%c0_22, %c1] : memref<2x24xf32, #tpu.memory_space<vmem>>, vector<2x1xf32>
    %40 = vector.broadcast %39 : vector<2x1xf32> to vector<2x80xf32>
    %41 = vector.broadcast %4 : vector<1x80xf32> to vector<2x80xf32>
    %42 = arith.mulf %40, %41 : vector<2x80xf32>
    %43 = vector.broadcast %5 : vector<1x80xf32> to vector<2x80xf32>
    %44 = arith.addf %42, %43 : vector<2x80xf32>
    %cst_23 = arith.constant dense<0.000000e+00> : vector<2x80xf32>
    %45 = tpu.matmul %32, %6, %cst_23 {dimension_numbers = #tpu.dot_dimension_numbers<[1], [0], [0], [1], [0, 0, 1, 1], [], []>} : vector<2x20xbf16>, vector<20x80xbf16>, vector<2x80xf32> -> vector<2x80xf32>
    %46 = arith.addf %44, %45 : vector<2x80xf32>
    %47 = arith.negf %46 : vector<2x80xf32>
    %48 = math.exp %47 : vector<2x80xf32>
    %cst_24 = arith.constant 1.000000e+00 : f32
    %49 = vector.broadcast %cst_24 : f32 to vector<2x80xf32>
    %50 = arith.addf %49, %48 : vector<2x80xf32>
    %51 = arith.divf %49, %50 : vector<2x80xf32>
    %52 = vector.extract_strided_slice %51 {offsets = [0, 0], sizes = [2, 20], strides = [1, 1]} : vector<2x80xf32> to vector<2x20xf32>
    %53 = vector.extract_strided_slice %51 {offsets = [0, 20], sizes = [2, 20], strides = [1, 1]} : vector<2x80xf32> to vector<2x20xf32>
    %54 = vector.extract_strided_slice %51 {offsets = [0, 40], sizes = [2, 20], strides = [1, 1]} : vector<2x80xf32> to vector<2x20xf32>
    %cst_25 = arith.constant 2.000000e+00 : f32
    %55 = vector.broadcast %cst_25 : f32 to vector<2x20xf32>
    %56 = arith.mulf %55, %54 : vector<2x20xf32>
    %cst_26 = arith.constant 1.000000e+00 : f32
    %57 = vector.broadcast %cst_26 : f32 to vector<2x20xf32>
    %58 = arith.subf %56, %57 : vector<2x20xf32>
    %59 = vector.extract_strided_slice %51 {offsets = [0, 60], sizes = [2, 20], strides = [1, 1]} : vector<2x80xf32> to vector<2x20xf32>
    %60 = arith.mulf %53, %29 : vector<2x20xf32>
    %61 = arith.mulf %52, %58 : vector<2x20xf32>
    %62 = arith.addf %60, %61 : vector<2x20xf32>
    %63 = math.tanh %62 : vector<2x20xf32>
    %64 = arith.mulf %59, %63 : vector<2x20xf32>
    %65 = arith.truncf %64 : vector<2x20xf32> to vector<2x20xbf16>
    %c0_27 = arith.constant 0 : index
    %c0_28 = arith.constant 0 : index
    %66 = vector.load %arg7[%c0_27, %c0_28] : memref<2x6xf32, #tpu.memory_space<vmem>>, vector<2x6xf32>
    %c1_29 = arith.constant 1 : index
    %c0_30 = arith.constant 0 : index
    %c0_31 = arith.constant 0 : index
    %67 = vector.load %arg5[%c1_29, %c0_30, %c0_31] : memref<24x20x6xf32, #tpu.memory_space<vmem>>, vector<1x20x6xf32>
    %68 = vector.shape_cast %67 : vector<1x20x6xf32> to vector<20x6xf32>
    %cst_32 = arith.constant dense<0.000000e+00> : vector<2x6xf32>
    %69 = tpu.matmul %64, %68, %cst_32 {dimension_numbers = #tpu.dot_dimension_numbers<[1], [0], [0], [1], [0, 0, 1, 1], [], []>} : vector<2x20xf32>, vector<20x6xf32>, vector<2x6xf32> -> vector<2x6xf32>
    %70 = arith.addf %66, %69 : vector<2x6xf32>
    %c0_33 = arith.constant 0 : index
    %c0_34 = arith.constant 0 : index
    %71 = vector.load %arg7[%c0_33, %c0_34] : memref<2x6xf32, #tpu.memory_space<vmem>>, vector<2x6xf32>
    tpu.vector_store %arg7[%c0_33, %c0_34], %70 {strides = array<i32>} : memref<2x6xf32, #tpu.memory_space<vmem>>, vector<2x6xf32>,
    %c0_35 = arith.constant 0 : index
    %c2 = arith.constant 2 : index
    %72 = vector.load %arg1[%c0_35, %c2] : memref<2x24xf32, #tpu.memory_space<vmem>>, vector<2x1xf32>
    %73 = vector.broadcast %72 : vector<2x1xf32> to vector<2x80xf32>
    %74 = vector.broadcast %4 : vector<1x80xf32> to vector<2x80xf32>
    %75 = arith.mulf %73, %74 : vector<2x80xf32>
    %76 = vector.broadcast %5 : vector<1x80xf32> to vector<2x80xf32>
    %77 = arith.addf %75, %76 : vector<2x80xf32>
    %cst_36 = arith.constant dense<0.000000e+00> : vector<2x80xf32>
    %78 = tpu.matmul %65, %6, %cst_36 {dimension_numbers = #tpu.dot_dimension_numbers<[1], [0], [0], [1], [0, 0, 1, 1], [], []>} : vector<2x20xbf16>, vector<20x80xbf16>, vector<2x80xf32> -> vector<2x80xf32>
    %79 = arith.addf %77, %78 : vector<2x80xf32>
    %80 = arith.negf %79 : vector<2x80xf32>
    %81 = math.exp %80 : vector<2x80xf32>
    %cst_37 = arith.constant 1.000000e+00 : f32
    %82 = vector.broadcast %cst_37 : f32 to vector<2x80xf32>
    %83 = arith.addf %82, %81 : vector<2x80xf32>
    %84 = arith.divf %82, %83 : vector<2x80xf32>
    %85 = vector.extract_strided_slice %84 {offsets = [0, 0], sizes = [2, 20], strides = [1, 1]} : vector<2x80xf32> to vector<2x20xf32>
    %86 = vector.extract_strided_slice %84 {offsets = [0, 20], sizes = [2, 20], strides = [1, 1]} : vector<2x80xf32> to vector<2x20xf32>
    %87 = vector.extract_strided_slice %84 {offsets = [0, 40], sizes = [2, 20], strides = [1, 1]} : vector<2x80xf32> to vector<2x20xf32>
    %cst_38 = arith.constant 2.000000e+00 : f32
    %88 = vector.broadcast %cst_38 : f32 to vector<2x20xf32>
    %89 = arith.mulf %88, %87 : vector<2x20xf32>
    %cst_39 = arith.constant 1.000000e+00 : f32
    %90 = vector.broadcast %cst_39 : f32 to vector<2x20xf32>
    %91 = arith.subf %89, %90 : vector<2x20xf32>
    %92 = vector.extract_strided_slice %84 {offsets = [0, 60], sizes = [2, 20], strides = [1, 1]} : vector<2x80xf32> to vector<2x20xf32>
    %93 = arith.mulf %86, %62 : vector<2x20xf32>
    %94 = arith.mulf %85, %91 : vector<2x20xf32>
    %95 = arith.addf %93, %94 : vector<2x20xf32>
    %96 = math.tanh %95 : vector<2x20xf32>
    %97 = arith.mulf %92, %96 : vector<2x20xf32>
    %98 = arith.truncf %97 : vector<2x20xf32> to vector<2x20xbf16>
    %c0_40 = arith.constant 0 : index
    %c0_41 = arith.constant 0 : index
    %99 = vector.load %arg7[%c0_40, %c0_41] : memref<2x6xf32, #tpu.memory_space<vmem>>, vector<2x6xf32>
    %c2_42 = arith.constant 2 : index
    %c0_43 = arith.constant 0 : index
    %c0_44 = arith.constant 0 : index
    %100 = vector.load %arg5[%c2_42, %c0_43, %c0_44] : memref<24x20x6xf32, #tpu.memory_space<vmem>>, vector<1x20x6xf32>
    %101 = vector.shape_cast %100 : vector<1x20x6xf32> to vector<20x6xf32>
    %cst_45 = arith.constant dense<0.000000e+00> : vector<2x6xf32>
    %102 = tpu.matmul %97, %101, %cst_45 {dimension_numbers = #tpu.dot_dimension_numbers<[1], [0], [0], [1], [0, 0, 1, 1], [], []>} : vector<2x20xf32>, vector<20x6xf32>, vector<2x6xf32> -> vector<2x6xf32>
    %103 = arith.addf %99, %102 : vector<2x6xf32>
    %c0_46 = arith.constant 0 : index
    %c0_47 = arith.constant 0 : index
    %104 = vector.load %arg7[%c0_46, %c0_47] : memref<2x6xf32, #tpu.memory_space<vmem>>, vector<2x6xf32>
    tpu.vector_store %arg7[%c0_46, %c0_47], %103 {strides = array<i32>} : memref<2x6xf32, #tpu.memory_space<vmem>>, vector<2x6xf32>,
    %c0_48 = arith.constant 0 : index
    %c3 = arith.constant 3 : index
    %105 = vector.load %arg1[%c0_48, %c3] : memref<2x24xf32, #tpu.memory_space<vmem>>, vector<2x1xf32>
    %106 = vector.broadcast %105 : vector<2x1xf32> to vector<2x80xf32>
    %107 = vector.broadcast %4 : vector<1x80xf32> to vector<2x80xf32>
    %108 = arith.mulf %106, %107 : vector<2x80xf32>
    %109 = vector.broadcast %5 : vector<1x80xf32> to vector<2x80xf32>
    %110 = arith.addf %108, %109 : vector<2x80xf32>
    %cst_49 = arith.constant dense<0.000000e+00> : vector<2x80xf32>
    %111 = tpu.matmul %98, %6, %cst_49 {dimension_numbers = #tpu.dot_dimension_numbers<[1], [0], [0], [1], [0, 0, 1, 1], [], []>} : vector<2x20xbf16>, vector<20x80xbf16>, vector<2x80xf32> -> vector<2x80xf32>
    %112 = arith.addf %110, %111 : vector<2x80xf32>
    %113 = arith.negf %112 : vector<2x80xf32>
    %114 = math.exp %113 : vector<2x80xf32>
    %cst_50 = arith.constant 1.000000e+00 : f32
    %115 = vector.broadcast %cst_50 : f32 to vector<2x80xf32>
    %116 = arith.addf %115, %114 : vector<2x80xf32>
    %117 = arith.divf %115, %116 : vector<2x80xf32>
    %118 = vector.extract_strided_slice %117 {offsets = [0, 0], sizes = [2, 20], strides = [1, 1]} : vector<2x80xf32> to vector<2x20xf32>
    %119 = vector.extract_strided_slice %117 {offsets = [0, 20], sizes = [2, 20], strides = [1, 1]} : vector<2x80xf32> to vector<2x20xf32>
    %120 = vector.extract_strided_slice %117 {offsets = [0, 40], sizes = [2, 20], strides = [1, 1]} : vector<2x80xf32> to vector<2x20xf32>
    %cst_51 = arith.constant 2.000000e+00 : f32
    %121 = vector.broadcast %cst_51 : f32 to vector<2x20xf32>
    %122 = arith.mulf %121, %120 : vector<2x20xf32>
    %cst_52 = arith.constant 1.000000e+00 : f32
    %123 = vector.broadcast %cst_52 : f32 to vector<2x20xf32>
    %124 = arith.subf %122, %123 : vector<2x20xf32>
    %125 = vector.extract_strided_slice %117 {offsets = [0, 60], sizes = [2, 20], strides = [1, 1]} : vector<2x80xf32> to vector<2x20xf32>
    %126 = arith.mulf %119, %95 : vector<2x20xf32>
    %127 = arith.mulf %118, %124 : vector<2x20xf32>
    %128 = arith.addf %126, %127 : vector<2x20xf32>
    %129 = math.tanh %128 : vector<2x20xf32>
    %130 = arith.mulf %125, %129 : vector<2x20xf32>
    %131 = arith.truncf %130 : vector<2x20xf32> to vector<2x20xbf16>
    %c0_53 = arith.constant 0 : index
    %c0_54 = arith.constant 0 : index
    %132 = vector.load %arg7[%c0_53, %c0_54] : memref<2x6xf32, #tpu.memory_space<vmem>>, vector<2x6xf32>
    %c3_55 = arith.constant 3 : index
    %c0_56 = arith.constant 0 : index
    %c0_57 = arith.constant 0 : index
    %133 = vector.load %arg5[%c3_55, %c0_56, %c0_57] : memref<24x20x6xf32, #tpu.memory_space<vmem>>, vector<1x20x6xf32>
    %134 = vector.shape_cast %133 : vector<1x20x6xf32> to vector<20x6xf32>
    %cst_58 = arith.constant dense<0.000000e+00> : vector<2x6xf32>
    %135 = tpu.matmul %130, %134, %cst_58 {dimension_numbers = #tpu.dot_dimension_numbers<[1], [0], [0], [1], [0, 0, 1, 1], [], []>} : vector<2x20xf32>, vector<20x6xf32>, vector<2x6xf32> -> vector<2x6xf32>
    %136 = arith.addf %132, %135 : vector<2x6xf32>
    %c0_59 = arith.constant 0 : index
    %c0_60 = arith.constant 0 : index
    %137 = vector.load %arg7[%c0_59, %c0_60] : memref<2x6xf32, #tpu.memory_space<vmem>>, vector<2x6xf32>
    tpu.vector_store %arg7[%c0_59, %c0_60], %136 {strides = array<i32>} : memref<2x6xf32, #tpu.memory_space<vmem>>, vector<2x6xf32>,
    %c0_61 = arith.constant 0 : index
    %c4 = arith.constant 4 : index
    %138 = vector.load %arg1[%c0_61, %c4] : memref<2x24xf32, #tpu.memory_space<vmem>>, vector<2x1xf32>
    %139 = vector.broadcast %138 : vector<2x1xf32> to vector<2x80xf32>
    %140 = vector.broadcast %4 : vector<1x80xf32> to vector<2x80xf32>
    %141 = arith.mulf %139, %140 : vector<2x80xf32>
    %142 = vector.broadcast %5 : vector<1x80xf32> to vector<2x80xf32>
    %143 = arith.addf %141, %142 : vector<2x80xf32>
    %cst_62 = arith.constant dense<0.000000e+00> : vector<2x80xf32>
    %144 = tpu.matmul %131, %6, %cst_62 {dimension_numbers = #tpu.dot_dimension_numbers<[1], [0], [0], [1], [0, 0, 1, 1], [], []>} : vector<2x20xbf16>, vector<20x80xbf16>, vector<2x80xf32> -> vector<2x80xf32>
    %145 = arith.addf %143, %144 : vector<2x80xf32>
    %146 = arith.negf %145 : vector<2x80xf32>
    %147 = math.exp %146 : vector<2x80xf32>
    %cst_63 = arith.constant 1.000000e+00 : f32
    %148 = vector.broadcast %cst_63 : f32 to vector<2x80xf32>
    %149 = arith.addf %148, %147 : vector<2x80xf32>
    %150 = arith.divf %148, %149 : vector<2x80xf32>
    %151 = vector.extract_strided_slice %150 {offsets = [0, 0], sizes = [2, 20], strides = [1, 1]} : vector<2x80xf32> to vector<2x20xf32>
    %152 = vector.extract_strided_slice %150 {offsets = [0, 20], sizes = [2, 20], strides = [1, 1]} : vector<2x80xf32> to vector<2x20xf32>
    %153 = vector.extract_strided_slice %150 {offsets = [0, 40], sizes = [2, 20], strides = [1, 1]} : vector<2x80xf32> to vector<2x20xf32>
    %cst_64 = arith.constant 2.000000e+00 : f32
    %154 = vector.broadcast %cst_64 : f32 to vector<2x20xf32>
    %155 = arith.mulf %154, %153 : vector<2x20xf32>
    %cst_65 = arith.constant 1.000000e+00 : f32
    %156 = vector.broadcast %cst_65 : f32 to vector<2x20xf32>
    %157 = arith.subf %155, %156 : vector<2x20xf32>
    %158 = vector.extract_strided_slice %150 {offsets = [0, 60], sizes = [2, 20], strides = [1, 1]} : vector<2x80xf32> to vector<2x20xf32>
    %159 = arith.mulf %152, %128 : vector<2x20xf32>
    %160 = arith.mulf %151, %157 : vector<2x20xf32>
    %161 = arith.addf %159, %160 : vector<2x20xf32>
    %162 = math.tanh %161 : vector<2x20xf32>
    %163 = arith.mulf %158, %162 : vector<2x20xf32>
    %164 = arith.truncf %163 : vector<2x20xf32> to vector<2x20xbf16>
    %c0_66 = arith.constant 0 : index
    %c0_67 = arith.constant 0 : index
    %165 = vector.load %arg7[%c0_66, %c0_67] : memref<2x6xf32, #tpu.memory_space<vmem>>, vector<2x6xf32>
    %c4_68 = arith.constant 4 : index
    %c0_69 = arith.constant 0 : index
    %c0_70 = arith.constant 0 : index
    %166 = vector.load %arg5[%c4_68, %c0_69, %c0_70] : memref<24x20x6xf32, #tpu.memory_space<vmem>>, vector<1x20x6xf32>
    %167 = vector.shape_cast %166 : vector<1x20x6xf32> to vector<20x6xf32>
    %cst_71 = arith.constant dense<0.000000e+00> : vector<2x6xf32>
    %168 = tpu.matmul %163, %167, %cst_71 {dimension_numbers = #tpu.dot_dimension_numbers<[1], [0], [0], [1], [0, 0, 1, 1], [], []>} : vector<2x20xf32>, vector<20x6xf32>, vector<2x6xf32> -> vector<2x6xf32>
    %169 = arith.addf %165, %168 : vector<2x6xf32>
    %c0_72 = arith.constant 0 : index
    %c0_73 = arith.constant 0 : index
    %170 = vector.load %arg7[%c0_72, %c0_73] : memref<2x6xf32, #tpu.memory_space<vmem>>, vector<2x6xf32>
    tpu.vector_store %arg7[%c0_72, %c0_73], %169 {strides = array<i32>} : memref<2x6xf32, #tpu.memory_space<vmem>>, vector<2x6xf32>,
    %c0_74 = arith.constant 0 : index
    %c5 = arith.constant 5 : index
    %171 = vector.load %arg1[%c0_74, %c5] : memref<2x24xf32, #tpu.memory_space<vmem>>, vector<2x1xf32>
    %172 = vector.broadcast %171 : vector<2x1xf32> to vector<2x80xf32>
    %173 = vector.broadcast %4 : vector<1x80xf32> to vector<2x80xf32>
    %174 = arith.mulf %172, %173 : vector<2x80xf32>
    %175 = vector.broadcast %5 : vector<1x80xf32> to vector<2x80xf32>
    %176 = arith.addf %174, %175 : vector<2x80xf32>
    %cst_75 = arith.constant dense<0.000000e+00> : vector<2x80xf32>
    %177 = tpu.matmul %164, %6, %cst_75 {dimension_numbers = #tpu.dot_dimension_numbers<[1], [0], [0], [1], [0, 0, 1, 1], [], []>} : vector<2x20xbf16>, vector<20x80xbf16>, vector<2x80xf32> -> vector<2x80xf32>
    %178 = arith.addf %176, %177 : vector<2x80xf32>
    %179 = arith.negf %178 : vector<2x80xf32>
    %180 = math.exp %179 : vector<2x80xf32>
    %cst_76 = arith.constant 1.000000e+00 : f32
    %181 = vector.broadcast %cst_76 : f32 to vector<2x80xf32>
    %182 = arith.addf %181, %180 : vector<2x80xf32>
    %183 = arith.divf %181, %182 : vector<2x80xf32>
    %184 = vector.extract_strided_slice %183 {offsets = [0, 0], sizes = [2, 20], strides = [1, 1]} : vector<2x80xf32> to vector<2x20xf32>
    %185 = vector.extract_strided_slice %183 {offsets = [0, 20], sizes = [2, 20], strides = [1, 1]} : vector<2x80xf32> to vector<2x20xf32>
    %186 = vector.extract_strided_slice %183 {offsets = [0, 40], sizes = [2, 20], strides = [1, 1]} : vector<2x80xf32> to vector<2x20xf32>
    %cst_77 = arith.constant 2.000000e+00 : f32
    %187 = vector.broadcast %cst_77 : f32 to vector<2x20xf32>
    %188 = arith.mulf %187, %186 : vector<2x20xf32>
    %cst_78 = arith.constant 1.000000e+00 : f32
    %189 = vector.broadcast %cst_78 : f32 to vector<2x20xf32>
    %190 = arith.subf %188, %189 : vector<2x20xf32>
    %191 = vector.extract_strided_slice %183 {offsets = [0, 60], sizes = [2, 20], strides = [1, 1]} : vector<2x80xf32> to vector<2x20xf32>
    %192 = arith.mulf %185, %161 : vector<2x20xf32>
    %193 = arith.mulf %184, %190 : vector<2x20xf32>
    %194 = arith.addf %192, %193 : vector<2x20xf32>
    %195 = math.tanh %194 : vector<2x20xf32>
    %196 = arith.mulf %191, %195 : vector<2x20xf32>
    %197 = arith.truncf %196 : vector<2x20xf32> to vector<2x20xbf16>
    %c0_79 = arith.constant 0 : index
    %c0_80 = arith.constant 0 : index
    %198 = vector.load %arg7[%c0_79, %c0_80] : memref<2x6xf32, #tpu.memory_space<vmem>>, vector<2x6xf32>
    %c5_81 = arith.constant 5 : index
    %c0_82 = arith.constant 0 : index
    %c0_83 = arith.constant 0 : index
    %199 = vector.load %arg5[%c5_81, %c0_82, %c0_83] : memref<24x20x6xf32, #tpu.memory_space<vmem>>, vector<1x20x6xf32>
    %200 = vector.shape_cast %199 : vector<1x20x6xf32> to vector<20x6xf32>
    %cst_84 = arith.constant dense<0.000000e+00> : vector<2x6xf32>
    %201 = tpu.matmul %196, %200, %cst_84 {dimension_numbers = #tpu.dot_dimension_numbers<[1], [0], [0], [1], [0, 0, 1, 1], [], []>} : vector<2x20xf32>, vector<20x6xf32>, vector<2x6xf32> -> vector<2x6xf32>
    %202 = arith.addf %198, %201 : vector<2x6xf32>
    %c0_85 = arith.constant 0 : index
    %c0_86 = arith.constant 0 : index
    %203 = vector.load %arg7[%c0_85, %c0_86] : memref<2x6xf32, #tpu.memory_space<vmem>>, vector<2x6xf32>
    tpu.vector_store %arg7[%c0_85, %c0_86], %202 {strides = array<i32>} : memref<2x6xf32, #tpu.memory_space<vmem>>, vector<2x6xf32>,
    %c0_87 = arith.constant 0 : index
    %c6 = arith.constant 6 : index
    %204 = vector.load %arg1[%c0_87, %c6] : memref<2x24xf32, #tpu.memory_space<vmem>>, vector<2x1xf32>
    %205 = vector.broadcast %204 : vector<2x1xf32> to vector<2x80xf32>
    %206 = vector.broadcast %4 : vector<1x80xf32> to vector<2x80xf32>
    %207 = arith.mulf %205, %206 : vector<2x80xf32>
    %208 = vector.broadcast %5 : vector<1x80xf32> to vector<2x80xf32>
    %209 = arith.addf %207, %208 : vector<2x80xf32>
    %cst_88 = arith.constant dense<0.000000e+00> : vector<2x80xf32>
    %210 = tpu.matmul %197, %6, %cst_88 {dimension_numbers = #tpu.dot_dimension_numbers<[1], [0], [0], [1], [0, 0, 1, 1], [], []>} : vector<2x20xbf16>, vector<20x80xbf16>, vector<2x80xf32> -> vector<2x80xf32>
    %211 = arith.addf %209, %210 : vector<2x80xf32>
    %212 = arith.negf %211 : vector<2x80xf32>
    %213 = math.exp %212 : vector<2x80xf32>
    %cst_89 = arith.constant 1.000000e+00 : f32
    %214 = vector.broadcast %cst_89 : f32 to vector<2x80xf32>
    %215 = arith.addf %214, %213 : vector<2x80xf32>
    %216 = arith.divf %214, %215 : vector<2x80xf32>
    %217 = vector.extract_strided_slice %216 {offsets = [0, 0], sizes = [2, 20], strides = [1, 1]} : vector<2x80xf32> to vector<2x20xf32>
    %218 = vector.extract_strided_slice %216 {offsets = [0, 20], sizes = [2, 20], strides = [1, 1]} : vector<2x80xf32> to vector<2x20xf32>
    %219 = vector.extract_strided_slice %216 {offsets = [0, 40], sizes = [2, 20], strides = [1, 1]} : vector<2x80xf32> to vector<2x20xf32>
    %cst_90 = arith.constant 2.000000e+00 : f32
    %220 = vector.broadcast %cst_90 : f32 to vector<2x20xf32>
    %221 = arith.mulf %220, %219 : vector<2x20xf32>
    %cst_91 = arith.constant 1.000000e+00 : f32
    %222 = vector.broadcast %cst_91 : f32 to vector<2x20xf32>
    %223 = arith.subf %221, %222 : vector<2x20xf32>
    %224 = vector.extract_strided_slice %216 {offsets = [0, 60], sizes = [2, 20], strides = [1, 1]} : vector<2x80xf32> to vector<2x20xf32>
    %225 = arith.mulf %218, %194 : vector<2x20xf32>
    %226 = arith.mulf %217, %223 : vector<2x20xf32>
    %227 = arith.addf %225, %226 : vector<2x20xf32>
    %228 = math.tanh %227 : vector<2x20xf32>
    %229 = arith.mulf %224, %228 : vector<2x20xf32>
    %230 = arith.truncf %229 : vector<2x20xf32> to vector<2x20xbf16>
    %c0_92 = arith.constant 0 : index
    %c0_93 = arith.constant 0 : index
    %231 = vector.load %arg7[%c0_92, %c0_93] : memref<2x6xf32, #tpu.memory_space<vmem>>, vector<2x6xf32>
    %c6_94 = arith.constant 6 : index
    %c0_95 = arith.constant 0 : index
    %c0_96 = arith.constant 0 : index
    %232 = vector.load %arg5[%c6_94, %c0_95, %c0_96] : memref<24x20x6xf32, #tpu.memory_space<vmem>>, vector<1x20x6xf32>
    %233 = vector.shape_cast %232 : vector<1x20x6xf32> to vector<20x6xf32>
    %cst_97 = arith.constant dense<0.000000e+00> : vector<2x6xf32>
    %234 = tpu.matmul %229, %233, %cst_97 {dimension_numbers = #tpu.dot_dimension_numbers<[1], [0], [0], [1], [0, 0, 1, 1], [], []>} : vector<2x20xf32>, vector<20x6xf32>, vector<2x6xf32> -> vector<2x6xf32>
    %235 = arith.addf %231, %234 : vector<2x6xf32>
    %c0_98 = arith.constant 0 : index
    %c0_99 = arith.constant 0 : index
    %236 = vector.load %arg7[%c0_98, %c0_99] : memref<2x6xf32, #tpu.memory_space<vmem>>, vector<2x6xf32>
    tpu.vector_store %arg7[%c0_98, %c0_99], %235 {strides = array<i32>} : memref<2x6xf32, #tpu.memory_space<vmem>>, vector<2x6xf32>,
    %c0_100 = arith.constant 0 : index
    %c7 = arith.constant 7 : index
    %237 = vector.load %arg1[%c0_100, %c7] : memref<2x24xf32, #tpu.memory_space<vmem>>, vector<2x1xf32>
    %238 = vector.broadcast %237 : vector<2x1xf32> to vector<2x80xf32>
    %239 = vector.broadcast %4 : vector<1x80xf32> to vector<2x80xf32>
    %240 = arith.mulf %238, %239 : vector<2x80xf32>
    %241 = vector.broadcast %5 : vector<1x80xf32> to vector<2x80xf32>
    %242 = arith.addf %240, %241 : vector<2x80xf32>
    %cst_101 = arith.constant dense<0.000000e+00> : vector<2x80xf32>
    %243 = tpu.matmul %230, %6, %cst_101 {dimension_numbers = #tpu.dot_dimension_numbers<[1], [0], [0], [1], [0, 0, 1, 1], [], []>} : vector<2x20xbf16>, vector<20x80xbf16>, vector<2x80xf32> -> vector<2x80xf32>
    %244 = arith.addf %242, %243 : vector<2x80xf32>
    %245 = arith.negf %244 : vector<2x80xf32>
    %246 = math.exp %245 : vector<2x80xf32>
    %cst_102 = arith.constant 1.000000e+00 : f32
    %247 = vector.broadcast %cst_102 : f32 to vector<2x80xf32>
    %248 = arith.addf %247, %246 : vector<2x80xf32>
    %249 = arith.divf %247, %248 : vector<2x80xf32>
    %250 = vector.extract_strided_slice %249 {offsets = [0, 0], sizes = [2, 20], strides = [1, 1]} : vector<2x80xf32> to vector<2x20xf32>
    %251 = vector.extract_strided_slice %249 {offsets = [0, 20], sizes = [2, 20], strides = [1, 1]} : vector<2x80xf32> to vector<2x20xf32>
    %252 = vector.extract_strided_slice %249 {offsets = [0, 40], sizes = [2, 20], strides = [1, 1]} : vector<2x80xf32> to vector<2x20xf32>
    %cst_103 = arith.constant 2.000000e+00 : f32
    %253 = vector.broadcast %cst_103 : f32 to vector<2x20xf32>
    %254 = arith.mulf %253, %252 : vector<2x20xf32>
    %cst_104 = arith.constant 1.000000e+00 : f32
    %255 = vector.broadcast %cst_104 : f32 to vector<2x20xf32>
    %256 = arith.subf %254, %255 : vector<2x20xf32>
    %257 = vector.extract_strided_slice %249 {offsets = [0, 60], sizes = [2, 20], strides = [1, 1]} : vector<2x80xf32> to vector<2x20xf32>
    %258 = arith.mulf %251, %227 : vector<2x20xf32>
    %259 = arith.mulf %250, %256 : vector<2x20xf32>
    %260 = arith.addf %258, %259 : vector<2x20xf32>
    %261 = math.tanh %260 : vector<2x20xf32>
    %262 = arith.mulf %257, %261 : vector<2x20xf32>
    %263 = arith.truncf %262 : vector<2x20xf32> to vector<2x20xbf16>
    %c0_105 = arith.constant 0 : index
    %c0_106 = arith.constant 0 : index
    %264 = vector.load %arg7[%c0_105, %c0_106] : memref<2x6xf32, #tpu.memory_space<vmem>>, vector<2x6xf32>
    %c7_107 = arith.constant 7 : index
    %c0_108 = arith.constant 0 : index
    %c0_109 = arith.constant 0 : index
    %265 = vector.load %arg5[%c7_107, %c0_108, %c0_109] : memref<24x20x6xf32, #tpu.memory_space<vmem>>, vector<1x20x6xf32>
    %266 = vector.shape_cast %265 : vector<1x20x6xf32> to vector<20x6xf32>
    %cst_110 = arith.constant dense<0.000000e+00> : vector<2x6xf32>
    %267 = tpu.matmul %262, %266, %cst_110 {dimension_numbers = #tpu.dot_dimension_numbers<[1], [0], [0], [1], [0, 0, 1, 1], [], []>} : vector<2x20xf32>, vector<20x6xf32>, vector<2x6xf32> -> vector<2x6xf32>
    %268 = arith.addf %264, %267 : vector<2x6xf32>
    %c0_111 = arith.constant 0 : index
    %c0_112 = arith.constant 0 : index
    %269 = vector.load %arg7[%c0_111, %c0_112] : memref<2x6xf32, #tpu.memory_space<vmem>>, vector<2x6xf32>
    tpu.vector_store %arg7[%c0_111, %c0_112], %268 {strides = array<i32>} : memref<2x6xf32, #tpu.memory_space<vmem>>, vector<2x6xf32>,
    %c0_113 = arith.constant 0 : index
    %c8 = arith.constant 8 : index
    %270 = vector.load %arg1[%c0_113, %c8] : memref<2x24xf32, #tpu.memory_space<vmem>>, vector<2x1xf32>
    %271 = vector.broadcast %270 : vector<2x1xf32> to vector<2x80xf32>
    %272 = vector.broadcast %4 : vector<1x80xf32> to vector<2x80xf32>
    %273 = arith.mulf %271, %272 : vector<2x80xf32>
    %274 = vector.broadcast %5 : vector<1x80xf32> to vector<2x80xf32>
    %275 = arith.addf %273, %274 : vector<2x80xf32>
    %cst_114 = arith.constant dense<0.000000e+00> : vector<2x80xf32>
    %276 = tpu.matmul %263, %6, %cst_114 {dimension_numbers = #tpu.dot_dimension_numbers<[1], [0], [0], [1], [0, 0, 1, 1], [], []>} : vector<2x20xbf16>, vector<20x80xbf16>, vector<2x80xf32> -> vector<2x80xf32>
    %277 = arith.addf %275, %276 : vector<2x80xf32>
    %278 = arith.negf %277 : vector<2x80xf32>
    %279 = math.exp %278 : vector<2x80xf32>
    %cst_115 = arith.constant 1.000000e+00 : f32
    %280 = vector.broadcast %cst_115 : f32 to vector<2x80xf32>
    %281 = arith.addf %280, %279 : vector<2x80xf32>
    %282 = arith.divf %280, %281 : vector<2x80xf32>
    %283 = vector.extract_strided_slice %282 {offsets = [0, 0], sizes = [2, 20], strides = [1, 1]} : vector<2x80xf32> to vector<2x20xf32>
    %284 = vector.extract_strided_slice %282 {offsets = [0, 20], sizes = [2, 20], strides = [1, 1]} : vector<2x80xf32> to vector<2x20xf32>
    %285 = vector.extract_strided_slice %282 {offsets = [0, 40], sizes = [2, 20], strides = [1, 1]} : vector<2x80xf32> to vector<2x20xf32>
    %cst_116 = arith.constant 2.000000e+00 : f32
    %286 = vector.broadcast %cst_116 : f32 to vector<2x20xf32>
    %287 = arith.mulf %286, %285 : vector<2x20xf32>
    %cst_117 = arith.constant 1.000000e+00 : f32
    %288 = vector.broadcast %cst_117 : f32 to vector<2x20xf32>
    %289 = arith.subf %287, %288 : vector<2x20xf32>
    %290 = vector.extract_strided_slice %282 {offsets = [0, 60], sizes = [2, 20], strides = [1, 1]} : vector<2x80xf32> to vector<2x20xf32>
    %291 = arith.mulf %284, %260 : vector<2x20xf32>
    %292 = arith.mulf %283, %289 : vector<2x20xf32>
    %293 = arith.addf %291, %292 : vector<2x20xf32>
    %294 = math.tanh %293 : vector<2x20xf32>
    %295 = arith.mulf %290, %294 : vector<2x20xf32>
    %296 = arith.truncf %295 : vector<2x20xf32> to vector<2x20xbf16>
    %c0_118 = arith.constant 0 : index
    %c0_119 = arith.constant 0 : index
    %297 = vector.load %arg7[%c0_118, %c0_119] : memref<2x6xf32, #tpu.memory_space<vmem>>, vector<2x6xf32>
    %c8_120 = arith.constant 8 : index
    %c0_121 = arith.constant 0 : index
    %c0_122 = arith.constant 0 : index
    %298 = vector.load %arg5[%c8_120, %c0_121, %c0_122] : memref<24x20x6xf32, #tpu.memory_space<vmem>>, vector<1x20x6xf32>
    %299 = vector.shape_cast %298 : vector<1x20x6xf32> to vector<20x6xf32>
    %cst_123 = arith.constant dense<0.000000e+00> : vector<2x6xf32>
    %300 = tpu.matmul %295, %299, %cst_123 {dimension_numbers = #tpu.dot_dimension_numbers<[1], [0], [0], [1], [0, 0, 1, 1], [], []>} : vector<2x20xf32>, vector<20x6xf32>, vector<2x6xf32> -> vector<2x6xf32>
    %301 = arith.addf %297, %300 : vector<2x6xf32>
    %c0_124 = arith.constant 0 : index
    %c0_125 = arith.constant 0 : index
    %302 = vector.load %arg7[%c0_124, %c0_125] : memref<2x6xf32, #tpu.memory_space<vmem>>, vector<2x6xf32>
    tpu.vector_store %arg7[%c0_124, %c0_125], %301 {strides = array<i32>} : memref<2x6xf32, #tpu.memory_space<vmem>>, vector<2x6xf32>,
    %c0_126 = arith.constant 0 : index
    %c9 = arith.constant 9 : index
    %303 = vector.load %arg1[%c0_126, %c9] : memref<2x24xf32, #tpu.memory_space<vmem>>, vector<2x1xf32>
    %304 = vector.broadcast %303 : vector<2x1xf32> to vector<2x80xf32>
    %305 = vector.broadcast %4 : vector<1x80xf32> to vector<2x80xf32>
    %306 = arith.mulf %304, %305 : vector<2x80xf32>
    %307 = vector.broadcast %5 : vector<1x80xf32> to vector<2x80xf32>
    %308 = arith.addf %306, %307 : vector<2x80xf32>
    %cst_127 = arith.constant dense<0.000000e+00> : vector<2x80xf32>
    %309 = tpu.matmul %296, %6, %cst_127 {dimension_numbers = #tpu.dot_dimension_numbers<[1], [0], [0], [1], [0, 0, 1, 1], [], []>} : vector<2x20xbf16>, vector<20x80xbf16>, vector<2x80xf32> -> vector<2x80xf32>
    %310 = arith.addf %308, %309 : vector<2x80xf32>
    %311 = arith.negf %310 : vector<2x80xf32>
    %312 = math.exp %311 : vector<2x80xf32>
    %cst_128 = arith.constant 1.000000e+00 : f32
    %313 = vector.broadcast %cst_128 : f32 to vector<2x80xf32>
    %314 = arith.addf %313, %312 : vector<2x80xf32>
    %315 = arith.divf %313, %314 : vector<2x80xf32>
    %316 = vector.extract_strided_slice %315 {offsets = [0, 0], sizes = [2, 20], strides = [1, 1]} : vector<2x80xf32> to vector<2x20xf32>
    %317 = vector.extract_strided_slice %315 {offsets = [0, 20], sizes = [2, 20], strides = [1, 1]} : vector<2x80xf32> to vector<2x20xf32>
    %318 = vector.extract_strided_slice %315 {offsets = [0, 40], sizes = [2, 20], strides = [1, 1]} : vector<2x80xf32> to vector<2x20xf32>
    %cst_129 = arith.constant 2.000000e+00 : f32
    %319 = vector.broadcast %cst_129 : f32 to vector<2x20xf32>
    %320 = arith.mulf %319, %318 : vector<2x20xf32>
    %cst_130 = arith.constant 1.000000e+00 : f32
    %321 = vector.broadcast %cst_130 : f32 to vector<2x20xf32>
    %322 = arith.subf %320, %321 : vector<2x20xf32>
    %323 = vector.extract_strided_slice %315 {offsets = [0, 60], sizes = [2, 20], strides = [1, 1]} : vector<2x80xf32> to vector<2x20xf32>
    %324 = arith.mulf %317, %293 : vector<2x20xf32>
    %325 = arith.mulf %316, %322 : vector<2x20xf32>
    %326 = arith.addf %324, %325 : vector<2x20xf32>
    %327 = math.tanh %326 : vector<2x20xf32>
    %328 = arith.mulf %323, %327 : vector<2x20xf32>
    %329 = arith.truncf %328 : vector<2x20xf32> to vector<2x20xbf16>
    %c0_131 = arith.constant 0 : index
    %c0_132 = arith.constant 0 : index
    %330 = vector.load %arg7[%c0_131, %c0_132] : memref<2x6xf32, #tpu.memory_space<vmem>>, vector<2x6xf32>
    %c9_133 = arith.constant 9 : index
    %c0_134 = arith.constant 0 : index
    %c0_135 = arith.constant 0 : index
    %331 = vector.load %arg5[%c9_133, %c0_134, %c0_135] : memref<24x20x6xf32, #tpu.memory_space<vmem>>, vector<1x20x6xf32>
    %332 = vector.shape_cast %331 : vector<1x20x6xf32> to vector<20x6xf32>
    %cst_136 = arith.constant dense<0.000000e+00> : vector<2x6xf32>
    %333 = tpu.matmul %328, %332, %cst_136 {dimension_numbers = #tpu.dot_dimension_numbers<[1], [0], [0], [1], [0, 0, 1, 1], [], []>} : vector<2x20xf32>, vector<20x6xf32>, vector<2x6xf32> -> vector<2x6xf32>
    %334 = arith.addf %330, %333 : vector<2x6xf32>
    %c0_137 = arith.constant 0 : index
    %c0_138 = arith.constant 0 : index
    %335 = vector.load %arg7[%c0_137, %c0_138] : memref<2x6xf32, #tpu.memory_space<vmem>>, vector<2x6xf32>
    tpu.vector_store %arg7[%c0_137, %c0_138], %334 {strides = array<i32>} : memref<2x6xf32, #tpu.memory_space<vmem>>, vector<2x6xf32>,
    %c0_139 = arith.constant 0 : index
    %c10 = arith.constant 10 : index
    %336 = vector.load %arg1[%c0_139, %c10] : memref<2x24xf32, #tpu.memory_space<vmem>>, vector<2x1xf32>
    %337 = vector.broadcast %336 : vector<2x1xf32> to vector<2x80xf32>
    %338 = vector.broadcast %4 : vector<1x80xf32> to vector<2x80xf32>
    %339 = arith.mulf %337, %338 : vector<2x80xf32>
    %340 = vector.broadcast %5 : vector<1x80xf32> to vector<2x80xf32>
    %341 = arith.addf %339, %340 : vector<2x80xf32>
    %cst_140 = arith.constant dense<0.000000e+00> : vector<2x80xf32>
    %342 = tpu.matmul %329, %6, %cst_140 {dimension_numbers = #tpu.dot_dimension_numbers<[1], [0], [0], [1], [0, 0, 1, 1], [], []>} : vector<2x20xbf16>, vector<20x80xbf16>, vector<2x80xf32> -> vector<2x80xf32>
    %343 = arith.addf %341, %342 : vector<2x80xf32>
    %344 = arith.negf %343 : vector<2x80xf32>
    %345 = math.exp %344 : vector<2x80xf32>
    %cst_141 = arith.constant 1.000000e+00 : f32
    %346 = vector.broadcast %cst_141 : f32 to vector<2x80xf32>
    %347 = arith.addf %346, %345 : vector<2x80xf32>
    %348 = arith.divf %346, %347 : vector<2x80xf32>
    %349 = vector.extract_strided_slice %348 {offsets = [0, 0], sizes = [2, 20], strides = [1, 1]} : vector<2x80xf32> to vector<2x20xf32>
    %350 = vector.extract_strided_slice %348 {offsets = [0, 20], sizes = [2, 20], strides = [1, 1]} : vector<2x80xf32> to vector<2x20xf32>
    %351 = vector.extract_strided_slice %348 {offsets = [0, 40], sizes = [2, 20], strides = [1, 1]} : vector<2x80xf32> to vector<2x20xf32>
    %cst_142 = arith.constant 2.000000e+00 : f32
    %352 = vector.broadcast %cst_142 : f32 to vector<2x20xf32>
    %353 = arith.mulf %352, %351 : vector<2x20xf32>
    %cst_143 = arith.constant 1.000000e+00 : f32
    %354 = vector.broadcast %cst_143 : f32 to vector<2x20xf32>
    %355 = arith.subf %353, %354 : vector<2x20xf32>
    %356 = vector.extract_strided_slice %348 {offsets = [0, 60], sizes = [2, 20], strides = [1, 1]} : vector<2x80xf32> to vector<2x20xf32>
    %357 = arith.mulf %350, %326 : vector<2x20xf32>
    %358 = arith.mulf %349, %355 : vector<2x20xf32>
    %359 = arith.addf %357, %358 : vector<2x20xf32>
    %360 = math.tanh %359 : vector<2x20xf32>
    %361 = arith.mulf %356, %360 : vector<2x20xf32>
    %362 = arith.truncf %361 : vector<2x20xf32> to vector<2x20xbf16>
    %c0_144 = arith.constant 0 : index
    %c0_145 = arith.constant 0 : index
    %363 = vector.load %arg7[%c0_144, %c0_145] : memref<2x6xf32, #tpu.memory_space<vmem>>, vector<2x6xf32>
    %c10_146 = arith.constant 10 : index
    %c0_147 = arith.constant 0 : index
    %c0_148 = arith.constant 0 : index
    %364 = vector.load %arg5[%c10_146, %c0_147, %c0_148] : memref<24x20x6xf32, #tpu.memory_space<vmem>>, vector<1x20x6xf32>
    %365 = vector.shape_cast %364 : vector<1x20x6xf32> to vector<20x6xf32>
    %cst_149 = arith.constant dense<0.000000e+00> : vector<2x6xf32>
    %366 = tpu.matmul %361, %365, %cst_149 {dimension_numbers = #tpu.dot_dimension_numbers<[1], [0], [0], [1], [0, 0, 1, 1], [], []>} : vector<2x20xf32>, vector<20x6xf32>, vector<2x6xf32> -> vector<2x6xf32>
    %367 = arith.addf %363, %366 : vector<2x6xf32>
    %c0_150 = arith.constant 0 : index
    %c0_151 = arith.constant 0 : index
    %368 = vector.load %arg7[%c0_150, %c0_151] : memref<2x6xf32, #tpu.memory_space<vmem>>, vector<2x6xf32>
    tpu.vector_store %arg7[%c0_150, %c0_151], %367 {strides = array<i32>} : memref<2x6xf32, #tpu.memory_space<vmem>>, vector<2x6xf32>,
    %c0_152 = arith.constant 0 : index
    %c11 = arith.constant 11 : index
    %369 = vector.load %arg1[%c0_152, %c11] : memref<2x24xf32, #tpu.memory_space<vmem>>, vector<2x1xf32>
    %370 = vector.broadcast %369 : vector<2x1xf32> to vector<2x80xf32>
    %371 = vector.broadcast %4 : vector<1x80xf32> to vector<2x80xf32>
    %372 = arith.mulf %370, %371 : vector<2x80xf32>
    %373 = vector.broadcast %5 : vector<1x80xf32> to vector<2x80xf32>
    %374 = arith.addf %372, %373 : vector<2x80xf32>
    %cst_153 = arith.constant dense<0.000000e+00> : vector<2x80xf32>
    %375 = tpu.matmul %362, %6, %cst_153 {dimension_numbers = #tpu.dot_dimension_numbers<[1], [0], [0], [1], [0, 0, 1, 1], [], []>} : vector<2x20xbf16>, vector<20x80xbf16>, vector<2x80xf32> -> vector<2x80xf32>
    %376 = arith.addf %374, %375 : vector<2x80xf32>
    %377 = arith.negf %376 : vector<2x80xf32>
    %378 = math.exp %377 : vector<2x80xf32>
    %cst_154 = arith.constant 1.000000e+00 : f32
    %379 = vector.broadcast %cst_154 : f32 to vector<2x80xf32>
    %380 = arith.addf %379, %378 : vector<2x80xf32>
    %381 = arith.divf %379, %380 : vector<2x80xf32>
    %382 = vector.extract_strided_slice %381 {offsets = [0, 0], sizes = [2, 20], strides = [1, 1]} : vector<2x80xf32> to vector<2x20xf32>
    %383 = vector.extract_strided_slice %381 {offsets = [0, 20], sizes = [2, 20], strides = [1, 1]} : vector<2x80xf32> to vector<2x20xf32>
    %384 = vector.extract_strided_slice %381 {offsets = [0, 40], sizes = [2, 20], strides = [1, 1]} : vector<2x80xf32> to vector<2x20xf32>
    %cst_155 = arith.constant 2.000000e+00 : f32
    %385 = vector.broadcast %cst_155 : f32 to vector<2x20xf32>
    %386 = arith.mulf %385, %384 : vector<2x20xf32>
    %cst_156 = arith.constant 1.000000e+00 : f32
    %387 = vector.broadcast %cst_156 : f32 to vector<2x20xf32>
    %388 = arith.subf %386, %387 : vector<2x20xf32>
    %389 = vector.extract_strided_slice %381 {offsets = [0, 60], sizes = [2, 20], strides = [1, 1]} : vector<2x80xf32> to vector<2x20xf32>
    %390 = arith.mulf %383, %359 : vector<2x20xf32>
    %391 = arith.mulf %382, %388 : vector<2x20xf32>
    %392 = arith.addf %390, %391 : vector<2x20xf32>
    %393 = math.tanh %392 : vector<2x20xf32>
    %394 = arith.mulf %389, %393 : vector<2x20xf32>
    %395 = arith.truncf %394 : vector<2x20xf32> to vector<2x20xbf16>
    %c0_157 = arith.constant 0 : index
    %c0_158 = arith.constant 0 : index
    %396 = vector.load %arg7[%c0_157, %c0_158] : memref<2x6xf32, #tpu.memory_space<vmem>>, vector<2x6xf32>
    %c11_159 = arith.constant 11 : index
    %c0_160 = arith.constant 0 : index
    %c0_161 = arith.constant 0 : index
    %397 = vector.load %arg5[%c11_159, %c0_160, %c0_161] : memref<24x20x6xf32, #tpu.memory_space<vmem>>, vector<1x20x6xf32>
    %398 = vector.shape_cast %397 : vector<1x20x6xf32> to vector<20x6xf32>
    %cst_162 = arith.constant dense<0.000000e+00> : vector<2x6xf32>
    %399 = tpu.matmul %394, %398, %cst_162 {dimension_numbers = #tpu.dot_dimension_numbers<[1], [0], [0], [1], [0, 0, 1, 1], [], []>} : vector<2x20xf32>, vector<20x6xf32>, vector<2x6xf32> -> vector<2x6xf32>
    %400 = arith.addf %396, %399 : vector<2x6xf32>
    %c0_163 = arith.constant 0 : index
    %c0_164 = arith.constant 0 : index
    %401 = vector.load %arg7[%c0_163, %c0_164] : memref<2x6xf32, #tpu.memory_space<vmem>>, vector<2x6xf32>
    tpu.vector_store %arg7[%c0_163, %c0_164], %400 {strides = array<i32>} : memref<2x6xf32, #tpu.memory_space<vmem>>, vector<2x6xf32>,
    %c0_165 = arith.constant 0 : index
    %c12 = arith.constant 12 : index
    %402 = vector.load %arg1[%c0_165, %c12] : memref<2x24xf32, #tpu.memory_space<vmem>>, vector<2x1xf32>
    %403 = vector.broadcast %402 : vector<2x1xf32> to vector<2x80xf32>
    %404 = vector.broadcast %4 : vector<1x80xf32> to vector<2x80xf32>
    %405 = arith.mulf %403, %404 : vector<2x80xf32>
    %406 = vector.broadcast %5 : vector<1x80xf32> to vector<2x80xf32>
    %407 = arith.addf %405, %406 : vector<2x80xf32>
    %cst_166 = arith.constant dense<0.000000e+00> : vector<2x80xf32>
    %408 = tpu.matmul %395, %6, %cst_166 {dimension_numbers = #tpu.dot_dimension_numbers<[1], [0], [0], [1], [0, 0, 1, 1], [], []>} : vector<2x20xbf16>, vector<20x80xbf16>, vector<2x80xf32> -> vector<2x80xf32>
    %409 = arith.addf %407, %408 : vector<2x80xf32>
    %410 = arith.negf %409 : vector<2x80xf32>
    %411 = math.exp %410 : vector<2x80xf32>
    %cst_167 = arith.constant 1.000000e+00 : f32
    %412 = vector.broadcast %cst_167 : f32 to vector<2x80xf32>
    %413 = arith.addf %412, %411 : vector<2x80xf32>
    %414 = arith.divf %412, %413 : vector<2x80xf32>
    %415 = vector.extract_strided_slice %414 {offsets = [0, 0], sizes = [2, 20], strides = [1, 1]} : vector<2x80xf32> to vector<2x20xf32>
    %416 = vector.extract_strided_slice %414 {offsets = [0, 20], sizes = [2, 20], strides = [1, 1]} : vector<2x80xf32> to vector<2x20xf32>
    %417 = vector.extract_strided_slice %414 {offsets = [0, 40], sizes = [2, 20], strides = [1, 1]} : vector<2x80xf32> to vector<2x20xf32>
    %cst_168 = arith.constant 2.000000e+00 : f32
    %418 = vector.broadcast %cst_168 : f32 to vector<2x20xf32>
    %419 = arith.mulf %418, %417 : vector<2x20xf32>
    %cst_169 = arith.constant 1.000000e+00 : f32
    %420 = vector.broadcast %cst_169 : f32 to vector<2x20xf32>
    %421 = arith.subf %419, %420 : vector<2x20xf32>
    %422 = vector.extract_strided_slice %414 {offsets = [0, 60], sizes = [2, 20], strides = [1, 1]} : vector<2x80xf32> to vector<2x20xf32>
    %423 = arith.mulf %416, %392 : vector<2x20xf32>
    %424 = arith.mulf %415, %421 : vector<2x20xf32>
    %425 = arith.addf %423, %424 : vector<2x20xf32>
    %426 = math.tanh %425 : vector<2x20xf32>
    %427 = arith.mulf %422, %426 : vector<2x20xf32>
    %428 = arith.truncf %427 : vector<2x20xf32> to vector<2x20xbf16>
    %c0_170 = arith.constant 0 : index
    %c0_171 = arith.constant 0 : index
    %429 = vector.load %arg7[%c0_170, %c0_171] : memref<2x6xf32, #tpu.memory_space<vmem>>, vector<2x6xf32>
    %c12_172 = arith.constant 12 : index
    %c0_173 = arith.constant 0 : index
    %c0_174 = arith.constant 0 : index
    %430 = vector.load %arg5[%c12_172, %c0_173, %c0_174] : memref<24x20x6xf32, #tpu.memory_space<vmem>>, vector<1x20x6xf32>
    %431 = vector.shape_cast %430 : vector<1x20x6xf32> to vector<20x6xf32>
    %cst_175 = arith.constant dense<0.000000e+00> : vector<2x6xf32>
    %432 = tpu.matmul %427, %431, %cst_175 {dimension_numbers = #tpu.dot_dimension_numbers<[1], [0], [0], [1], [0, 0, 1, 1], [], []>} : vector<2x20xf32>, vector<20x6xf32>, vector<2x6xf32> -> vector<2x6xf32>
    %433 = arith.addf %429, %432 : vector<2x6xf32>
    %c0_176 = arith.constant 0 : index
    %c0_177 = arith.constant 0 : index
    %434 = vector.load %arg7[%c0_176, %c0_177] : memref<2x6xf32, #tpu.memory_space<vmem>>, vector<2x6xf32>
    tpu.vector_store %arg7[%c0_176, %c0_177], %433 {strides = array<i32>} : memref<2x6xf32, #tpu.memory_space<vmem>>, vector<2x6xf32>,
    %c0_178 = arith.constant 0 : index
    %c13 = arith.constant 13 : index
    %435 = vector.load %arg1[%c0_178, %c13] : memref<2x24xf32, #tpu.memory_space<vmem>>, vector<2x1xf32>
    %436 = vector.broadcast %435 : vector<2x1xf32> to vector<2x80xf32>
    %437 = vector.broadcast %4 : vector<1x80xf32> to vector<2x80xf32>
    %438 = arith.mulf %436, %437 : vector<2x80xf32>
    %439 = vector.broadcast %5 : vector<1x80xf32> to vector<2x80xf32>
    %440 = arith.addf %438, %439 : vector<2x80xf32>
    %cst_179 = arith.constant dense<0.000000e+00> : vector<2x80xf32>
    %441 = tpu.matmul %428, %6, %cst_179 {dimension_numbers = #tpu.dot_dimension_numbers<[1], [0], [0], [1], [0, 0, 1, 1], [], []>} : vector<2x20xbf16>, vector<20x80xbf16>, vector<2x80xf32> -> vector<2x80xf32>
    %442 = arith.addf %440, %441 : vector<2x80xf32>
    %443 = arith.negf %442 : vector<2x80xf32>
    %444 = math.exp %443 : vector<2x80xf32>
    %cst_180 = arith.constant 1.000000e+00 : f32
    %445 = vector.broadcast %cst_180 : f32 to vector<2x80xf32>
    %446 = arith.addf %445, %444 : vector<2x80xf32>
    %447 = arith.divf %445, %446 : vector<2x80xf32>
    %448 = vector.extract_strided_slice %447 {offsets = [0, 0], sizes = [2, 20], strides = [1, 1]} : vector<2x80xf32> to vector<2x20xf32>
    %449 = vector.extract_strided_slice %447 {offsets = [0, 20], sizes = [2, 20], strides = [1, 1]} : vector<2x80xf32> to vector<2x20xf32>
    %450 = vector.extract_strided_slice %447 {offsets = [0, 40], sizes = [2, 20], strides = [1, 1]} : vector<2x80xf32> to vector<2x20xf32>
    %cst_181 = arith.constant 2.000000e+00 : f32
    %451 = vector.broadcast %cst_181 : f32 to vector<2x20xf32>
    %452 = arith.mulf %451, %450 : vector<2x20xf32>
    %cst_182 = arith.constant 1.000000e+00 : f32
    %453 = vector.broadcast %cst_182 : f32 to vector<2x20xf32>
    %454 = arith.subf %452, %453 : vector<2x20xf32>
    %455 = vector.extract_strided_slice %447 {offsets = [0, 60], sizes = [2, 20], strides = [1, 1]} : vector<2x80xf32> to vector<2x20xf32>
    %456 = arith.mulf %449, %425 : vector<2x20xf32>
    %457 = arith.mulf %448, %454 : vector<2x20xf32>
    %458 = arith.addf %456, %457 : vector<2x20xf32>
    %459 = math.tanh %458 : vector<2x20xf32>
    %460 = arith.mulf %455, %459 : vector<2x20xf32>
    %461 = arith.truncf %460 : vector<2x20xf32> to vector<2x20xbf16>
    %c0_183 = arith.constant 0 : index
    %c0_184 = arith.constant 0 : index
    %462 = vector.load %arg7[%c0_183, %c0_184] : memref<2x6xf32, #tpu.memory_space<vmem>>, vector<2x6xf32>
    %c13_185 = arith.constant 13 : index
    %c0_186 = arith.constant 0 : index
    %c0_187 = arith.constant 0 : index
    %463 = vector.load %arg5[%c13_185, %c0_186, %c0_187] : memref<24x20x6xf32, #tpu.memory_space<vmem>>, vector<1x20x6xf32>
    %464 = vector.shape_cast %463 : vector<1x20x6xf32> to vector<20x6xf32>
    %cst_188 = arith.constant dense<0.000000e+00> : vector<2x6xf32>
    %465 = tpu.matmul %460, %464, %cst_188 {dimension_numbers = #tpu.dot_dimension_numbers<[1], [0], [0], [1], [0, 0, 1, 1], [], []>} : vector<2x20xf32>, vector<20x6xf32>, vector<2x6xf32> -> vector<2x6xf32>
    %466 = arith.addf %462, %465 : vector<2x6xf32>
    %c0_189 = arith.constant 0 : index
    %c0_190 = arith.constant 0 : index
    %467 = vector.load %arg7[%c0_189, %c0_190] : memref<2x6xf32, #tpu.memory_space<vmem>>, vector<2x6xf32>
    tpu.vector_store %arg7[%c0_189, %c0_190], %466 {strides = array<i32>} : memref<2x6xf32, #tpu.memory_space<vmem>>, vector<2x6xf32>,
    %c0_191 = arith.constant 0 : index
    %c14 = arith.constant 14 : index
    %468 = vector.load %arg1[%c0_191, %c14] : memref<2x24xf32, #tpu.memory_space<vmem>>, vector<2x1xf32>
    %469 = vector.broadcast %468 : vector<2x1xf32> to vector<2x80xf32>
    %470 = vector.broadcast %4 : vector<1x80xf32> to vector<2x80xf32>
    %471 = arith.mulf %469, %470 : vector<2x80xf32>
    %472 = vector.broadcast %5 : vector<1x80xf32> to vector<2x80xf32>
    %473 = arith.addf %471, %472 : vector<2x80xf32>
    %cst_192 = arith.constant dense<0.000000e+00> : vector<2x80xf32>
    %474 = tpu.matmul %461, %6, %cst_192 {dimension_numbers = #tpu.dot_dimension_numbers<[1], [0], [0], [1], [0, 0, 1, 1], [], []>} : vector<2x20xbf16>, vector<20x80xbf16>, vector<2x80xf32> -> vector<2x80xf32>
    %475 = arith.addf %473, %474 : vector<2x80xf32>
    %476 = arith.negf %475 : vector<2x80xf32>
    %477 = math.exp %476 : vector<2x80xf32>
    %cst_193 = arith.constant 1.000000e+00 : f32
    %478 = vector.broadcast %cst_193 : f32 to vector<2x80xf32>
    %479 = arith.addf %478, %477 : vector<2x80xf32>
    %480 = arith.divf %478, %479 : vector<2x80xf32>
    %481 = vector.extract_strided_slice %480 {offsets = [0, 0], sizes = [2, 20], strides = [1, 1]} : vector<2x80xf32> to vector<2x20xf32>
    %482 = vector.extract_strided_slice %480 {offsets = [0, 20], sizes = [2, 20], strides = [1, 1]} : vector<2x80xf32> to vector<2x20xf32>
    %483 = vector.extract_strided_slice %480 {offsets = [0, 40], sizes = [2, 20], strides = [1, 1]} : vector<2x80xf32> to vector<2x20xf32>
    %cst_194 = arith.constant 2.000000e+00 : f32
    %484 = vector.broadcast %cst_194 : f32 to vector<2x20xf32>
    %485 = arith.mulf %484, %483 : vector<2x20xf32>
    %cst_195 = arith.constant 1.000000e+00 : f32
    %486 = vector.broadcast %cst_195 : f32 to vector<2x20xf32>
    %487 = arith.subf %485, %486 : vector<2x20xf32>
    %488 = vector.extract_strided_slice %480 {offsets = [0, 60], sizes = [2, 20], strides = [1, 1]} : vector<2x80xf32> to vector<2x20xf32>
    %489 = arith.mulf %482, %458 : vector<2x20xf32>
    %490 = arith.mulf %481, %487 : vector<2x20xf32>
    %491 = arith.addf %489, %490 : vector<2x20xf32>
    %492 = math.tanh %491 : vector<2x20xf32>
    %493 = arith.mulf %488, %492 : vector<2x20xf32>
    %494 = arith.truncf %493 : vector<2x20xf32> to vector<2x20xbf16>
    %c0_196 = arith.constant 0 : index
    %c0_197 = arith.constant 0 : index
    %495 = vector.load %arg7[%c0_196, %c0_197] : memref<2x6xf32, #tpu.memory_space<vmem>>, vector<2x6xf32>
    %c14_198 = arith.constant 14 : index
    %c0_199 = arith.constant 0 : index
    %c0_200 = arith.constant 0 : index
    %496 = vector.load %arg5[%c14_198, %c0_199, %c0_200] : memref<24x20x6xf32, #tpu.memory_space<vmem>>, vector<1x20x6xf32>
    %497 = vector.shape_cast %496 : vector<1x20x6xf32> to vector<20x6xf32>
    %cst_201 = arith.constant dense<0.000000e+00> : vector<2x6xf32>
    %498 = tpu.matmul %493, %497, %cst_201 {dimension_numbers = #tpu.dot_dimension_numbers<[1], [0], [0], [1], [0, 0, 1, 1], [], []>} : vector<2x20xf32>, vector<20x6xf32>, vector<2x6xf32> -> vector<2x6xf32>
    %499 = arith.addf %495, %498 : vector<2x6xf32>
    %c0_202 = arith.constant 0 : index
    %c0_203 = arith.constant 0 : index
    %500 = vector.load %arg7[%c0_202, %c0_203] : memref<2x6xf32, #tpu.memory_space<vmem>>, vector<2x6xf32>
    tpu.vector_store %arg7[%c0_202, %c0_203], %499 {strides = array<i32>} : memref<2x6xf32, #tpu.memory_space<vmem>>, vector<2x6xf32>,
    %c0_204 = arith.constant 0 : index
    %c15 = arith.constant 15 : index
    %501 = vector.load %arg1[%c0_204, %c15] : memref<2x24xf32, #tpu.memory_space<vmem>>, vector<2x1xf32>
    %502 = vector.broadcast %501 : vector<2x1xf32> to vector<2x80xf32>
    %503 = vector.broadcast %4 : vector<1x80xf32> to vector<2x80xf32>
    %504 = arith.mulf %502, %503 : vector<2x80xf32>
    %505 = vector.broadcast %5 : vector<1x80xf32> to vector<2x80xf32>
    %506 = arith.addf %504, %505 : vector<2x80xf32>
    %cst_205 = arith.constant dense<0.000000e+00> : vector<2x80xf32>
    %507 = tpu.matmul %494, %6, %cst_205 {dimension_numbers = #tpu.dot_dimension_numbers<[1], [0], [0], [1], [0, 0, 1, 1], [], []>} : vector<2x20xbf16>, vector<20x80xbf16>, vector<2x80xf32> -> vector<2x80xf32>
    %508 = arith.addf %506, %507 : vector<2x80xf32>
    %509 = arith.negf %508 : vector<2x80xf32>
    %510 = math.exp %509 : vector<2x80xf32>
    %cst_206 = arith.constant 1.000000e+00 : f32
    %511 = vector.broadcast %cst_206 : f32 to vector<2x80xf32>
    %512 = arith.addf %511, %510 : vector<2x80xf32>
    %513 = arith.divf %511, %512 : vector<2x80xf32>
    %514 = vector.extract_strided_slice %513 {offsets = [0, 0], sizes = [2, 20], strides = [1, 1]} : vector<2x80xf32> to vector<2x20xf32>
    %515 = vector.extract_strided_slice %513 {offsets = [0, 20], sizes = [2, 20], strides = [1, 1]} : vector<2x80xf32> to vector<2x20xf32>
    %516 = vector.extract_strided_slice %513 {offsets = [0, 40], sizes = [2, 20], strides = [1, 1]} : vector<2x80xf32> to vector<2x20xf32>
    %cst_207 = arith.constant 2.000000e+00 : f32
    %517 = vector.broadcast %cst_207 : f32 to vector<2x20xf32>
    %518 = arith.mulf %517, %516 : vector<2x20xf32>
    %cst_208 = arith.constant 1.000000e+00 : f32
    %519 = vector.broadcast %cst_208 : f32 to vector<2x20xf32>
    %520 = arith.subf %518, %519 : vector<2x20xf32>
    %521 = vector.extract_strided_slice %513 {offsets = [0, 60], sizes = [2, 20], strides = [1, 1]} : vector<2x80xf32> to vector<2x20xf32>
    %522 = arith.mulf %515, %491 : vector<2x20xf32>
    %523 = arith.mulf %514, %520 : vector<2x20xf32>
    %524 = arith.addf %522, %523 : vector<2x20xf32>
    %525 = math.tanh %524 : vector<2x20xf32>
    %526 = arith.mulf %521, %525 : vector<2x20xf32>
    %527 = arith.truncf %526 : vector<2x20xf32> to vector<2x20xbf16>
    %c0_209 = arith.constant 0 : index
    %c0_210 = arith.constant 0 : index
    %528 = vector.load %arg7[%c0_209, %c0_210] : memref<2x6xf32, #tpu.memory_space<vmem>>, vector<2x6xf32>
    %c15_211 = arith.constant 15 : index
    %c0_212 = arith.constant 0 : index
    %c0_213 = arith.constant 0 : index
    %529 = vector.load %arg5[%c15_211, %c0_212, %c0_213] : memref<24x20x6xf32, #tpu.memory_space<vmem>>, vector<1x20x6xf32>
    %530 = vector.shape_cast %529 : vector<1x20x6xf32> to vector<20x6xf32>
    %cst_214 = arith.constant dense<0.000000e+00> : vector<2x6xf32>
    %531 = tpu.matmul %526, %530, %cst_214 {dimension_numbers = #tpu.dot_dimension_numbers<[1], [0], [0], [1], [0, 0, 1, 1], [], []>} : vector<2x20xf32>, vector<20x6xf32>, vector<2x6xf32> -> vector<2x6xf32>
    %532 = arith.addf %528, %531 : vector<2x6xf32>
    %c0_215 = arith.constant 0 : index
    %c0_216 = arith.constant 0 : index
    %533 = vector.load %arg7[%c0_215, %c0_216] : memref<2x6xf32, #tpu.memory_space<vmem>>, vector<2x6xf32>
    tpu.vector_store %arg7[%c0_215, %c0_216], %532 {strides = array<i32>} : memref<2x6xf32, #tpu.memory_space<vmem>>, vector<2x6xf32>,
    %c0_217 = arith.constant 0 : index
    %c16 = arith.constant 16 : index
    %534 = vector.load %arg1[%c0_217, %c16] : memref<2x24xf32, #tpu.memory_space<vmem>>, vector<2x1xf32>
    %535 = vector.broadcast %534 : vector<2x1xf32> to vector<2x80xf32>
    %536 = vector.broadcast %4 : vector<1x80xf32> to vector<2x80xf32>
    %537 = arith.mulf %535, %536 : vector<2x80xf32>
    %538 = vector.broadcast %5 : vector<1x80xf32> to vector<2x80xf32>
    %539 = arith.addf %537, %538 : vector<2x80xf32>
    %cst_218 = arith.constant dense<0.000000e+00> : vector<2x80xf32>
    %540 = tpu.matmul %527, %6, %cst_218 {dimension_numbers = #tpu.dot_dimension_numbers<[1], [0], [0], [1], [0, 0, 1, 1], [], []>} : vector<2x20xbf16>, vector<20x80xbf16>, vector<2x80xf32> -> vector<2x80xf32>
    %541 = arith.addf %539, %540 : vector<2x80xf32>
    %542 = arith.negf %541 : vector<2x80xf32>
    %543 = math.exp %542 : vector<2x80xf32>
    %cst_219 = arith.constant 1.000000e+00 : f32
    %544 = vector.broadcast %cst_219 : f32 to vector<2x80xf32>
    %545 = arith.addf %544, %543 : vector<2x80xf32>
    %546 = arith.divf %544, %545 : vector<2x80xf32>
    %547 = vector.extract_strided_slice %546 {offsets = [0, 0], sizes = [2, 20], strides = [1, 1]} : vector<2x80xf32> to vector<2x20xf32>
    %548 = vector.extract_strided_slice %546 {offsets = [0, 20], sizes = [2, 20], strides = [1, 1]} : vector<2x80xf32> to vector<2x20xf32>
    %549 = vector.extract_strided_slice %546 {offsets = [0, 40], sizes = [2, 20], strides = [1, 1]} : vector<2x80xf32> to vector<2x20xf32>
    %cst_220 = arith.constant 2.000000e+00 : f32
    %550 = vector.broadcast %cst_220 : f32 to vector<2x20xf32>
    %551 = arith.mulf %550, %549 : vector<2x20xf32>
    %cst_221 = arith.constant 1.000000e+00 : f32
    %552 = vector.broadcast %cst_221 : f32 to vector<2x20xf32>
    %553 = arith.subf %551, %552 : vector<2x20xf32>
    %554 = vector.extract_strided_slice %546 {offsets = [0, 60], sizes = [2, 20], strides = [1, 1]} : vector<2x80xf32> to vector<2x20xf32>
    %555 = arith.mulf %548, %524 : vector<2x20xf32>
    %556 = arith.mulf %547, %553 : vector<2x20xf32>
    %557 = arith.addf %555, %556 : vector<2x20xf32>
    %558 = math.tanh %557 : vector<2x20xf32>
    %559 = arith.mulf %554, %558 : vector<2x20xf32>
    %560 = arith.truncf %559 : vector<2x20xf32> to vector<2x20xbf16>
    %c0_222 = arith.constant 0 : index
    %c0_223 = arith.constant 0 : index
    %561 = vector.load %arg7[%c0_222, %c0_223] : memref<2x6xf32, #tpu.memory_space<vmem>>, vector<2x6xf32>
    %c16_224 = arith.constant 16 : index
    %c0_225 = arith.constant 0 : index
    %c0_226 = arith.constant 0 : index
    %562 = vector.load %arg5[%c16_224, %c0_225, %c0_226] : memref<24x20x6xf32, #tpu.memory_space<vmem>>, vector<1x20x6xf32>
    %563 = vector.shape_cast %562 : vector<1x20x6xf32> to vector<20x6xf32>
    %cst_227 = arith.constant dense<0.000000e+00> : vector<2x6xf32>
    %564 = tpu.matmul %559, %563, %cst_227 {dimension_numbers = #tpu.dot_dimension_numbers<[1], [0], [0], [1], [0, 0, 1, 1], [], []>} : vector<2x20xf32>, vector<20x6xf32>, vector<2x6xf32> -> vector<2x6xf32>
    %565 = arith.addf %561, %564 : vector<2x6xf32>
    %c0_228 = arith.constant 0 : index
    %c0_229 = arith.constant 0 : index
    %566 = vector.load %arg7[%c0_228, %c0_229] : memref<2x6xf32, #tpu.memory_space<vmem>>, vector<2x6xf32>
    tpu.vector_store %arg7[%c0_228, %c0_229], %565 {strides = array<i32>} : memref<2x6xf32, #tpu.memory_space<vmem>>, vector<2x6xf32>,
    %c0_230 = arith.constant 0 : index
    %c17 = arith.constant 17 : index
    %567 = vector.load %arg1[%c0_230, %c17] : memref<2x24xf32, #tpu.memory_space<vmem>>, vector<2x1xf32>
    %568 = vector.broadcast %567 : vector<2x1xf32> to vector<2x80xf32>
    %569 = vector.broadcast %4 : vector<1x80xf32> to vector<2x80xf32>
    %570 = arith.mulf %568, %569 : vector<2x80xf32>
    %571 = vector.broadcast %5 : vector<1x80xf32> to vector<2x80xf32>
    %572 = arith.addf %570, %571 : vector<2x80xf32>
    %cst_231 = arith.constant dense<0.000000e+00> : vector<2x80xf32>
    %573 = tpu.matmul %560, %6, %cst_231 {dimension_numbers = #tpu.dot_dimension_numbers<[1], [0], [0], [1], [0, 0, 1, 1], [], []>} : vector<2x20xbf16>, vector<20x80xbf16>, vector<2x80xf32> -> vector<2x80xf32>
    %574 = arith.addf %572, %573 : vector<2x80xf32>
    %575 = arith.negf %574 : vector<2x80xf32>
    %576 = math.exp %575 : vector<2x80xf32>
    %cst_232 = arith.constant 1.000000e+00 : f32
    %577 = vector.broadcast %cst_232 : f32 to vector<2x80xf32>
    %578 = arith.addf %577, %576 : vector<2x80xf32>
    %579 = arith.divf %577, %578 : vector<2x80xf32>
    %580 = vector.extract_strided_slice %579 {offsets = [0, 0], sizes = [2, 20], strides = [1, 1]} : vector<2x80xf32> to vector<2x20xf32>
    %581 = vector.extract_strided_slice %579 {offsets = [0, 20], sizes = [2, 20], strides = [1, 1]} : vector<2x80xf32> to vector<2x20xf32>
    %582 = vector.extract_strided_slice %579 {offsets = [0, 40], sizes = [2, 20], strides = [1, 1]} : vector<2x80xf32> to vector<2x20xf32>
    %cst_233 = arith.constant 2.000000e+00 : f32
    %583 = vector.broadcast %cst_233 : f32 to vector<2x20xf32>
    %584 = arith.mulf %583, %582 : vector<2x20xf32>
    %cst_234 = arith.constant 1.000000e+00 : f32
    %585 = vector.broadcast %cst_234 : f32 to vector<2x20xf32>
    %586 = arith.subf %584, %585 : vector<2x20xf32>
    %587 = vector.extract_strided_slice %579 {offsets = [0, 60], sizes = [2, 20], strides = [1, 1]} : vector<2x80xf32> to vector<2x20xf32>
    %588 = arith.mulf %581, %557 : vector<2x20xf32>
    %589 = arith.mulf %580, %586 : vector<2x20xf32>
    %590 = arith.addf %588, %589 : vector<2x20xf32>
    %591 = math.tanh %590 : vector<2x20xf32>
    %592 = arith.mulf %587, %591 : vector<2x20xf32>
    %593 = arith.truncf %592 : vector<2x20xf32> to vector<2x20xbf16>
    %c0_235 = arith.constant 0 : index
    %c0_236 = arith.constant 0 : index
    %594 = vector.load %arg7[%c0_235, %c0_236] : memref<2x6xf32, #tpu.memory_space<vmem>>, vector<2x6xf32>
    %c17_237 = arith.constant 17 : index
    %c0_238 = arith.constant 0 : index
    %c0_239 = arith.constant 0 : index
    %595 = vector.load %arg5[%c17_237, %c0_238, %c0_239] : memref<24x20x6xf32, #tpu.memory_space<vmem>>, vector<1x20x6xf32>
    %596 = vector.shape_cast %595 : vector<1x20x6xf32> to vector<20x6xf32>
    %cst_240 = arith.constant dense<0.000000e+00> : vector<2x6xf32>
    %597 = tpu.matmul %592, %596, %cst_240 {dimension_numbers = #tpu.dot_dimension_numbers<[1], [0], [0], [1], [0, 0, 1, 1], [], []>} : vector<2x20xf32>, vector<20x6xf32>, vector<2x6xf32> -> vector<2x6xf32>
    %598 = arith.addf %594, %597 : vector<2x6xf32>
    %c0_241 = arith.constant 0 : index
    %c0_242 = arith.constant 0 : index
    %599 = vector.load %arg7[%c0_241, %c0_242] : memref<2x6xf32, #tpu.memory_space<vmem>>, vector<2x6xf32>
    tpu.vector_store %arg7[%c0_241, %c0_242], %598 {strides = array<i32>} : memref<2x6xf32, #tpu.memory_space<vmem>>, vector<2x6xf32>,
    %c0_243 = arith.constant 0 : index
    %c18 = arith.constant 18 : index
    %600 = vector.load %arg1[%c0_243, %c18] : memref<2x24xf32, #tpu.memory_space<vmem>>, vector<2x1xf32>
    %601 = vector.broadcast %600 : vector<2x1xf32> to vector<2x80xf32>
    %602 = vector.broadcast %4 : vector<1x80xf32> to vector<2x80xf32>
    %603 = arith.mulf %601, %602 : vector<2x80xf32>
    %604 = vector.broadcast %5 : vector<1x80xf32> to vector<2x80xf32>
    %605 = arith.addf %603, %604 : vector<2x80xf32>
    %cst_244 = arith.constant dense<0.000000e+00> : vector<2x80xf32>
    %606 = tpu.matmul %593, %6, %cst_244 {dimension_numbers = #tpu.dot_dimension_numbers<[1], [0], [0], [1], [0, 0, 1, 1], [], []>} : vector<2x20xbf16>, vector<20x80xbf16>, vector<2x80xf32> -> vector<2x80xf32>
    %607 = arith.addf %605, %606 : vector<2x80xf32>
    %608 = arith.negf %607 : vector<2x80xf32>
    %609 = math.exp %608 : vector<2x80xf32>
    %cst_245 = arith.constant 1.000000e+00 : f32
    %610 = vector.broadcast %cst_245 : f32 to vector<2x80xf32>
    %611 = arith.addf %610, %609 : vector<2x80xf32>
    %612 = arith.divf %610, %611 : vector<2x80xf32>
    %613 = vector.extract_strided_slice %612 {offsets = [0, 0], sizes = [2, 20], strides = [1, 1]} : vector<2x80xf32> to vector<2x20xf32>
    %614 = vector.extract_strided_slice %612 {offsets = [0, 20], sizes = [2, 20], strides = [1, 1]} : vector<2x80xf32> to vector<2x20xf32>
    %615 = vector.extract_strided_slice %612 {offsets = [0, 40], sizes = [2, 20], strides = [1, 1]} : vector<2x80xf32> to vector<2x20xf32>
    %cst_246 = arith.constant 2.000000e+00 : f32
    %616 = vector.broadcast %cst_246 : f32 to vector<2x20xf32>
    %617 = arith.mulf %616, %615 : vector<2x20xf32>
    %cst_247 = arith.constant 1.000000e+00 : f32
    %618 = vector.broadcast %cst_247 : f32 to vector<2x20xf32>
    %619 = arith.subf %617, %618 : vector<2x20xf32>
    %620 = vector.extract_strided_slice %612 {offsets = [0, 60], sizes = [2, 20], strides = [1, 1]} : vector<2x80xf32> to vector<2x20xf32>
    %621 = arith.mulf %614, %590 : vector<2x20xf32>
    %622 = arith.mulf %613, %619 : vector<2x20xf32>
    %623 = arith.addf %621, %622 : vector<2x20xf32>
    %624 = math.tanh %623 : vector<2x20xf32>
    %625 = arith.mulf %620, %624 : vector<2x20xf32>
    %626 = arith.truncf %625 : vector<2x20xf32> to vector<2x20xbf16>
    %c0_248 = arith.constant 0 : index
    %c0_249 = arith.constant 0 : index
    %627 = vector.load %arg7[%c0_248, %c0_249] : memref<2x6xf32, #tpu.memory_space<vmem>>, vector<2x6xf32>
    %c18_250 = arith.constant 18 : index
    %c0_251 = arith.constant 0 : index
    %c0_252 = arith.constant 0 : index
    %628 = vector.load %arg5[%c18_250, %c0_251, %c0_252] : memref<24x20x6xf32, #tpu.memory_space<vmem>>, vector<1x20x6xf32>
    %629 = vector.shape_cast %628 : vector<1x20x6xf32> to vector<20x6xf32>
    %cst_253 = arith.constant dense<0.000000e+00> : vector<2x6xf32>
    %630 = tpu.matmul %625, %629, %cst_253 {dimension_numbers = #tpu.dot_dimension_numbers<[1], [0], [0], [1], [0, 0, 1, 1], [], []>} : vector<2x20xf32>, vector<20x6xf32>, vector<2x6xf32> -> vector<2x6xf32>
    %631 = arith.addf %627, %630 : vector<2x6xf32>
    %c0_254 = arith.constant 0 : index
    %c0_255 = arith.constant 0 : index
    %632 = vector.load %arg7[%c0_254, %c0_255] : memref<2x6xf32, #tpu.memory_space<vmem>>, vector<2x6xf32>
    tpu.vector_store %arg7[%c0_254, %c0_255], %631 {strides = array<i32>} : memref<2x6xf32, #tpu.memory_space<vmem>>, vector<2x6xf32>,
    %c0_256 = arith.constant 0 : index
    %c19 = arith.constant 19 : index
    %633 = vector.load %arg1[%c0_256, %c19] : memref<2x24xf32, #tpu.memory_space<vmem>>, vector<2x1xf32>
    %634 = vector.broadcast %633 : vector<2x1xf32> to vector<2x80xf32>
    %635 = vector.broadcast %4 : vector<1x80xf32> to vector<2x80xf32>
    %636 = arith.mulf %634, %635 : vector<2x80xf32>
    %637 = vector.broadcast %5 : vector<1x80xf32> to vector<2x80xf32>
    %638 = arith.addf %636, %637 : vector<2x80xf32>
    %cst_257 = arith.constant dense<0.000000e+00> : vector<2x80xf32>
    %639 = tpu.matmul %626, %6, %cst_257 {dimension_numbers = #tpu.dot_dimension_numbers<[1], [0], [0], [1], [0, 0, 1, 1], [], []>} : vector<2x20xbf16>, vector<20x80xbf16>, vector<2x80xf32> -> vector<2x80xf32>
    %640 = arith.addf %638, %639 : vector<2x80xf32>
    %641 = arith.negf %640 : vector<2x80xf32>
    %642 = math.exp %641 : vector<2x80xf32>
    %cst_258 = arith.constant 1.000000e+00 : f32
    %643 = vector.broadcast %cst_258 : f32 to vector<2x80xf32>
    %644 = arith.addf %643, %642 : vector<2x80xf32>
    %645 = arith.divf %643, %644 : vector<2x80xf32>
    %646 = vector.extract_strided_slice %645 {offsets = [0, 0], sizes = [2, 20], strides = [1, 1]} : vector<2x80xf32> to vector<2x20xf32>
    %647 = vector.extract_strided_slice %645 {offsets = [0, 20], sizes = [2, 20], strides = [1, 1]} : vector<2x80xf32> to vector<2x20xf32>
    %648 = vector.extract_strided_slice %645 {offsets = [0, 40], sizes = [2, 20], strides = [1, 1]} : vector<2x80xf32> to vector<2x20xf32>
    %cst_259 = arith.constant 2.000000e+00 : f32
    %649 = vector.broadcast %cst_259 : f32 to vector<2x20xf32>
    %650 = arith.mulf %649, %648 : vector<2x20xf32>
    %cst_260 = arith.constant 1.000000e+00 : f32
    %651 = vector.broadcast %cst_260 : f32 to vector<2x20xf32>
    %652 = arith.subf %650, %651 : vector<2x20xf32>
    %653 = vector.extract_strided_slice %645 {offsets = [0, 60], sizes = [2, 20], strides = [1, 1]} : vector<2x80xf32> to vector<2x20xf32>
    %654 = arith.mulf %647, %623 : vector<2x20xf32>
    %655 = arith.mulf %646, %652 : vector<2x20xf32>
    %656 = arith.addf %654, %655 : vector<2x20xf32>
    %657 = math.tanh %656 : vector<2x20xf32>
    %658 = arith.mulf %653, %657 : vector<2x20xf32>
    %659 = arith.truncf %658 : vector<2x20xf32> to vector<2x20xbf16>
    %c0_261 = arith.constant 0 : index
    %c0_262 = arith.constant 0 : index
    %660 = vector.load %arg7[%c0_261, %c0_262] : memref<2x6xf32, #tpu.memory_space<vmem>>, vector<2x6xf32>
    %c19_263 = arith.constant 19 : index
    %c0_264 = arith.constant 0 : index
    %c0_265 = arith.constant 0 : index
    %661 = vector.load %arg5[%c19_263, %c0_264, %c0_265] : memref<24x20x6xf32, #tpu.memory_space<vmem>>, vector<1x20x6xf32>
    %662 = vector.shape_cast %661 : vector<1x20x6xf32> to vector<20x6xf32>
    %cst_266 = arith.constant dense<0.000000e+00> : vector<2x6xf32>
    %663 = tpu.matmul %658, %662, %cst_266 {dimension_numbers = #tpu.dot_dimension_numbers<[1], [0], [0], [1], [0, 0, 1, 1], [], []>} : vector<2x20xf32>, vector<20x6xf32>, vector<2x6xf32> -> vector<2x6xf32>
    %664 = arith.addf %660, %663 : vector<2x6xf32>
    %c0_267 = arith.constant 0 : index
    %c0_268 = arith.constant 0 : index
    %665 = vector.load %arg7[%c0_267, %c0_268] : memref<2x6xf32, #tpu.memory_space<vmem>>, vector<2x6xf32>
    tpu.vector_store %arg7[%c0_267, %c0_268], %664 {strides = array<i32>} : memref<2x6xf32, #tpu.memory_space<vmem>>, vector<2x6xf32>,
    %c0_269 = arith.constant 0 : index
    %c20 = arith.constant 20 : index
    %666 = vector.load %arg1[%c0_269, %c20] : memref<2x24xf32, #tpu.memory_space<vmem>>, vector<2x1xf32>
    %667 = vector.broadcast %666 : vector<2x1xf32> to vector<2x80xf32>
    %668 = vector.broadcast %4 : vector<1x80xf32> to vector<2x80xf32>
    %669 = arith.mulf %667, %668 : vector<2x80xf32>
    %670 = vector.broadcast %5 : vector<1x80xf32> to vector<2x80xf32>
    %671 = arith.addf %669, %670 : vector<2x80xf32>
    %cst_270 = arith.constant dense<0.000000e+00> : vector<2x80xf32>
    %672 = tpu.matmul %659, %6, %cst_270 {dimension_numbers = #tpu.dot_dimension_numbers<[1], [0], [0], [1], [0, 0, 1, 1], [], []>} : vector<2x20xbf16>, vector<20x80xbf16>, vector<2x80xf32> -> vector<2x80xf32>
    %673 = arith.addf %671, %672 : vector<2x80xf32>
    %674 = arith.negf %673 : vector<2x80xf32>
    %675 = math.exp %674 : vector<2x80xf32>
    %cst_271 = arith.constant 1.000000e+00 : f32
    %676 = vector.broadcast %cst_271 : f32 to vector<2x80xf32>
    %677 = arith.addf %676, %675 : vector<2x80xf32>
    %678 = arith.divf %676, %677 : vector<2x80xf32>
    %679 = vector.extract_strided_slice %678 {offsets = [0, 0], sizes = [2, 20], strides = [1, 1]} : vector<2x80xf32> to vector<2x20xf32>
    %680 = vector.extract_strided_slice %678 {offsets = [0, 20], sizes = [2, 20], strides = [1, 1]} : vector<2x80xf32> to vector<2x20xf32>
    %681 = vector.extract_strided_slice %678 {offsets = [0, 40], sizes = [2, 20], strides = [1, 1]} : vector<2x80xf32> to vector<2x20xf32>
    %cst_272 = arith.constant 2.000000e+00 : f32
    %682 = vector.broadcast %cst_272 : f32 to vector<2x20xf32>
    %683 = arith.mulf %682, %681 : vector<2x20xf32>
    %cst_273 = arith.constant 1.000000e+00 : f32
    %684 = vector.broadcast %cst_273 : f32 to vector<2x20xf32>
    %685 = arith.subf %683, %684 : vector<2x20xf32>
    %686 = vector.extract_strided_slice %678 {offsets = [0, 60], sizes = [2, 20], strides = [1, 1]} : vector<2x80xf32> to vector<2x20xf32>
    %687 = arith.mulf %680, %656 : vector<2x20xf32>
    %688 = arith.mulf %679, %685 : vector<2x20xf32>
    %689 = arith.addf %687, %688 : vector<2x20xf32>
    %690 = math.tanh %689 : vector<2x20xf32>
    %691 = arith.mulf %686, %690 : vector<2x20xf32>
    %692 = arith.truncf %691 : vector<2x20xf32> to vector<2x20xbf16>
    %c0_274 = arith.constant 0 : index
    %c0_275 = arith.constant 0 : index
    %693 = vector.load %arg7[%c0_274, %c0_275] : memref<2x6xf32, #tpu.memory_space<vmem>>, vector<2x6xf32>
    %c20_276 = arith.constant 20 : index
    %c0_277 = arith.constant 0 : index
    %c0_278 = arith.constant 0 : index
    %694 = vector.load %arg5[%c20_276, %c0_277, %c0_278] : memref<24x20x6xf32, #tpu.memory_space<vmem>>, vector<1x20x6xf32>
    %695 = vector.shape_cast %694 : vector<1x20x6xf32> to vector<20x6xf32>
    %cst_279 = arith.constant dense<0.000000e+00> : vector<2x6xf32>
    %696 = tpu.matmul %691, %695, %cst_279 {dimension_numbers = #tpu.dot_dimension_numbers<[1], [0], [0], [1], [0, 0, 1, 1], [], []>} : vector<2x20xf32>, vector<20x6xf32>, vector<2x6xf32> -> vector<2x6xf32>
    %697 = arith.addf %693, %696 : vector<2x6xf32>
    %c0_280 = arith.constant 0 : index
    %c0_281 = arith.constant 0 : index
    %698 = vector.load %arg7[%c0_280, %c0_281] : memref<2x6xf32, #tpu.memory_space<vmem>>, vector<2x6xf32>
    tpu.vector_store %arg7[%c0_280, %c0_281], %697 {strides = array<i32>} : memref<2x6xf32, #tpu.memory_space<vmem>>, vector<2x6xf32>,
    %c0_282 = arith.constant 0 : index
    %c21 = arith.constant 21 : index
    %699 = vector.load %arg1[%c0_282, %c21] : memref<2x24xf32, #tpu.memory_space<vmem>>, vector<2x1xf32>
    %700 = vector.broadcast %699 : vector<2x1xf32> to vector<2x80xf32>
    %701 = vector.broadcast %4 : vector<1x80xf32> to vector<2x80xf32>
    %702 = arith.mulf %700, %701 : vector<2x80xf32>
    %703 = vector.broadcast %5 : vector<1x80xf32> to vector<2x80xf32>
    %704 = arith.addf %702, %703 : vector<2x80xf32>
    %cst_283 = arith.constant dense<0.000000e+00> : vector<2x80xf32>
    %705 = tpu.matmul %692, %6, %cst_283 {dimension_numbers = #tpu.dot_dimension_numbers<[1], [0], [0], [1], [0, 0, 1, 1], [], []>} : vector<2x20xbf16>, vector<20x80xbf16>, vector<2x80xf32> -> vector<2x80xf32>
    %706 = arith.addf %704, %705 : vector<2x80xf32>
    %707 = arith.negf %706 : vector<2x80xf32>
    %708 = math.exp %707 : vector<2x80xf32>
    %cst_284 = arith.constant 1.000000e+00 : f32
    %709 = vector.broadcast %cst_284 : f32 to vector<2x80xf32>
    %710 = arith.addf %709, %708 : vector<2x80xf32>
    %711 = arith.divf %709, %710 : vector<2x80xf32>
    %712 = vector.extract_strided_slice %711 {offsets = [0, 0], sizes = [2, 20], strides = [1, 1]} : vector<2x80xf32> to vector<2x20xf32>
    %713 = vector.extract_strided_slice %711 {offsets = [0, 20], sizes = [2, 20], strides = [1, 1]} : vector<2x80xf32> to vector<2x20xf32>
    %714 = vector.extract_strided_slice %711 {offsets = [0, 40], sizes = [2, 20], strides = [1, 1]} : vector<2x80xf32> to vector<2x20xf32>
    %cst_285 = arith.constant 2.000000e+00 : f32
    %715 = vector.broadcast %cst_285 : f32 to vector<2x20xf32>
    %716 = arith.mulf %715, %714 : vector<2x20xf32>
    %cst_286 = arith.constant 1.000000e+00 : f32
    %717 = vector.broadcast %cst_286 : f32 to vector<2x20xf32>
    %718 = arith.subf %716, %717 : vector<2x20xf32>
    %719 = vector.extract_strided_slice %711 {offsets = [0, 60], sizes = [2, 20], strides = [1, 1]} : vector<2x80xf32> to vector<2x20xf32>
    %720 = arith.mulf %713, %689 : vector<2x20xf32>
    %721 = arith.mulf %712, %718 : vector<2x20xf32>
    %722 = arith.addf %720, %721 : vector<2x20xf32>
    %723 = math.tanh %722 : vector<2x20xf32>
    %724 = arith.mulf %719, %723 : vector<2x20xf32>
    %725 = arith.truncf %724 : vector<2x20xf32> to vector<2x20xbf16>
    %c0_287 = arith.constant 0 : index
    %c0_288 = arith.constant 0 : index
    %726 = vector.load %arg7[%c0_287, %c0_288] : memref<2x6xf32, #tpu.memory_space<vmem>>, vector<2x6xf32>
    %c21_289 = arith.constant 21 : index
    %c0_290 = arith.constant 0 : index
    %c0_291 = arith.constant 0 : index
    %727 = vector.load %arg5[%c21_289, %c0_290, %c0_291] : memref<24x20x6xf32, #tpu.memory_space<vmem>>, vector<1x20x6xf32>
    %728 = vector.shape_cast %727 : vector<1x20x6xf32> to vector<20x6xf32>
    %cst_292 = arith.constant dense<0.000000e+00> : vector<2x6xf32>
    %729 = tpu.matmul %724, %728, %cst_292 {dimension_numbers = #tpu.dot_dimension_numbers<[1], [0], [0], [1], [0, 0, 1, 1], [], []>} : vector<2x20xf32>, vector<20x6xf32>, vector<2x6xf32> -> vector<2x6xf32>
    %730 = arith.addf %726, %729 : vector<2x6xf32>
    %c0_293 = arith.constant 0 : index
    %c0_294 = arith.constant 0 : index
    %731 = vector.load %arg7[%c0_293, %c0_294] : memref<2x6xf32, #tpu.memory_space<vmem>>, vector<2x6xf32>
    tpu.vector_store %arg7[%c0_293, %c0_294], %730 {strides = array<i32>} : memref<2x6xf32, #tpu.memory_space<vmem>>, vector<2x6xf32>,
    %c0_295 = arith.constant 0 : index
    %c22 = arith.constant 22 : index
    %732 = vector.load %arg1[%c0_295, %c22] : memref<2x24xf32, #tpu.memory_space<vmem>>, vector<2x1xf32>
    %733 = vector.broadcast %732 : vector<2x1xf32> to vector<2x80xf32>
    %734 = vector.broadcast %4 : vector<1x80xf32> to vector<2x80xf32>
    %735 = arith.mulf %733, %734 : vector<2x80xf32>
    %736 = vector.broadcast %5 : vector<1x80xf32> to vector<2x80xf32>
    %737 = arith.addf %735, %736 : vector<2x80xf32>
    %cst_296 = arith.constant dense<0.000000e+00> : vector<2x80xf32>
    %738 = tpu.matmul %725, %6, %cst_296 {dimension_numbers = #tpu.dot_dimension_numbers<[1], [0], [0], [1], [0, 0, 1, 1], [], []>} : vector<2x20xbf16>, vector<20x80xbf16>, vector<2x80xf32> -> vector<2x80xf32>
    %739 = arith.addf %737, %738 : vector<2x80xf32>
    %740 = arith.negf %739 : vector<2x80xf32>
    %741 = math.exp %740 : vector<2x80xf32>
    %cst_297 = arith.constant 1.000000e+00 : f32
    %742 = vector.broadcast %cst_297 : f32 to vector<2x80xf32>
    %743 = arith.addf %742, %741 : vector<2x80xf32>
    %744 = arith.divf %742, %743 : vector<2x80xf32>
    %745 = vector.extract_strided_slice %744 {offsets = [0, 0], sizes = [2, 20], strides = [1, 1]} : vector<2x80xf32> to vector<2x20xf32>
    %746 = vector.extract_strided_slice %744 {offsets = [0, 20], sizes = [2, 20], strides = [1, 1]} : vector<2x80xf32> to vector<2x20xf32>
    %747 = vector.extract_strided_slice %744 {offsets = [0, 40], sizes = [2, 20], strides = [1, 1]} : vector<2x80xf32> to vector<2x20xf32>
    %cst_298 = arith.constant 2.000000e+00 : f32
    %748 = vector.broadcast %cst_298 : f32 to vector<2x20xf32>
    %749 = arith.mulf %748, %747 : vector<2x20xf32>
    %cst_299 = arith.constant 1.000000e+00 : f32
    %750 = vector.broadcast %cst_299 : f32 to vector<2x20xf32>
    %751 = arith.subf %749, %750 : vector<2x20xf32>
    %752 = vector.extract_strided_slice %744 {offsets = [0, 60], sizes = [2, 20], strides = [1, 1]} : vector<2x80xf32> to vector<2x20xf32>
    %753 = arith.mulf %746, %722 : vector<2x20xf32>
    %754 = arith.mulf %745, %751 : vector<2x20xf32>
    %755 = arith.addf %753, %754 : vector<2x20xf32>
    %756 = math.tanh %755 : vector<2x20xf32>
    %757 = arith.mulf %752, %756 : vector<2x20xf32>
    %758 = arith.truncf %757 : vector<2x20xf32> to vector<2x20xbf16>
    %c0_300 = arith.constant 0 : index
    %c0_301 = arith.constant 0 : index
    %759 = vector.load %arg7[%c0_300, %c0_301] : memref<2x6xf32, #tpu.memory_space<vmem>>, vector<2x6xf32>
    %c22_302 = arith.constant 22 : index
    %c0_303 = arith.constant 0 : index
    %c0_304 = arith.constant 0 : index
    %760 = vector.load %arg5[%c22_302, %c0_303, %c0_304] : memref<24x20x6xf32, #tpu.memory_space<vmem>>, vector<1x20x6xf32>
    %761 = vector.shape_cast %760 : vector<1x20x6xf32> to vector<20x6xf32>
    %cst_305 = arith.constant dense<0.000000e+00> : vector<2x6xf32>
    %762 = tpu.matmul %757, %761, %cst_305 {dimension_numbers = #tpu.dot_dimension_numbers<[1], [0], [0], [1], [0, 0, 1, 1], [], []>} : vector<2x20xf32>, vector<20x6xf32>, vector<2x6xf32> -> vector<2x6xf32>
    %763 = arith.addf %759, %762 : vector<2x6xf32>
    %c0_306 = arith.constant 0 : index
    %c0_307 = arith.constant 0 : index
    %764 = vector.load %arg7[%c0_306, %c0_307] : memref<2x6xf32, #tpu.memory_space<vmem>>, vector<2x6xf32>
    tpu.vector_store %arg7[%c0_306, %c0_307], %763 {strides = array<i32>} : memref<2x6xf32, #tpu.memory_space<vmem>>, vector<2x6xf32>,
    %c0_308 = arith.constant 0 : index
    %c23 = arith.constant 23 : index
    %765 = vector.load %arg1[%c0_308, %c23] : memref<2x24xf32, #tpu.memory_space<vmem>>, vector<2x1xf32>
    %766 = vector.broadcast %765 : vector<2x1xf32> to vector<2x80xf32>
    %767 = vector.broadcast %4 : vector<1x80xf32> to vector<2x80xf32>
    %768 = arith.mulf %766, %767 : vector<2x80xf32>
    %769 = vector.broadcast %5 : vector<1x80xf32> to vector<2x80xf32>
    %770 = arith.addf %768, %769 : vector<2x80xf32>
    %cst_309 = arith.constant dense<0.000000e+00> : vector<2x80xf32>
    %771 = tpu.matmul %758, %6, %cst_309 {dimension_numbers = #tpu.dot_dimension_numbers<[1], [0], [0], [1], [0, 0, 1, 1], [], []>} : vector<2x20xbf16>, vector<20x80xbf16>, vector<2x80xf32> -> vector<2x80xf32>
    %772 = arith.addf %770, %771 : vector<2x80xf32>
    %773 = arith.negf %772 : vector<2x80xf32>
    %774 = math.exp %773 : vector<2x80xf32>
    %cst_310 = arith.constant 1.000000e+00 : f32
    %775 = vector.broadcast %cst_310 : f32 to vector<2x80xf32>
    %776 = arith.addf %775, %774 : vector<2x80xf32>
    %777 = arith.divf %775, %776 : vector<2x80xf32>
    %778 = vector.extract_strided_slice %777 {offsets = [0, 0], sizes = [2, 20], strides = [1, 1]} : vector<2x80xf32> to vector<2x20xf32>
    %779 = vector.extract_strided_slice %777 {offsets = [0, 20], sizes = [2, 20], strides = [1, 1]} : vector<2x80xf32> to vector<2x20xf32>
    %780 = vector.extract_strided_slice %777 {offsets = [0, 40], sizes = [2, 20], strides = [1, 1]} : vector<2x80xf32> to vector<2x20xf32>
    %cst_311 = arith.constant 2.000000e+00 : f32
    %781 = vector.broadcast %cst_311 : f32 to vector<2x20xf32>
    %782 = arith.mulf %781, %780 : vector<2x20xf32>
    %cst_312 = arith.constant 1.000000e+00 : f32
    %783 = vector.broadcast %cst_312 : f32 to vector<2x20xf32>
    %784 = arith.subf %782, %783 : vector<2x20xf32>
    %785 = vector.extract_strided_slice %777 {offsets = [0, 60], sizes = [2, 20], strides = [1, 1]} : vector<2x80xf32> to vector<2x20xf32>
    %786 = arith.mulf %779, %755 : vector<2x20xf32>
    %787 = arith.mulf %778, %784 : vector<2x20xf32>
    %788 = arith.addf %786, %787 : vector<2x20xf32>
    %789 = math.tanh %788 : vector<2x20xf32>
    %790 = arith.mulf %785, %789 : vector<2x20xf32>
    %c0_313 = arith.constant 0 : index
    %c0_314 = arith.constant 0 : index
    %791 = vector.load %arg7[%c0_313, %c0_314] : memref<2x6xf32, #tpu.memory_space<vmem>>, vector<2x6xf32>
    %c23_315 = arith.constant 23 : index
    %c0_316 = arith.constant 0 : index
    %c0_317 = arith.constant 0 : index
    %792 = vector.load %arg5[%c23_315, %c0_316, %c0_317] : memref<24x20x6xf32, #tpu.memory_space<vmem>>, vector<1x20x6xf32>
    %793 = vector.shape_cast %792 : vector<1x20x6xf32> to vector<20x6xf32>
    %cst_318 = arith.constant dense<0.000000e+00> : vector<2x6xf32>
    %794 = tpu.matmul %790, %793, %cst_318 {dimension_numbers = #tpu.dot_dimension_numbers<[1], [0], [0], [1], [0, 0, 1, 1], [], []>} : vector<2x20xf32>, vector<20x6xf32>, vector<2x6xf32> -> vector<2x6xf32>
    %795 = arith.addf %791, %794 : vector<2x6xf32>
    %c0_319 = arith.constant 0 : index
    %c0_320 = arith.constant 0 : index
    %796 = vector.load %arg7[%c0_319, %c0_320] : memref<2x6xf32, #tpu.memory_space<vmem>>, vector<2x6xf32>
    tpu.vector_store %arg7[%c0_319, %c0_320], %795 {strides = array<i32>} : memref<2x6xf32, #tpu.memory_space<vmem>>, vector<2x6xf32>,
    return
  }
  func.func @transform_0(%arg0: i32) -> (i32, i32) {
    %c0_i32 = arith.constant 0 : i32
    %c0_i32_0 = arith.constant 0 : i32
    return %arg0, %c0_i32 : i32, i32
  }
  func.func @transform_1(%arg0: i32) -> (i32, i32) {
    %c0_i32 = arith.constant 0 : i32
    %c0_i32_0 = arith.constant 0 : i32
    %c0_i32_1 = arith.constant 0 : i32
    return %c0_i32, %c0_i32_0 : i32, i32
  }
  func.func @transform_2(%arg0: i32) -> (i32, i32) {
    %c0_i32 = arith.constant 0 : i32
    %c0_i32_0 = arith.constant 0 : i32
    %c0_i32_1 = arith.constant 0 : i32
    return %c0_i32, %c0_i32_0 : i32, i32
  }
  func.func @transform_3(%arg0: i32) -> (i32, i32) {
    %c0_i32 = arith.constant 0 : i32
    %c0_i32_0 = arith.constant 0 : i32
    %c0_i32_1 = arith.constant 0 : i32
    return %c0_i32, %c0_i32_0 : i32, i32
  }
  func.func @transform_4(%arg0: i32) -> (i32, i32, i32) {
    %c0_i32 = arith.constant 0 : i32
    %c0_i32_0 = arith.constant 0 : i32
    %c0_i32_1 = arith.constant 0 : i32
    %c0_i32_2 = arith.constant 0 : i32
    return %c0_i32, %c0_i32_0, %c0_i32_1 : i32, i32, i32
  }
  func.func @transform_5(%arg0: i32) -> (i32, i32) {
    %c0_i32 = arith.constant 0 : i32
    %c0_i32_0 = arith.constant 0 : i32
    %c0_i32_1 = arith.constant 0 : i32
    return %c0_i32, %c0_i32_0 : i32, i32
  }
  func.func @transform_6(%arg0: i32) -> (i32, i32) {
    %c0_i32 = arith.constant 0 : i32
    %c0_i32_0 = arith.constant 0 : i32
    return %arg0, %c0_i32 : i32, i32
  }
}

</mosaic_0001>

<llo_original>
// kernel: lstm_model_forward.1
$region0: #{lstm_model_forward.1}
  #allocation0 [shape = 'u32[]', space=smem, size = 0x4, offset = 0x4, fixed_abs, tag = 'smem constant byte address 0x4 - core index']
  #allocation1 [shape = 'u32[144,128]{1,0:T(1,128)}', space=vmem, size = 0x12000, scoped, tag = 'internal scratch']
  %s0 = inlined_call_operand.vmem [shape: f32[2,24], index: 0, kind: input, shape index: {}]
  %s1 = inlined_call_operand.vmem [shape: f32[1,80], index: 1, kind: input, shape index: {}]
  %s2 = inlined_call_operand.vmem [shape: f32[1,80], index: 2, kind: input, shape index: {}]
  %s3 = inlined_call_operand.vmem [shape: bf16[20,80], index: 3, kind: input, shape index: {}]
  %s4 = inlined_call_operand.vmem [shape: f32[24,20,6], index: 4, kind: input, shape index: {}]
  %s5 = inlined_call_operand.vmem [shape: f32[1,6], index: 5, kind: input, shape index: {}]
  %s6 = inlined_call_operand.hbm [shape: f32[2,6], index: 6, kind: output, shape index: {}]
  %s7 = sld [smem:[#allocation0]]
  $region34: #{lstm_model_forward.1} parent=0
    _
  %s9 = ssub.s32 1, %s7
  %s10 = scalar_select 0, %s9, %s7
  $region1: #{lstm_model_forward.1} parent=0
    #allocation2 [shape = 'u8[1024]{0}', space=vmem, size = 0x400, scoped, tag = 'output window, operand 0, single buffered']
    #allocation3 [shape = 's32[1]{0}', space=sflag, size = 0x4, scoped, tag = 'scoped memory for lstm_model_forward.1']
    %11 = vsyncpa [#allocation3], 0
    // Predicated region
    $region2: #{lstm_model_forward.1} parent=1 // pred_check
      _
    $region3: #{lstm_model_forward.1} parent=1 // pred_check_branch
      %13 = sbr.rel (0) target = $region5
    $region4: #{lstm_model_forward.1} parent=1 // pred_region
      _
    $region5: #{lstm_model_forward.1} parent=1 // pred_fallthru
      _
    // Predicated region
    $region6: #{lstm_model_forward.1} parent=1 // pred_check
      _
    $region7: #{lstm_model_forward.1} parent=1 // pred_check_branch
      %15 = sbr.rel (0) target = $region9
    $region8: #{lstm_model_forward.1} parent=1 // pred_region
      _
    $region9: #{lstm_model_forward.1} parent=1 // pred_fallthru
      _
    // Predicated region
    $region10: #{lstm_model_forward.1} parent=1 // pred_check
      _
    $region11: #{lstm_model_forward.1} parent=1 // pred_check_branch
      %17 = sbr.rel (0) target = $region13
    $region12: #{lstm_model_forward.1} parent=1 // pred_region
      _
    $region13: #{lstm_model_forward.1} parent=1 // pred_fallthru
      _
    // Predicated region
    $region14: #{lstm_model_forward.1} parent=1 // pred_check
      _
    $region15: #{lstm_model_forward.1} parent=1 // pred_check_branch
      %19 = sbr.rel (0) target = $region17
    $region16: #{lstm_model_forward.1} parent=1 // pred_region
      _
    $region17: #{lstm_model_forward.1} parent=1 // pred_fallthru
      _
    // Predicated region
    $region18: #{lstm_model_forward.1} parent=1 // pred_check
      _
    $region19: #{lstm_model_forward.1} parent=1 // pred_check_branch
      %21 = sbr.rel (0) target = $region21
    $region20: #{lstm_model_forward.1} parent=1 // pred_region
      _
    $region21: #{lstm_model_forward.1} parent=1 // pred_fallthru
      _
    // Predicated region
    $region22: #{lstm_model_forward.1} parent=1 // pred_check
      _
    $region23: #{lstm_model_forward.1} parent=1 // pred_check_branch
      %23 = sbr.rel (0) target = $region25
    $region24: #{lstm_model_forward.1} parent=1 // pred_region
      _
    $region25: #{lstm_model_forward.1} parent=1 // pred_fallthru
      _
    %v25 = vld [vmem:[%s5] sm:$0x1]
    %v27 = vlaneseq
    %v28 = vshrl.u32 %v27, 7
    %v29 = vsub.s32 0, %v28
    %v30 = vrot.slane %v25, %v29
    %vm32 = vcmask 41984
    %33 = vst.msk [vmem:[#allocation2] sm:$0x3] %vm32, %v30
    %v34 = vld [vmem:[%s1] sm:$0x1]
    %v35 = vld [vmem:[%s2] sm:$0x1]
    %v36 = vld [vmem:[%s3] sm:$0xf]
    %v37 = vld [vmem:[%s3 + $0x4] sm:$0xf]
    %v38 = vld [vmem:[%s3 + $0x8] sm:$0x3]
    %v39 = vld [vmem:[%s0] sm:$0x3]
    %41 = vset.pattern.permute.xlu0 0
    %42 = vperm.xlu0 %41, %v39
    %v43 = vpop.permute.xlu0 %42
    %v46 = vlaneseq
    %v47 = vshrl.u32 %v46, 7
    %v48 = vsub.s32 0, %v47
    %v49 = vrot.slane %v34, %v48
    %v51 = vmul.f32 %v43, %v49
    %v53 = vlaneseq
    %v54 = vshrl.u32 %v53, 7
    %v55 = vsub.s32 0, %v54
    %v56 = vrot.slane %v35, %v55
    %v58 = vadd.f32 %v51, %v56
    %v59 = vxor.u32 %v58, 2147483648
    %v60 = vmul.f32 %v59, 1.442695
    %v61 = vpow.pop %v60
    %v62 = vadd.f32 %v61, 1.0
    %v63 = vrcp.pop %v62
    %v64 = vmul.f32 1.0, %v63
    %v65 = vmul.f32 %v64, 2.0
    %v66 = vsub.f32 %v65, 1.0
    %v67 = vmul.f32 %v64, 0.0
    %69 = vrot.lane.b32.xlu0 %v66, 88
    %v70 = vpop.permute.xlu0 %69
    %v72 = vmul.f32 %v64, %v70
    %74 = vrot.lane.b32.xlu0 %v72, 20
    %v75 = vpop.permute.xlu0 %74
    %v77 = vadd.f32 %v67, %v75
    %v78 = vtanh.pop %v77
    %80 = vrot.lane.b32.xlu0 %v78, 40
    %v81 = vpop.permute.xlu0 %80
    %v83 = vmul.f32 %v64, %v81
    %v84 = vpack.c.bf16 %v83, %v83
    %v85 = vld [vmem:[#allocation2] sm:$0x3]
    %v86 = vld [vmem:[%s4] sm:$0xff]
    %v87 = vld [vmem:[%s4 + $0x8] sm:$0xff]
    %v88 = vld [vmem:[%s4 + $0x10] sm:$0xf]
    %90 = vrot.lane.b32.xlu0 %v83, 68
    %v91 = vpop.permute.xlu0 %90
    %vm92 = vcmask 162816
    %v93 = vsel %vm92, %v91, 0
    %vm95 = vcmask 1043456
    %v97 = vsel %vm95, %v88, 0
    %99 = vmatprep.subr.mxu0 0.0
    %100 = vmatpush1.msra.mxu0 %v86
    %101 = vmatprep.subr.mxu0 0.0
    %102 = vmatpush1.msra.mxu0 %v87
    %103 = vmatprep.subr.mxu0 0.0
    %104 = vmatpush1.msra.mxu0 %v97
    %105 = vmatprep.subr.mxu0 0.0
    %106 = vmatpush1.msra.mxu0 0.0
    %107 = vmatprep.subr.mxu0 0.0
    %108 = vmatpush1.msra.mxu0 0.0
    %109 = vmatprep.subr.mxu0 0.0
    %110 = vmatpush1.msra.mxu0 0.0
    %111 = vmatprep.subr.mxu0 0.0
    %112 = vmatpush1.msra.mxu0 0.0
    %113 = vmatprep.subr.mxu0 0.0
    %114 = vmatpush1.msra.mxu0 0.0
    %115 = vmatprep.subr.mxu0 0.0
    %116 = vmatpush1.msra.mxu0 0.0
    %117 = vmatprep.subr.mxu0 0.0
    %118 = vmatpush1.msra.mxu0 0.0
    %119 = vmatprep.subr.mxu0 0.0
    %120 = vmatpush1.msra.mxu0 0.0
    %121 = vmatprep.subr.mxu0 0.0
    %122 = vmatpush1.msra.mxu0 0.0
    %123 = vmatprep.subr.mxu0 0.0
    %124 = vmatpush1.msra.mxu0 0.0
    %125 = vmatprep.subr.mxu0 0.0
    %126 = vmatpush1.msra.mxu0 0.0
    %127 = vmatprep.subr.mxu0 0.0
    %128 = vmatpush1.msra.mxu0 0.0
    %129 = vmatprep.subr.mxu0 0.0
    %130 = vmatpush1.msra.mxu0 0.0
    %131 = vmatprep.subr.mxu0 0.0
    %132 = vmatpush1.msra.mxu0 0.0
    %133 = vmatprep.subr.mxu0 0.0
    %134 = vmatpush1.msra.mxu0 0.0
    %135 = vmatprep.subr.mxu0 0.0
    %136 = vmatpush1.msra.mxu0 0.0
    %137 = vmatprep.subr.mxu0 0.0
    %138 = vmatpush1.msra.mxu0 0.0
    %139 = vmatprep.subr.mxu0 0.0
    %140 = vmatpush1.msra.mxu0 0.0
    %141 = vmatprep.subr.mxu0 0.0
    %142 = vmatpush1.msra.mxu0 0.0
    %143 = vmatprep.subr.mxu0 0.0
    %144 = vmatpush1.msra.mxu0 0.0
    %145 = vmatprep.subr.mxu0 0.0
    %146 = vmatpush1.msra.mxu0 0.0
    %147 = vmatprep.subr.mxu0 0.0
    %148 = vmatpush1.msra.mxu0 0.0
    %149 = vmatprep.subr.mxu0 0.0
    %150 = vmatpush1.msra.mxu0 0.0
    %151 = vmatprep.subr.mxu0 0.0
    %152 = vmatpush1.msra.mxu0 0.0
    %153 = vmatprep.subr.mxu0 0.0
    %154 = vmatpush1.msra.mxu0 0.0
    %155 = vmatprep.subr.mxu0 0.0
    %156 = vmatpush1.msra.mxu0 0.0
    %157 = vmatprep.subr.mxu0 0.0
    %158 = vmatpush1.msra.mxu0 0.0
    %159 = vmatprep.subr.mxu0 0.0
    %160 = vmatpush1.msra.mxu0 0.0
    %161 = vmatprep.subr.mxu0 0.0
    %162 = vmatpush1.msra.mxu0 0.0
    %163 = vmatprep.mubr.f32.mxu0 0.0
    %164 = vmatmul.mubr.f32.gmra.mrb[0].mxu0 %v93
    %v165 = vpop.f32.mrb[0].mxu0
    %v166 = vadd.f32 0.0, %v165
    %v167 = vpop.f32.mrb[0].mxu0
    %168 = vdwg.mxu0
    %v169 = vadd.f32 %v85, %v166
    %170 = vst.msk [vmem:[#allocation2] sm:$0x3] %vm32, %v169
    %v171 = vld [vmem:[%s0] sm:$0x3]
    %173 = vset.pattern.permute.xlu0 1
    %174 = vperm.xlu0 %173, %v171
    %v175 = vpop.permute.xlu0 %174
    %v177 = vmul.f32 %v175, %v49
    %v178 = vadd.f32 %v177, %v56
    %180 = vrot.lane.b32.xlu0 %v84, 68
    %v181 = vpop.permute.xlu0 %180
    %v185 = vunpack.c.l.b16 %v36
    %v186 = vunpack.c.l.b16 %v37
    %v187 = vunpack.c.l.b16 %v38
    %v188 = vpack.c.b16 %v186, %v185
    %v189 = vpack.c.b16 %v187, %v187
    %v192 = vsel %vm92, %v181, 0
    %vm194 = vcmask 1041408
    %v196 = vsel %vm194, %v189, 0
    %198 = vmatprep.subr.bf16.mxu0 0
    %199 = vmatpush1.bf16.msra.mxu0 %v188
    %200 = vmatprep.subr.bf16.mxu0 0
    %201 = vmatpush1.bf16.msra.mxu0 %v196
    %202 = vmatprep.subr.bf16.mxu0 0
    %203 = vmatpush1.bf16.msra.mxu0 0
    %204 = vmatprep.subr.bf16.mxu0 0
    %205 = vmatpush1.bf16.msra.mxu0 0
    %206 = vmatprep.subr.bf16.mxu0 0
    %207 = vmatpush1.bf16.msra.mxu0 0
    %208 = vmatprep.subr.bf16.mxu0 0
    %209 = vmatpush1.bf16.msra.mxu0 0
    %210 = vmatprep.subr.bf16.mxu0 0
    %211 = vmatpush1.bf16.msra.mxu0 0
    %212 = vmatprep.subr.bf16.mxu0 0
    %213 = vmatpush1.bf16.msra.mxu0 0
    %214 = vmatprep.subr.bf16.mxu0 0
    %215 = vmatpush1.bf16.msra.mxu0 0
    %216 = vmatprep.subr.bf16.mxu0 0
    %217 = vmatpush1.bf16.msra.mxu0 0
    %218 = vmatprep.subr.bf16.mxu0 0
    %219 = vmatpush1.bf16.msra.mxu0 0
    %220 = vmatprep.subr.bf16.mxu0 0
    %221 = vmatpush1.bf16.msra.mxu0 0
    %222 = vmatprep.subr.bf16.mxu0 0
    %223 = vmatpush1.bf16.msra.mxu0 0
    %224 = vmatprep.subr.bf16.mxu0 0
    %225 = vmatpush1.bf16.msra.mxu0 0
    %226 = vmatprep.subr.bf16.mxu0 0
    %227 = vmatpush1.bf16.msra.mxu0 0
    %228 = vmatprep.subr.bf16.mxu0 0
    %229 = vmatpush1.bf16.msra.mxu0 0
    %230 = vmatprep.mubr.bf16.mxu0 0
    %231 = vmatmul.mubr.bf16.gmra.mrb[0].mxu0 %v192
    %v232 = vpop.f32.mrb[0].mxu0
    %v233 = vadd.f32 0.0, %v232
    %v234 = vpop.f32.mrb[0].mxu0
    %v235 = vpop.f32.mrb[0].mxu0
    %v236 = vpop.f32.mrb[0].mxu0
    %237 = vdwg.mxu0
    %v238 = vadd.f32 %v178, %v233
    %v239 = vxor.u32 %v238, 2147483648
    %v240 = vmul.f32 %v239, 1.442695
    %v241 = vpow.pop %v240
    %v242 = vadd.f32 %v241, 1.0
    %v243 = vrcp.pop %v242
    %v244 = vmul.f32 1.0, %v243
    %v245 = vmul.f32 %v244, 2.0
    %v246 = vsub.f32 %v245, 1.0
    %v247 = vmul.f32 %v244, %v77
    %249 = vrot.lane.b32.xlu0 %v246, 88
    %v250 = vpop.permute.xlu0 %249
    %v252 = vmul.f32 %v244, %v250
    %254 = vrot.lane.b32.xlu0 %v252, 20
    %v255 = vpop.permute.xlu0 %254
    %v257 = vadd.f32 %v247, %v255
    %v258 = vtanh.pop %v257
    %260 = vrot.lane.b32.xlu0 %v258, 40
    %v261 = vpop.permute.xlu0 %260
    %v263 = vmul.f32 %v244, %v261
    %v264 = vpack.c.bf16 %v263, %v263
    %v265 = vld [vmem:[#allocation2] sm:$0x3]
    %s266 = scalar_lea.vmem %s4, 24
    %v267 = vld [vmem:[%s266] sm:$0xff]
    %v268 = vld [vmem:[%s266 + $0x8] sm:$0xff]
    %v269 = vld [vmem:[%s266 + $0x10] sm:$0xf]
    %271 = vrot.lane.b32.xlu0 %v263, 68
    %v272 = vpop.permute.xlu0 %271
    %v273 = vsel %vm92, %v272, 0
    %v276 = vsel %vm95, %v269, 0
    %278 = vmatprep.subr.mxu0 0.0
    %279 = vmatpush1.msra.mxu0 %v267
    %280 = vmatprep.subr.mxu0 0.0
    %281 = vmatpush1.msra.mxu0 %v268
    %282 = vmatprep.subr.mxu0 0.0
    %283 = vmatpush1.msra.mxu0 %v276
    %284 = vmatprep.subr.mxu0 0.0
    %285 = vmatpush1.msra.mxu0 0.0
    %286 = vmatprep.subr.mxu0 0.0
    %287 = vmatpush1.msra.mxu0 0.0
    %288 = vmatprep.subr.mxu0 0.0
    %289 = vmatpush1.msra.mxu0 0.0
    %290 = vmatprep.subr.mxu0 0.0
    %291 = vmatpush1.msra.mxu0 0.0
    %292 = vmatprep.subr.mxu0 0.0
    %293 = vmatpush1.msra.mxu0 0.0
    %294 = vmatprep.subr.mxu0 0.0
    %295 = vmatpush1.msra.mxu0 0.0
    %296 = vmatprep.subr.mxu0 0.0
    %297 = vmatpush1.msra.mxu0 0.0
    %298 = vmatprep.subr.mxu0 0.0
    %299 = vmatpush1.msra.mxu0 0.0
    %300 = vmatprep.subr.mxu0 0.0
    %301 = vmatpush1.msra.mxu0 0.0
    %302 = vmatprep.subr.mxu0 0.0
    %303 = vmatpush1.msra.mxu0 0.0
    %304 = vmatprep.subr.mxu0 0.0
    %305 = vmatpush1.msra.mxu0 0.0
    %306 = vmatprep.subr.mxu0 0.0
    %307 = vmatpush1.msra.mxu0 0.0
    %308 = vmatprep.subr.mxu0 0.0
    %309 = vmatpush1.msra.mxu0 0.0
    %310 = vmatprep.subr.mxu0 0.0
    %311 = vmatpush1.msra.mxu0 0.0
    %312 = vmatprep.subr.mxu0 0.0
    %313 = vmatpush1.msra.mxu0 0.0
    %314 = vmatprep.subr.mxu0 0.0
    %315 = vmatpush1.msra.mxu0 0.0
    %316 = vmatprep.subr.mxu0 0.0
    %317 = vmatpush1.msra.mxu0 0.0
    %318 = vmatprep.subr.mxu0 0.0
    %319 = vmatpush1.msra.mxu0 0.0
    %320 = vmatprep.subr.mxu0 0.0
    %321 = vmatpush1.msra.mxu0 0.0
    %322 = vmatprep.subr.mxu0 0.0
    %323 = vmatpush1.msra.mxu0 0.0
    %324 = vmatprep.subr.mxu0 0.0
    %325 = vmatpush1.msra.mxu0 0.0
    %326 = vmatprep.subr.mxu0 0.0
    %327 = vmatpush1.msra.mxu0 0.0
    %328 = vmatprep.subr.mxu0 0.0
    %329 = vmatpush1.msra.mxu0 0.0
    %330 = vmatprep.subr.mxu0 0.0
    %331 = vmatpush1.msra.mxu0 0.0
    %332 = vmatprep.subr.mxu0 0.0
    %333 = vmatpush1.msra.mxu0 0.0
    %334 = vmatprep.subr.mxu0 0.0
    %335 = vmatpush1.msra.mxu0 0.0
    %336 = vmatprep.subr.mxu0 0.0
    %337 = vmatpush1.msra.mxu0 0.0
    %338 = vmatprep.subr.mxu0 0.0
    %339 = vmatpush1.msra.mxu0 0.0
    %340 = vmatprep.subr.mxu0 0.0
    %341 = vmatpush1.msra.mxu0 0.0
    %342 = vmatprep.mubr.f32.mxu0 0.0
    %343 = vmatmul.mubr.f32.gmra.mrb[0].mxu0 %v273
    %v344 = vpop.f32.mrb[0].mxu0
    %v345 = vadd.f32 0.0, %v344
    %v346 = vpop.f32.mrb[0].mxu0
    %347 = vdwg.mxu0
    %v348 = vadd.f32 %v265, %v345
    %349 = vst.msk [vmem:[#allocation2] sm:$0x3] %vm32, %v348
    %v350 = vld [vmem:[%s0] sm:$0x3]
    %352 = vset.pattern.permute.xlu0 2
    %353 = vperm.xlu0 %352, %v350
    %v354 = vpop.permute.xlu0 %353
    %v356 = vmul.f32 %v354, %v49
    %v357 = vadd.f32 %v356, %v56
    %359 = vrot.lane.b32.xlu0 %v264, 68
    %v360 = vpop.permute.xlu0 %359
    %v362 = vsel %vm92, %v360, 0
    %364 = vmatprep.subr.bf16.mxu0 0
    %365 = vmatpush1.bf16.msra.mxu0 %v188
    %366 = vmatprep.subr.bf16.mxu0 0
    %367 = vmatpush1.bf16.msra.mxu0 %v196
    %368 = vmatprep.subr.bf16.mxu0 0
    %369 = vmatpush1.bf16.msra.mxu0 0
    %370 = vmatprep.subr.bf16.mxu0 0
    %371 = vmatpush1.bf16.msra.mxu0 0
    %372 = vmatprep.subr.bf16.mxu0 0
    %373 = vmatpush1.bf16.msra.mxu0 0
    %374 = vmatprep.subr.bf16.mxu0 0
    %375 = vmatpush1.bf16.msra.mxu0 0
    %376 = vmatprep.subr.bf16.mxu0 0
    %377 = vmatpush1.bf16.msra.mxu0 0
    %378 = vmatprep.subr.bf16.mxu0 0
    %379 = vmatpush1.bf16.msra.mxu0 0
    %380 = vmatprep.subr.bf16.mxu0 0
    %381 = vmatpush1.bf16.msra.mxu0 0
    %382 = vmatprep.subr.bf16.mxu0 0
    %383 = vmatpush1.bf16.msra.mxu0 0
    %384 = vmatprep.subr.bf16.mxu0 0
    %385 = vmatpush1.bf16.msra.mxu0 0
    %386 = vmatprep.subr.bf16.mxu0 0
    %387 = vmatpush1.bf16.msra.mxu0 0
    %388 = vmatprep.subr.bf16.mxu0 0
    %389 = vmatpush1.bf16.msra.mxu0 0
    %390 = vmatprep.subr.bf16.mxu0 0
    %391 = vmatpush1.bf16.msra.mxu0 0
    %392 = vmatprep.subr.bf16.mxu0 0
    %393 = vmatpush1.bf16.msra.mxu0 0
    %394 = vmatprep.subr.bf16.mxu0 0
    %395 = vmatpush1.bf16.msra.mxu0 0
    %396 = vmatprep.mubr.bf16.mxu0 0
    %397 = vmatmul.mubr.bf16.gmra.mrb[0].mxu0 %v362
    %v398 = vpop.f32.mrb[0].mxu0
    %v399 = vadd.f32 0.0, %v398
    %v400 = vpop.f32.mrb[0].mxu0
    %v401 = vpop.f32.mrb[0].mxu0
    %v402 = vpop.f32.mrb[0].mxu0
    %403 = vdwg.mxu0
    %v404 = vadd.f32 %v357, %v399
    %v405 = vxor.u32 %v404, 2147483648
    %v406 = vmul.f32 %v405, 1.442695
    %v407 = vpow.pop %v406
    %v408 = vadd.f32 %v407, 1.0
    %v409 = vrcp.pop %v408
    %v410 = vmul.f32 1.0, %v409
    %v411 = vmul.f32 %v410, 2.0
    %v412 = vsub.f32 %v411, 1.0
    %v413 = vmul.f32 %v410, %v257
    %415 = vrot.lane.b32.xlu0 %v412, 88
    %v416 = vpop.permute.xlu0 %415
    %v418 = vmul.f32 %v410, %v416
    %420 = vrot.lane.b32.xlu0 %v418, 20
    %v421 = vpop.permute.xlu0 %420
    %v423 = vadd.f32 %v413, %v421
    %v424 = vtanh.pop %v423
    %426 = vrot.lane.b32.xlu0 %v424, 40
    %v427 = vpop.permute.xlu0 %426
    %v429 = vmul.f32 %v410, %v427
    %v430 = vpack.c.bf16 %v429, %v429
    %v431 = vld [vmem:[#allocation2] sm:$0x3]
    %s432 = scalar_lea.vmem %s4, 48
    %v433 = vld [vmem:[%s432] sm:$0xff]
    %v434 = vld [vmem:[%s432 + $0x8] sm:$0xff]
    %v435 = vld [vmem:[%s432 + $0x10] sm:$0xf]
    %437 = vrot.lane.b32.xlu0 %v429, 68
    %v438 = vpop.permute.xlu0 %437
    %v439 = vsel %vm92, %v438, 0
    %v442 = vsel %vm95, %v435, 0
    %444 = vmatprep.subr.mxu0 0.0
    %445 = vmatpush1.msra.mxu0 %v433
    %446 = vmatprep.subr.mxu0 0.0
    %447 = vmatpush1.msra.mxu0 %v434
    %448 = vmatprep.subr.mxu0 0.0
    %449 = vmatpush1.msra.mxu0 %v442
    %450 = vmatprep.subr.mxu0 0.0
    %451 = vmatpush1.msra.mxu0 0.0
    %452 = vmatprep.subr.mxu0 0.0
    %453 = vmatpush1.msra.mxu0 0.0
    %454 = vmatprep.subr.mxu0 0.0
    %455 = vmatpush1.msra.mxu0 0.0
    %456 = vmatprep.subr.mxu0 0.0
    %457 = vmatpush1.msra.mxu0 0.0
    %458 = vmatprep.subr.mxu0 0.0
    %459 = vmatpush1.msra.mxu0 0.0
    %460 = vmatprep.subr.mxu0 0.0
    %461 = vmatpush1.msra.mxu0 0.0
    %462 = vmatprep.subr.mxu0 0.0
    %463 = vmatpush1.msra.mxu0 0.0
    %464 = vmatprep.subr.mxu0 0.0
    %465 = vmatpush1.msra.mxu0 0.0
    %466 = vmatprep.subr.mxu0 0.0
    %467 = vmatpush1.msra.mxu0 0.0
    %468 = vmatprep.subr.mxu0 0.0
    %469 = vmatpush1.msra.mxu0 0.0
    %470 = vmatprep.subr.mxu0 0.0
    %471 = vmatpush1.msra.mxu0 0.0
    %472 = vmatprep.subr.mxu0 0.0
    %473 = vmatpush1.msra.mxu0 0.0
    %474 = vmatprep.subr.mxu0 0.0
    %475 = vmatpush1.msra.mxu0 0.0
    %476 = vmatprep.subr.mxu0 0.0
    %477 = vmatpush1.msra.mxu0 0.0
    %478 = vmatprep.subr.mxu0 0.0
    %479 = vmatpush1.msra.mxu0 0.0
    %480 = vmatprep.subr.mxu0 0.0
    %481 = vmatpush1.msra.mxu0 0.0
    %482 = vmatprep.subr.mxu0 0.0
    %483 = vmatpush1.msra.mxu0 0.0
    %484 = vmatprep.subr.mxu0 0.0
    %485 = vmatpush1.msra.mxu0 0.0
    %486 = vmatprep.subr.mxu0 0.0
    %487 = vmatpush1.msra.mxu0 0.0
    %488 = vmatprep.subr.mxu0 0.0
    %489 = vmatpush1.msra.mxu0 0.0
    %490 = vmatprep.subr.mxu0 0.0
    %491 = vmatpush1.msra.mxu0 0.0
    %492 = vmatprep.subr.mxu0 0.0
    %493 = vmatpush1.msra.mxu0 0.0
    %494 = vmatprep.subr.mxu0 0.0
    %495 = vmatpush1.msra.mxu0 0.0
    %496 = vmatprep.subr.mxu0 0.0
    %497 = vmatpush1.msra.mxu0 0.0
    %498 = vmatprep.subr.mxu0 0.0
    %499 = vmatpush1.msra.mxu0 0.0
    %500 = vmatprep.subr.mxu0 0.0
    %501 = vmatpush1.msra.mxu0 0.0
    %502 = vmatprep.subr.mxu0 0.0
    %503 = vmatpush1.msra.mxu0 0.0
    %504 = vmatprep.subr.mxu0 0.0
    %505 = vmatpush1.msra.mxu0 0.0
    %506 = vmatprep.subr.mxu0 0.0
    %507 = vmatpush1.msra.mxu0 0.0
    %508 = vmatprep.mubr.f32.mxu0 0.0
    %509 = vmatmul.mubr.f32.gmra.mrb[0].mxu0 %v439
    %v510 = vpop.f32.mrb[0].mxu0
    %v511 = vadd.f32 0.0, %v510
    %v512 = vpop.f32.mrb[0].mxu0
    %513 = vdwg.mxu0
    %v514 = vadd.f32 %v431, %v511
    %515 = vst.msk [vmem:[#allocation2] sm:$0x3] %vm32, %v514
    %v516 = vld [vmem:[%s0] sm:$0x3]
    %518 = vset.pattern.permute.xlu0 3
    %519 = vperm.xlu0 %518, %v516
    %v520 = vpop.permute.xlu0 %519
    %v522 = vmul.f32 %v520, %v49
    %v523 = vadd.f32 %v522, %v56
    %525 = vrot.lane.b32.xlu0 %v430, 68
    %v526 = vpop.permute.xlu0 %525
    %v528 = vsel %vm92, %v526, 0
    %530 = vmatprep.subr.bf16.mxu0 0
    %531 = vmatpush1.bf16.msra.mxu0 %v188
    %532 = vmatprep.subr.bf16.mxu0 0
    %533 = vmatpush1.bf16.msra.mxu0 %v196
    %534 = vmatprep.subr.bf16.mxu0 0
    %535 = vmatpush1.bf16.msra.mxu0 0
    %536 = vmatprep.subr.bf16.mxu0 0
    %537 = vmatpush1.bf16.msra.mxu0 0
    %538 = vmatprep.subr.bf16.mxu0 0
    %539 = vmatpush1.bf16.msra.mxu0 0
    %540 = vmatprep.subr.bf16.mxu0 0
    %541 = vmatpush1.bf16.msra.mxu0 0
    %542 = vmatprep.subr.bf16.mxu0 0
    %543 = vmatpush1.bf16.msra.mxu0 0
    %544 = vmatprep.subr.bf16.mxu0 0
    %545 = vmatpush1.bf16.msra.mxu0 0
    %546 = vmatprep.subr.bf16.mxu0 0
    %547 = vmatpush1.bf16.msra.mxu0 0
    %548 = vmatprep.subr.bf16.mxu0 0
    %549 = vmatpush1.bf16.msra.mxu0 0
    %550 = vmatprep.subr.bf16.mxu0 0
    %551 = vmatpush1.bf16.msra.mxu0 0
    %552 = vmatprep.subr.bf16.mxu0 0
    %553 = vmatpush1.bf16.msra.mxu0 0
    %554 = vmatprep.subr.bf16.mxu0 0
    %555 = vmatpush1.bf16.msra.mxu0 0
    %556 = vmatprep.subr.bf16.mxu0 0
    %557 = vmatpush1.bf16.msra.mxu0 0
    %558 = vmatprep.subr.bf16.mxu0 0
    %559 = vmatpush1.bf16.msra.mxu0 0
    %560 = vmatprep.subr.bf16.mxu0 0
    %561 = vmatpush1.bf16.msra.mxu0 0
    %562 = vmatprep.mubr.bf16.mxu0 0
    %563 = vmatmul.mubr.bf16.gmra.mrb[0].mxu0 %v528
    %v564 = vpop.f32.mrb[0].mxu0
    %v565 = vadd.f32 0.0, %v564
    %v566 = vpop.f32.mrb[0].mxu0
    %v567 = vpop.f32.mrb[0].mxu0
    %v568 = vpop.f32.mrb[0].mxu0
    %569 = vdwg.mxu0
    %v570 = vadd.f32 %v523, %v565
    %v571 = vxor.u32 %v570, 2147483648
    %v572 = vmul.f32 %v571, 1.442695
    %v573 = vpow.pop %v572
    %v574 = vadd.f32 %v573, 1.0
    %v575 = vrcp.pop %v574
    %v576 = vmul.f32 1.0, %v575
    %v577 = vmul.f32 %v576, 2.0
    %v578 = vsub.f32 %v577, 1.0
    %v579 = vmul.f32 %v576, %v423
    %581 = vrot.lane.b32.xlu0 %v578, 88
    %v582 = vpop.permute.xlu0 %581
    %v584 = vmul.f32 %v576, %v582
    %586 = vrot.lane.b32.xlu0 %v584, 20
    %v587 = vpop.permute.xlu0 %586
    %v589 = vadd.f32 %v579, %v587
    %v590 = vtanh.pop %v589
    %592 = vrot.lane.b32.xlu0 %v590, 40
    %v593 = vpop.permute.xlu0 %592
    %v595 = vmul.f32 %v576, %v593
    %v596 = vpack.c.bf16 %v595, %v595
    %v597 = vld [vmem:[#allocation2] sm:$0x3]
    %s598 = scalar_lea.vmem %s4, 72
    %v599 = vld [vmem:[%s598] sm:$0xff]
    %v600 = vld [vmem:[%s598 + $0x8] sm:$0xff]
    %v601 = vld [vmem:[%s598 + $0x10] sm:$0xf]
    %603 = vrot.lane.b32.xlu0 %v595, 68
    %v604 = vpop.permute.xlu0 %603
    %v605 = vsel %vm92, %v604, 0
    %v608 = vsel %vm95, %v601, 0
    %610 = vmatprep.subr.mxu0 0.0
    %611 = vmatpush1.msra.mxu0 %v599
    %612 = vmatprep.subr.mxu0 0.0
    %613 = vmatpush1.msra.mxu0 %v600
    %614 = vmatprep.subr.mxu0 0.0
    %615 = vmatpush1.msra.mxu0 %v608
    %616 = vmatprep.subr.mxu0 0.0
    %617 = vmatpush1.msra.mxu0 0.0
    %618 = vmatprep.subr.mxu0 0.0
    %619 = vmatpush1.msra.mxu0 0.0
    %620 = vmatprep.subr.mxu0 0.0
    %621 = vmatpush1.msra.mxu0 0.0
    %622 = vmatprep.subr.mxu0 0.0
    %623 = vmatpush1.msra.mxu0 0.0
    %624 = vmatprep.subr.mxu0 0.0
    %625 = vmatpush1.msra.mxu0 0.0
    %626 = vmatprep.subr.mxu0 0.0
    %627 = vmatpush1.msra.mxu0 0.0
    %628 = vmatprep.subr.mxu0 0.0
    %629 = vmatpush1.msra.mxu0 0.0
    %630 = vmatprep.subr.mxu0 0.0
    %631 = vmatpush1.msra.mxu0 0.0
    %632 = vmatprep.subr.mxu0 0.0
    %633 = vmatpush1.msra.mxu0 0.0
    %634 = vmatprep.subr.mxu0 0.0
    %635 = vmatpush1.msra.mxu0 0.0
    %636 = vmatprep.subr.mxu0 0.0
    %637 = vmatpush1.msra.mxu0 0.0
    %638 = vmatprep.subr.mxu0 0.0
    %639 = vmatpush1.msra.mxu0 0.0
    %640 = vmatprep.subr.mxu0 0.0
    %641 = vmatpush1.msra.mxu0 0.0
    %642 = vmatprep.subr.mxu0 0.0
    %643 = vmatpush1.msra.mxu0 0.0
    %644 = vmatprep.subr.mxu0 0.0
    %645 = vmatpush1.msra.mxu0 0.0
    %646 = vmatprep.subr.mxu0 0.0
    %647 = vmatpush1.msra.mxu0 0.0
    %648 = vmatprep.subr.mxu0 0.0
    %649 = vmatpush1.msra.mxu0 0.0
    %650 = vmatprep.subr.mxu0 0.0
    %651 = vmatpush1.msra.mxu0 0.0
    %652 = vmatprep.subr.mxu0 0.0
    %653 = vmatpush1.msra.mxu0 0.0
    %654 = vmatprep.subr.mxu0 0.0
    %655 = vmatpush1.msra.mxu0 0.0
    %656 = vmatprep.subr.mxu0 0.0
    %657 = vmatpush1.msra.mxu0 0.0
    %658 = vmatprep.subr.mxu0 0.0
    %659 = vmatpush1.msra.mxu0 0.0
    %660 = vmatprep.subr.mxu0 0.0
    %661 = vmatpush1.msra.mxu0 0.0
    %662 = vmatprep.subr.mxu0 0.0
    %663 = vmatpush1.msra.mxu0 0.0
    %664 = vmatprep.subr.mxu0 0.0
    %665 = vmatpush1.msra.mxu0 0.0
    %666 = vmatprep.subr.mxu0 0.0
    %667 = vmatpush1.msra.mxu0 0.0
    %668 = vmatprep.subr.mxu0 0.0
    %669 = vmatpush1.msra.mxu0 0.0
    %670 = vmatprep.subr.mxu0 0.0
    %671 = vmatpush1.msra.mxu0 0.0
    %672 = vmatprep.subr.mxu0 0.0
    %673 = vmatpush1.msra.mxu0 0.0
    %674 = vmatprep.mubr.f32.mxu0 0.0
    %675 = vmatmul.mubr.f32.gmra.mrb[0].mxu0 %v605
    %v676 = vpop.f32.mrb[0].mxu0
    %v677 = vadd.f32 0.0, %v676
    %v678 = vpop.f32.mrb[0].mxu0
    %679 = vdwg.mxu0
    %v680 = vadd.f32 %v597, %v677
    %681 = vst.msk [vmem:[#allocation2] sm:$0x3] %vm32, %v680
    %v682 = vld [vmem:[%s0] sm:$0x3]
    %684 = vset.pattern.permute.xlu0 4
    %685 = vperm.xlu0 %684, %v682
    %v686 = vpop.permute.xlu0 %685
    %v688 = vmul.f32 %v686, %v49
    %v689 = vadd.f32 %v688, %v56
    %691 = vrot.lane.b32.xlu0 %v596, 68
    %v692 = vpop.permute.xlu0 %691
    %v694 = vsel %vm92, %v692, 0
    %696 = vmatprep.subr.bf16.mxu0 0
    %697 = vmatpush1.bf16.msra.mxu0 %v188
    %698 = vmatprep.subr.bf16.mxu0 0
    %699 = vmatpush1.bf16.msra.mxu0 %v196
    %700 = vmatprep.subr.bf16.mxu0 0
    %701 = vmatpush1.bf16.msra.mxu0 0
    %702 = vmatprep.subr.bf16.mxu0 0
    %703 = vmatpush1.bf16.msra.mxu0 0
    %704 = vmatprep.subr.bf16.mxu0 0
    %705 = vmatpush1.bf16.msra.mxu0 0
    %706 = vmatprep.subr.bf16.mxu0 0
    %707 = vmatpush1.bf16.msra.mxu0 0
    %708 = vmatprep.subr.bf16.mxu0 0
    %709 = vmatpush1.bf16.msra.mxu0 0
    %710 = vmatprep.subr.bf16.mxu0 0
    %711 = vmatpush1.bf16.msra.mxu0 0
    %712 = vmatprep.subr.bf16.mxu0 0
    %713 = vmatpush1.bf16.msra.mxu0 0
    %714 = vmatprep.subr.bf16.mxu0 0
    %715 = vmatpush1.bf16.msra.mxu0 0
    %716 = vmatprep.subr.bf16.mxu0 0
    %717 = vmatpush1.bf16.msra.mxu0 0
    %718 = vmatprep.subr.bf16.mxu0 0
    %719 = vmatpush1.bf16.msra.mxu0 0
    %720 = vmatprep.subr.bf16.mxu0 0
    %721 = vmatpush1.bf16.msra.mxu0 0
    %722 = vmatprep.subr.bf16.mxu0 0
    %723 = vmatpush1.bf16.msra.mxu0 0
    %724 = vmatprep.subr.bf16.mxu0 0
    %725 = vmatpush1.bf16.msra.mxu0 0
    %726 = vmatprep.subr.bf16.mxu0 0
    %727 = vmatpush1.bf16.msra.mxu0 0
    %728 = vmatprep.mubr.bf16.mxu0 0
    %729 = vmatmul.mubr.bf16.gmra.mrb[0].mxu0 %v694
    %v730 = vpop.f32.mrb[0].mxu0
    %v731 = vadd.f32 0.0, %v730
    %v732 = vpop.f32.mrb[0].mxu0
    %v733 = vpop.f32.mrb[0].mxu0
    %v734 = vpop.f32.mrb[0].mxu0
    %735 = vdwg.mxu0
    %v736 = vadd.f32 %v689, %v731
    %v737 = vxor.u32 %v736, 2147483648
    %v738 = vmul.f32 %v737, 1.442695
    %v739 = vpow.pop %v738
    %v740 = vadd.f32 %v739, 1.0
    %v741 = vrcp.pop %v740
    %v742 = vmul.f32 1.0, %v741
    %v743 = vmul.f32 %v742, 2.0
    %v744 = vsub.f32 %v743, 1.0
    %v745 = vmul.f32 %v742, %v589
    %747 = vrot.lane.b32.xlu0 %v744, 88
    %v748 = vpop.permute.xlu0 %747
    %v750 = vmul.f32 %v742, %v748
    %752 = vrot.lane.b32.xlu0 %v750, 20
    %v753 = vpop.permute.xlu0 %752
    %v755 = vadd.f32 %v745, %v753
    %v756 = vtanh.pop %v755
    %758 = vrot.lane.b32.xlu0 %v756, 40
    %v759 = vpop.permute.xlu0 %758
    %v761 = vmul.f32 %v742, %v759
    %v762 = vpack.c.bf16 %v761, %v761
    %v763 = vld [vmem:[#allocation2] sm:$0x3]
    %s764 = scalar_lea.vmem %s4, 96
    %v765 = vld [vmem:[%s764] sm:$0xff]
    %v766 = vld [vmem:[%s764 + $0x8] sm:$0xff]
    %v767 = vld [vmem:[%s764 + $0x10] sm:$0xf]
    %769 = vrot.lane.b32.xlu0 %v761, 68
    %v770 = vpop.permute.xlu0 %769
    %v771 = vsel %vm92, %v770, 0
    %v774 = vsel %vm95, %v767, 0
    %776 = vmatprep.subr.mxu0 0.0
    %777 = vmatpush1.msra.mxu0 %v765
    %778 = vmatprep.subr.mxu0 0.0
    %779 = vmatpush1.msra.mxu0 %v766
    %780 = vmatprep.subr.mxu0 0.0
    %781 = vmatpush1.msra.mxu0 %v774
    %782 = vmatprep.subr.mxu0 0.0
    %783 = vmatpush1.msra.mxu0 0.0
    %784 = vmatprep.subr.mxu0 0.0
    %785 = vmatpush1.msra.mxu0 0.0
    %786 = vmatprep.subr.mxu0 0.0
    %787 = vmatpush1.msra.mxu0 0.0
    %788 = vmatprep.subr.mxu0 0.0
    %789 = vmatpush1.msra.mxu0 0.0
    %790 = vmatprep.subr.mxu0 0.0
    %791 = vmatpush1.msra.mxu0 0.0
    %792 = vmatprep.subr.mxu0 0.0
    %793 = vmatpush1.msra.mxu0 0.0
    %794 = vmatprep.subr.mxu0 0.0
    %795 = vmatpush1.msra.mxu0 0.0
    %796 = vmatprep.subr.mxu0 0.0
    %797 = vmatpush1.msra.mxu0 0.0
    %798 = vmatprep.subr.mxu0 0.0
    %799 = vmatpush1.msra.mxu0 0.0
    %800 = vmatprep.subr.mxu0 0.0
    %801 = vmatpush1.msra.mxu0 0.0
    %802 = vmatprep.subr.mxu0 0.0
    %803 = vmatpush1.msra.mxu0 0.0
    %804 = vmatprep.subr.mxu0 0.0
    %805 = vmatpush1.msra.mxu0 0.0
    %806 = vmatprep.subr.mxu0 0.0
    %807 = vmatpush1.msra.mxu0 0.0
    %808 = vmatprep.subr.mxu0 0.0
    %809 = vmatpush1.msra.mxu0 0.0
    %810 = vmatprep.subr.mxu0 0.0
    %811 = vmatpush1.msra.mxu0 0.0
    %812 = vmatprep.subr.mxu0 0.0
    %813 = vmatpush1.msra.mxu0 0.0
    %814 = vmatprep.subr.mxu0 0.0
    %815 = vmatpush1.msra.mxu0 0.0
    %816 = vmatprep.subr.mxu0 0.0
    %817 = vmatpush1.msra.mxu0 0.0
    %818 = vmatprep.subr.mxu0 0.0
    %819 = vmatpush1.msra.mxu0 0.0
    %820 = vmatprep.subr.mxu0 0.0
    %821 = vmatpush1.msra.mxu0 0.0
    %822 = vmatprep.subr.mxu0 0.0
    %823 = vmatpush1.msra.mxu0 0.0
    %824 = vmatprep.subr.mxu0 0.0
    %825 = vmatpush1.msra.mxu0 0.0
    %826 = vmatprep.subr.mxu0 0.0
    %827 = vmatpush1.msra.mxu0 0.0
    %828 = vmatprep.subr.mxu0 0.0
    %829 = vmatpush1.msra.mxu0 0.0
    %830 = vmatprep.subr.mxu0 0.0
    %831 = vmatpush1.msra.mxu0 0.0
    %832 = vmatprep.subr.mxu0 0.0
    %833 = vmatpush1.msra.mxu0 0.0
    %834 = vmatprep.subr.mxu0 0.0
    %835 = vmatpush1.msra.mxu0 0.0
    %836 = vmatprep.subr.mxu0 0.0
    %837 = vmatpush1.msra.mxu0 0.0
    %838 = vmatprep.subr.mxu0 0.0
    %839 = vmatpush1.msra.mxu0 0.0
    %840 = vmatprep.mubr.f32.mxu0 0.0
    %841 = vmatmul.mubr.f32.gmra.mrb[0].mxu0 %v771
    %v842 = vpop.f32.mrb[0].mxu0
    %v843 = vadd.f32 0.0, %v842
    %v844 = vpop.f32.mrb[0].mxu0
    %845 = vdwg.mxu0
    %v846 = vadd.f32 %v763, %v843
    %847 = vst.msk [vmem:[#allocation2] sm:$0x3] %vm32, %v846
    %v848 = vld [vmem:[%s0] sm:$0x3]
    %850 = vset.pattern.permute.xlu0 5
    %851 = vperm.xlu0 %850, %v848
    %v852 = vpop.permute.xlu0 %851
    %v854 = vmul.f32 %v852, %v49
    %v855 = vadd.f32 %v854, %v56
    %857 = vrot.lane.b32.xlu0 %v762, 68
    %v858 = vpop.permute.xlu0 %857
    %v860 = vsel %vm92, %v858, 0
    %862 = vmatprep.subr.bf16.mxu0 0
    %863 = vmatpush1.bf16.msra.mxu0 %v188
    %864 = vmatprep.subr.bf16.mxu0 0
    %865 = vmatpush1.bf16.msra.mxu0 %v196
    %866 = vmatprep.subr.bf16.mxu0 0
    %867 = vmatpush1.bf16.msra.mxu0 0
    %868 = vmatprep.subr.bf16.mxu0 0
    %869 = vmatpush1.bf16.msra.mxu0 0
    %870 = vmatprep.subr.bf16.mxu0 0
    %871 = vmatpush1.bf16.msra.mxu0 0
    %872 = vmatprep.subr.bf16.mxu0 0
    %873 = vmatpush1.bf16.msra.mxu0 0
    %874 = vmatprep.subr.bf16.mxu0 0
    %875 = vmatpush1.bf16.msra.mxu0 0
    %876 = vmatprep.subr.bf16.mxu0 0
    %877 = vmatpush1.bf16.msra.mxu0 0
    %878 = vmatprep.subr.bf16.mxu0 0
    %879 = vmatpush1.bf16.msra.mxu0 0
    %880 = vmatprep.subr.bf16.mxu0 0
    %881 = vmatpush1.bf16.msra.mxu0 0
    %882 = vmatprep.subr.bf16.mxu0 0
    %883 = vmatpush1.bf16.msra.mxu0 0
    %884 = vmatprep.subr.bf16.mxu0 0
    %885 = vmatpush1.bf16.msra.mxu0 0
    %886 = vmatprep.subr.bf16.mxu0 0
    %887 = vmatpush1.bf16.msra.mxu0 0
    %888 = vmatprep.subr.bf16.mxu0 0
    %889 = vmatpush1.bf16.msra.mxu0 0
    %890 = vmatprep.subr.bf16.mxu0 0
    %891 = vmatpush1.bf16.msra.mxu0 0
    %892 = vmatprep.subr.bf16.mxu0 0
    %893 = vmatpush1.bf16.msra.mxu0 0
    %894 = vmatprep.mubr.bf16.mxu0 0
    %895 = vmatmul.mubr.bf16.gmra.mrb[0].mxu0 %v860
    %v896 = vpop.f32.mrb[0].mxu0
    %v897 = vadd.f32 0.0, %v896
    %v898 = vpop.f32.mrb[0].mxu0
    %v899 = vpop.f32.mrb[0].mxu0
    %v900 = vpop.f32.mrb[0].mxu0
    %901 = vdwg.mxu0
    %v902 = vadd.f32 %v855, %v897
    %v903 = vxor.u32 %v902, 2147483648
    %v904 = vmul.f32 %v903, 1.442695
    %v905 = vpow.pop %v904
    %v906 = vadd.f32 %v905, 1.0
    %v907 = vrcp.pop %v906
    %v908 = vmul.f32 1.0, %v907
    %v909 = vmul.f32 %v908, 2.0
    %v910 = vsub.f32 %v909, 1.0
    %v911 = vmul.f32 %v908, %v755
    %913 = vrot.lane.b32.xlu0 %v910, 88
    %v914 = vpop.permute.xlu0 %913
    %v916 = vmul.f32 %v908, %v914
    %918 = vrot.lane.b32.xlu0 %v916, 20
    %v919 = vpop.permute.xlu0 %918
    %v921 = vadd.f32 %v911, %v919
    %v922 = vtanh.pop %v921
    %924 = vrot.lane.b32.xlu0 %v922, 40
    %v925 = vpop.permute.xlu0 %924
    %v927 = vmul.f32 %v908, %v925
    %v928 = vpack.c.bf16 %v927, %v927
    %v929 = vld [vmem:[#allocation2] sm:$0x3]
    %s930 = scalar_lea.vmem %s4, 120
    %v931 = vld [vmem:[%s930] sm:$0xff]
    %v932 = vld [vmem:[%s930 + $0x8] sm:$0xff]
    %v933 = vld [vmem:[%s930 + $0x10] sm:$0xf]
    %935 = vrot.lane.b32.xlu0 %v927, 68
    %v936 = vpop.permute.xlu0 %935
    %v937 = vsel %vm92, %v936, 0
    %v940 = vsel %vm95, %v933, 0
    %942 = vmatprep.subr.mxu0 0.0
    %943 = vmatpush1.msra.mxu0 %v931
    %944 = vmatprep.subr.mxu0 0.0
    %945 = vmatpush1.msra.mxu0 %v932
    %946 = vmatprep.subr.mxu0 0.0
    %947 = vmatpush1.msra.mxu0 %v940
    %948 = vmatprep.subr.mxu0 0.0
    %949 = vmatpush1.msra.mxu0 0.0
    %950 = vmatprep.subr.mxu0 0.0
    %951 = vmatpush1.msra.mxu0 0.0
    %952 = vmatprep.subr.mxu0 0.0
    %953 = vmatpush1.msra.mxu0 0.0
    %954 = vmatprep.subr.mxu0 0.0
    %955 = vmatpush1.msra.mxu0 0.0
    %956 = vmatprep.subr.mxu0 0.0
    %957 = vmatpush1.msra.mxu0 0.0
    %958 = vmatprep.subr.mxu0 0.0
    %959 = vmatpush1.msra.mxu0 0.0
    %960 = vmatprep.subr.mxu0 0.0
    %961 = vmatpush1.msra.mxu0 0.0
    %962 = vmatprep.subr.mxu0 0.0
    %963 = vmatpush1.msra.mxu0 0.0
    %964 = vmatprep.subr.mxu0 0.0
    %965 = vmatpush1.msra.mxu0 0.0
    %966 = vmatprep.subr.mxu0 0.0
    %967 = vmatpush1.msra.mxu0 0.0
    %968 = vmatprep.subr.mxu0 0.0
    %969 = vmatpush1.msra.mxu0 0.0
    %970 = vmatprep.subr.mxu0 0.0
    %971 = vmatpush1.msra.mxu0 0.0
    %972 = vmatprep.subr.mxu0 0.0
    %973 = vmatpush1.msra.mxu0 0.0
    %974 = vmatprep.subr.mxu0 0.0
    %975 = vmatpush1.msra.mxu0 0.0
    %976 = vmatprep.subr.mxu0 0.0
    %977 = vmatpush1.msra.mxu0 0.0
    %978 = vmatprep.subr.mxu0 0.0
    %979 = vmatpush1.msra.mxu0 0.0
    %980 = vmatprep.subr.mxu0 0.0
    %981 = vmatpush1.msra.mxu0 0.0
    %982 = vmatprep.subr.mxu0 0.0
    %983 = vmatpush1.msra.mxu0 0.0
    %984 = vmatprep.subr.mxu0 0.0
    %985 = vmatpush1.msra.mxu0 0.0
    %986 = vmatprep.subr.mxu0 0.0
    %987 = vmatpush1.msra.mxu0 0.0
    %988 = vmatprep.subr.mxu0 0.0
    %989 = vmatpush1.msra.mxu0 0.0
    %990 = vmatprep.subr.mxu0 0.0
    %991 = vmatpush1.msra.mxu0 0.0
    %992 = vmatprep.subr.mxu0 0.0
    %993 = vmatpush1.msra.mxu0 0.0
    %994 = vmatprep.subr.mxu0 0.0
    %995 = vmatpush1.msra.mxu0 0.0
    %996 = vmatprep.subr.mxu0 0.0
    %997 = vmatpush1.msra.mxu0 0.0
    %998 = vmatprep.subr.mxu0 0.0
    %999 = vmatpush1.msra.mxu0 0.0
    %1000 = vmatprep.subr.mxu0 0.0
    %1001 = vmatpush1.msra.mxu0 0.0
    %1002 = vmatprep.subr.mxu0 0.0
    %1003 = vmatpush1.msra.mxu0 0.0
    %1004 = vmatprep.subr.mxu0 0.0
    %1005 = vmatpush1.msra.mxu0 0.0
    %1006 = vmatprep.mubr.f32.mxu0 0.0
    %1007 = vmatmul.mubr.f32.gmra.mrb[0].mxu0 %v937
    %v1008 = vpop.f32.mrb[0].mxu0
    %v1009 = vadd.f32 0.0, %v1008
    %v1010 = vpop.f32.mrb[0].mxu0
    %1011 = vdwg.mxu0
    %v1012 = vadd.f32 %v929, %v1009
    %1013 = vst.msk [vmem:[#allocation2] sm:$0x3] %vm32, %v1012
    %v1014 = vld [vmem:[%s0] sm:$0x3]
    %1016 = vset.pattern.permute.xlu0 6
    %1017 = vperm.xlu0 %1016, %v1014
    %v1018 = vpop.permute.xlu0 %1017
    %v1020 = vmul.f32 %v1018, %v49
    %v1021 = vadd.f32 %v1020, %v56
    %1023 = vrot.lane.b32.xlu0 %v928, 68
    %v1024 = vpop.permute.xlu0 %1023
    %v1026 = vsel %vm92, %v1024, 0
    %1028 = vmatprep.subr.bf16.mxu0 0
    %1029 = vmatpush1.bf16.msra.mxu0 %v188
    %1030 = vmatprep.subr.bf16.mxu0 0
    %1031 = vmatpush1.bf16.msra.mxu0 %v196
    %1032 = vmatprep.subr.bf16.mxu0 0
    %1033 = vmatpush1.bf16.msra.mxu0 0
    %1034 = vmatprep.subr.bf16.mxu0 0
    %1035 = vmatpush1.bf16.msra.mxu0 0
    %1036 = vmatprep.subr.bf16.mxu0 0
    %1037 = vmatpush1.bf16.msra.mxu0 0
    %1038 = vmatprep.subr.bf16.mxu0 0
    %1039 = vmatpush1.bf16.msra.mxu0 0
    %1040 = vmatprep.subr.bf16.mxu0 0
    %1041 = vmatpush1.bf16.msra.mxu0 0
    %1042 = vmatprep.subr.bf16.mxu0 0
    %1043 = vmatpush1.bf16.msra.mxu0 0
    %1044 = vmatprep.subr.bf16.mxu0 0
    %1045 = vmatpush1.bf16.msra.mxu0 0
    %1046 = vmatprep.subr.bf16.mxu0 0
    %1047 = vmatpush1.bf16.msra.mxu0 0
    %1048 = vmatprep.subr.bf16.mxu0 0
    %1049 = vmatpush1.bf16.msra.mxu0 0
    %1050 = vmatprep.subr.bf16.mxu0 0
    %1051 = vmatpush1.bf16.msra.mxu0 0
    %1052 = vmatprep.subr.bf16.mxu0 0
    %1053 = vmatpush1.bf16.msra.mxu0 0
    %1054 = vmatprep.subr.bf16.mxu0 0
    %1055 = vmatpush1.bf16.msra.mxu0 0
    %1056 = vmatprep.subr.bf16.mxu0 0
    %1057 = vmatpush1.bf16.msra.mxu0 0
    %1058 = vmatprep.subr.bf16.mxu0 0
    %1059 = vmatpush1.bf16.msra.mxu0 0
    %1060 = vmatprep.mubr.bf16.mxu0 0
    %1061 = vmatmul.mubr.bf16.gmra.mrb[0].mxu0 %v1026
    %v1062 = vpop.f32.mrb[0].mxu0
    %v1063 = vadd.f32 0.0, %v1062
    %v1064 = vpop.f32.mrb[0].mxu0
    %v1065 = vpop.f32.mrb[0].mxu0
    %v1066 = vpop.f32.mrb[0].mxu0
    %1067 = vdwg.mxu0
    %v1068 = vadd.f32 %v1021, %v1063
    %v1069 = vxor.u32 %v1068, 2147483648
    %v1070 = vmul.f32 %v1069, 1.442695
    %v1071 = vpow.pop %v1070
    %v1072 = vadd.f32 %v1071, 1.0
    %v1073 = vrcp.pop %v1072
    %v1074 = vmul.f32 1.0, %v1073
    %v1075 = vmul.f32 %v1074, 2.0
    %v1076 = vsub.f32 %v1075, 1.0
    %v1077 = vmul.f32 %v1074, %v921
    %1079 = vrot.lane.b32.xlu0 %v1076, 88
    %v1080 = vpop.permute.xlu0 %1079
    %v1082 = vmul.f32 %v1074, %v1080
    %1084 = vrot.lane.b32.xlu0 %v1082, 20
    %v1085 = vpop.permute.xlu0 %1084
    %v1087 = vadd.f32 %v1077, %v1085
    %v1088 = vtanh.pop %v1087
    %1090 = vrot.lane.b32.xlu0 %v1088, 40
    %v1091 = vpop.permute.xlu0 %1090
    %v1093 = vmul.f32 %v1074, %v1091
    %v1094 = vpack.c.bf16 %v1093, %v1093
    %v1095 = vld [vmem:[#allocation2] sm:$0x3]
    %s1096 = scalar_lea.vmem %s4, 144
    %v1097 = vld [vmem:[%s1096] sm:$0xff]
    %v1098 = vld [vmem:[%s1096 + $0x8] sm:$0xff]
    %v1099 = vld [vmem:[%s1096 + $0x10] sm:$0xf]
    %1101 = vrot.lane.b32.xlu0 %v1093, 68
    %v1102 = vpop.permute.xlu0 %1101
    %v1103 = vsel %vm92, %v1102, 0
    %v1106 = vsel %vm95, %v1099, 0
    %1108 = vmatprep.subr.mxu0 0.0
    %1109 = vmatpush1.msra.mxu0 %v1097
    %1110 = vmatprep.subr.mxu0 0.0
    %1111 = vmatpush1.msra.mxu0 %v1098
    %1112 = vmatprep.subr.mxu0 0.0
    %1113 = vmatpush1.msra.mxu0 %v1106
    %1114 = vmatprep.subr.mxu0 0.0
    %1115 = vmatpush1.msra.mxu0 0.0
    %1116 = vmatprep.subr.mxu0 0.0
    %1117 = vmatpush1.msra.mxu0 0.0
    %1118 = vmatprep.subr.mxu0 0.0
    %1119 = vmatpush1.msra.mxu0 0.0
    %1120 = vmatprep.subr.mxu0 0.0
    %1121 = vmatpush1.msra.mxu0 0.0
    %1122 = vmatprep.subr.mxu0 0.0
    %1123 = vmatpush1.msra.mxu0 0.0
    %1124 = vmatprep.subr.mxu0 0.0
    %1125 = vmatpush1.msra.mxu0 0.0
    %1126 = vmatprep.subr.mxu0 0.0
    %1127 = vmatpush1.msra.mxu0 0.0
    %1128 = vmatprep.subr.mxu0 0.0
    %1129 = vmatpush1.msra.mxu0 0.0
    %1130 = vmatprep.subr.mxu0 0.0
    %1131 = vmatpush1.msra.mxu0 0.0
    %1132 = vmatprep.subr.mxu0 0.0
    %1133 = vmatpush1.msra.mxu0 0.0
    %1134 = vmatprep.subr.mxu0 0.0
    %1135 = vmatpush1.msra.mxu0 0.0
    %1136 = vmatprep.subr.mxu0 0.0
    %1137 = vmatpush1.msra.mxu0 0.0
    %1138 = vmatprep.subr.mxu0 0.0
    %1139 = vmatpush1.msra.mxu0 0.0
    %1140 = vmatprep.subr.mxu0 0.0
    %1141 = vmatpush1.msra.mxu0 0.0
    %1142 = vmatprep.subr.mxu0 0.0
    %1143 = vmatpush1.msra.mxu0 0.0
    %1144 = vmatprep.subr.mxu0 0.0
    %1145 = vmatpush1.msra.mxu0 0.0
    %1146 = vmatprep.subr.mxu0 0.0
    %1147 = vmatpush1.msra.mxu0 0.0
    %1148 = vmatprep.subr.mxu0 0.0
    %1149 = vmatpush1.msra.mxu0 0.0
    %1150 = vmatprep.subr.mxu0 0.0
    %1151 = vmatpush1.msra.mxu0 0.0
    %1152 = vmatprep.subr.mxu0 0.0
    %1153 = vmatpush1.msra.mxu0 0.0
    %1154 = vmatprep.subr.mxu0 0.0
    %1155 = vmatpush1.msra.mxu0 0.0
    %1156 = vmatprep.subr.mxu0 0.0
    %1157 = vmatpush1.msra.mxu0 0.0
    %1158 = vmatprep.subr.mxu0 0.0
    %1159 = vmatpush1.msra.mxu0 0.0
    %1160 = vmatprep.subr.mxu0 0.0
    %1161 = vmatpush1.msra.mxu0 0.0
    %1162 = vmatprep.subr.mxu0 0.0
    %1163 = vmatpush1.msra.mxu0 0.0
    %1164 = vmatprep.subr.mxu0 0.0
    %1165 = vmatpush1.msra.mxu0 0.0
    %1166 = vmatprep.subr.mxu0 0.0
    %1167 = vmatpush1.msra.mxu0 0.0
    %1168 = vmatprep.subr.mxu0 0.0
    %1169 = vmatpush1.msra.mxu0 0.0
    %1170 = vmatprep.subr.mxu0 0.0
    %1171 = vmatpush1.msra.mxu0 0.0
    %1172 = vmatprep.mubr.f32.mxu0 0.0
    %1173 = vmatmul.mubr.f32.gmra.mrb[0].mxu0 %v1103
    %v1174 = vpop.f32.mrb[0].mxu0
    %v1175 = vadd.f32 0.0, %v1174
    %v1176 = vpop.f32.mrb[0].mxu0
    %1177 = vdwg.mxu0
    %v1178 = vadd.f32 %v1095, %v1175
    %1179 = vst.msk [vmem:[#allocation2] sm:$0x3] %vm32, %v1178
    %v1180 = vld [vmem:[%s0] sm:$0x3]
    %1182 = vset.pattern.permute.xlu0 7
    %1183 = vperm.xlu0 %1182, %v1180
    %v1184 = vpop.permute.xlu0 %1183
    %v1186 = vmul.f32 %v1184, %v49
    %v1187 = vadd.f32 %v1186, %v56
    %1189 = vrot.lane.b32.xlu0 %v1094, 68
    %v1190 = vpop.permute.xlu0 %1189
    %v1192 = vsel %vm92, %v1190, 0
    %1194 = vmatprep.subr.bf16.mxu0 0
    %1195 = vmatpush1.bf16.msra.mxu0 %v188
    %1196 = vmatprep.subr.bf16.mxu0 0
    %1197 = vmatpush1.bf16.msra.mxu0 %v196
    %1198 = vmatprep.subr.bf16.mxu0 0
    %1199 = vmatpush1.bf16.msra.mxu0 0
    %1200 = vmatprep.subr.bf16.mxu0 0
    %1201 = vmatpush1.bf16.msra.mxu0 0
    %1202 = vmatprep.subr.bf16.mxu0 0
    %1203 = vmatpush1.bf16.msra.mxu0 0
    %1204 = vmatprep.subr.bf16.mxu0 0
    %1205 = vmatpush1.bf16.msra.mxu0 0
    %1206 = vmatprep.subr.bf16.mxu0 0
    %1207 = vmatpush1.bf16.msra.mxu0 0
    %1208 = vmatprep.subr.bf16.mxu0 0
    %1209 = vmatpush1.bf16.msra.mxu0 0
    %1210 = vmatprep.subr.bf16.mxu0 0
    %1211 = vmatpush1.bf16.msra.mxu0 0
    %1212 = vmatprep.subr.bf16.mxu0 0
    %1213 = vmatpush1.bf16.msra.mxu0 0
    %1214 = vmatprep.subr.bf16.mxu0 0
    %1215 = vmatpush1.bf16.msra.mxu0 0
    %1216 = vmatprep.subr.bf16.mxu0 0
    %1217 = vmatpush1.bf16.msra.mxu0 0
    %1218 = vmatprep.subr.bf16.mxu0 0
    %1219 = vmatpush1.bf16.msra.mxu0 0
    %1220 = vmatprep.subr.bf16.mxu0 0
    %1221 = vmatpush1.bf16.msra.mxu0 0
    %1222 = vmatprep.subr.bf16.mxu0 0
    %1223 = vmatpush1.bf16.msra.mxu0 0
    %1224 = vmatprep.subr.bf16.mxu0 0
    %1225 = vmatpush1.bf16.msra.mxu0 0
    %1226 = vmatprep.mubr.bf16.mxu0 0
    %1227 = vmatmul.mubr.bf16.gmra.mrb[0].mxu0 %v1192
    %v1228 = vpop.f32.mrb[0].mxu0
    %v1229 = vadd.f32 0.0, %v1228
    %v1230 = vpop.f32.mrb[0].mxu0
    %v1231 = vpop.f32.mrb[0].mxu0
    %v1232 = vpop.f32.mrb[0].mxu0
    %1233 = vdwg.mxu0
    %v1234 = vadd.f32 %v1187, %v1229
    %v1235 = vxor.u32 %v1234, 2147483648
    %v1236 = vmul.f32 %v1235, 1.442695
    %v1237 = vpow.pop %v1236
    %v1238 = vadd.f32 %v1237, 1.0
    %v1239 = vrcp.pop %v1238
    %v1240 = vmul.f32 1.0, %v1239
    %v1241 = vmul.f32 %v1240, 2.0
    %v1242 = vsub.f32 %v1241, 1.0
    %v1243 = vmul.f32 %v1240, %v1087
    %1245 = vrot.lane.b32.xlu0 %v1242, 88
    %v1246 = vpop.permute.xlu0 %1245
    %v1248 = vmul.f32 %v1240, %v1246
    %1250 = vrot.lane.b32.xlu0 %v1248, 20
    %v1251 = vpop.permute.xlu0 %1250
    %v1253 = vadd.f32 %v1243, %v1251
    %v1254 = vtanh.pop %v1253
    %1256 = vrot.lane.b32.xlu0 %v1254, 40
    %v1257 = vpop.permute.xlu0 %1256
    %v1259 = vmul.f32 %v1240, %v1257
    %v1260 = vpack.c.bf16 %v1259, %v1259
    %v1261 = vld [vmem:[#allocation2] sm:$0x3]
    %s1262 = scalar_lea.vmem %s4, 168
    %v1263 = vld [vmem:[%s1262] sm:$0xff]
    %v1264 = vld [vmem:[%s1262 + $0x8] sm:$0xff]
    %v1265 = vld [vmem:[%s1262 + $0x10] sm:$0xf]
    %1267 = vrot.lane.b32.xlu0 %v1259, 68
    %v1268 = vpop.permute.xlu0 %1267
    %v1269 = vsel %vm92, %v1268, 0
    %v1272 = vsel %vm95, %v1265, 0
    %1274 = vmatprep.subr.mxu0 0.0
    %1275 = vmatpush1.msra.mxu0 %v1263
    %1276 = vmatprep.subr.mxu0 0.0
    %1277 = vmatpush1.msra.mxu0 %v1264
    %1278 = vmatprep.subr.mxu0 0.0
    %1279 = vmatpush1.msra.mxu0 %v1272
    %1280 = vmatprep.subr.mxu0 0.0
    %1281 = vmatpush1.msra.mxu0 0.0
    %1282 = vmatprep.subr.mxu0 0.0
    %1283 = vmatpush1.msra.mxu0 0.0
    %1284 = vmatprep.subr.mxu0 0.0
    %1285 = vmatpush1.msra.mxu0 0.0
    %1286 = vmatprep.subr.mxu0 0.0
    %1287 = vmatpush1.msra.mxu0 0.0
    %1288 = vmatprep.subr.mxu0 0.0
    %1289 = vmatpush1.msra.mxu0 0.0
    %1290 = vmatprep.subr.mxu0 0.0
    %1291 = vmatpush1.msra.mxu0 0.0
    %1292 = vmatprep.subr.mxu0 0.0
    %1293 = vmatpush1.msra.mxu0 0.0
    %1294 = vmatprep.subr.mxu0 0.0
    %1295 = vmatpush1.msra.mxu0 0.0
    %1296 = vmatprep.subr.mxu0 0.0
    %1297 = vmatpush1.msra.mxu0 0.0
    %1298 = vmatprep.subr.mxu0 0.0
    %1299 = vmatpush1.msra.mxu0 0.0
    %1300 = vmatprep.subr.mxu0 0.0
    %1301 = vmatpush1.msra.mxu0 0.0
    %1302 = vmatprep.subr.mxu0 0.0
    %1303 = vmatpush1.msra.mxu0 0.0
    %1304 = vmatprep.subr.mxu0 0.0
    %1305 = vmatpush1.msra.mxu0 0.0
    %1306 = vmatprep.subr.mxu0 0.0
    %1307 = vmatpush1.msra.mxu0 0.0
    %1308 = vmatprep.subr.mxu0 0.0
    %1309 = vmatpush1.msra.mxu0 0.0
    %1310 = vmatprep.subr.mxu0 0.0
    %1311 = vmatpush1.msra.mxu0 0.0
    %1312 = vmatprep.subr.mxu0 0.0
    %1313 = vmatpush1.msra.mxu0 0.0
    %1314 = vmatprep.subr.mxu0 0.0
    %1315 = vmatpush1.msra.mxu0 0.0
    %1316 = vmatprep.subr.mxu0 0.0
    %1317 = vmatpush1.msra.mxu0 0.0
    %1318 = vmatprep.subr.mxu0 0.0
    %1319 = vmatpush1.msra.mxu0 0.0
    %1320 = vmatprep.subr.mxu0 0.0
    %1321 = vmatpush1.msra.mxu0 0.0
    %1322 = vmatprep.subr.mxu0 0.0
    %1323 = vmatpush1.msra.mxu0 0.0
    %1324 = vmatprep.subr.mxu0 0.0
    %1325 = vmatpush1.msra.mxu0 0.0
    %1326 = vmatprep.subr.mxu0 0.0
    %1327 = vmatpush1.msra.mxu0 0.0
    %1328 = vmatprep.subr.mxu0 0.0
    %1329 = vmatpush1.msra.mxu0 0.0
    %1330 = vmatprep.subr.mxu0 0.0
    %1331 = vmatpush1.msra.mxu0 0.0
    %1332 = vmatprep.subr.mxu0 0.0
    %1333 = vmatpush1.msra.mxu0 0.0
    %1334 = vmatprep.subr.mxu0 0.0
    %1335 = vmatpush1.msra.mxu0 0.0
    %1336 = vmatprep.subr.mxu0 0.0
    %1337 = vmatpush1.msra.mxu0 0.0
    %1338 = vmatprep.mubr.f32.mxu0 0.0
    %1339 = vmatmul.mubr.f32.gmra.mrb[0].mxu0 %v1269
    %v1340 = vpop.f32.mrb[0].mxu0
    %v1341 = vadd.f32 0.0, %v1340
    %v1342 = vpop.f32.mrb[0].mxu0
    %1343 = vdwg.mxu0
    %v1344 = vadd.f32 %v1261, %v1341
    %1345 = vst.msk [vmem:[#allocation2] sm:$0x3] %vm32, %v1344
    %v1346 = vld [vmem:[%s0] sm:$0x3]
    %1348 = vset.pattern.permute.xlu0 8
    %1349 = vperm.xlu0 %1348, %v1346
    %v1350 = vpop.permute.xlu0 %1349
    %v1352 = vmul.f32 %v1350, %v49
    %v1353 = vadd.f32 %v1352, %v56
    %1355 = vrot.lane.b32.xlu0 %v1260, 68
    %v1356 = vpop.permute.xlu0 %1355
    %v1358 = vsel %vm92, %v1356, 0
    %1360 = vmatprep.subr.bf16.mxu0 0
    %1361 = vmatpush1.bf16.msra.mxu0 %v188
    %1362 = vmatprep.subr.bf16.mxu0 0
    %1363 = vmatpush1.bf16.msra.mxu0 %v196
    %1364 = vmatprep.subr.bf16.mxu0 0
    %1365 = vmatpush1.bf16.msra.mxu0 0
    %1366 = vmatprep.subr.bf16.mxu0 0
    %1367 = vmatpush1.bf16.msra.mxu0 0
    %1368 = vmatprep.subr.bf16.mxu0 0
    %1369 = vmatpush1.bf16.msra.mxu0 0
    %1370 = vmatprep.subr.bf16.mxu0 0
    %1371 = vmatpush1.bf16.msra.mxu0 0
    %1372 = vmatprep.subr.bf16.mxu0 0
    %1373 = vmatpush1.bf16.msra.mxu0 0
    %1374 = vmatprep.subr.bf16.mxu0 0
    %1375 = vmatpush1.bf16.msra.mxu0 0
    %1376 = vmatprep.subr.bf16.mxu0 0
    %1377 = vmatpush1.bf16.msra.mxu0 0
    %1378 = vmatprep.subr.bf16.mxu0 0
    %1379 = vmatpush1.bf16.msra.mxu0 0
    %1380 = vmatprep.subr.bf16.mxu0 0
    %1381 = vmatpush1.bf16.msra.mxu0 0
    %1382 = vmatprep.subr.bf16.mxu0 0
    %1383 = vmatpush1.bf16.msra.mxu0 0
    %1384 = vmatprep.subr.bf16.mxu0 0
    %1385 = vmatpush1.bf16.msra.mxu0 0
    %1386 = vmatprep.subr.bf16.mxu0 0
    %1387 = vmatpush1.bf16.msra.mxu0 0
    %1388 = vmatprep.subr.bf16.mxu0 0
    %1389 = vmatpush1.bf16.msra.mxu0 0
    %1390 = vmatprep.subr.bf16.mxu0 0
    %1391 = vmatpush1.bf16.msra.mxu0 0
    %1392 = vmatprep.mubr.bf16.mxu0 0
    %1393 = vmatmul.mubr.bf16.gmra.mrb[0].mxu0 %v1358
    %v1394 = vpop.f32.mrb[0].mxu0
    %v1395 = vadd.f32 0.0, %v1394
    %v1396 = vpop.f32.mrb[0].mxu0
    %v1397 = vpop.f32.mrb[0].mxu0
    %v1398 = vpop.f32.mrb[0].mxu0
    %1399 = vdwg.mxu0
    %v1400 = vadd.f32 %v1353, %v1395
    %v1401 = vxor.u32 %v1400, 2147483648
    %v1402 = vmul.f32 %v1401, 1.442695
    %v1403 = vpow.pop %v1402
    %v1404 = vadd.f32 %v1403, 1.0
    %v1405 = vrcp.pop %v1404
    %v1406 = vmul.f32 1.0, %v1405
    %v1407 = vmul.f32 %v1406, 2.0
    %v1408 = vsub.f32 %v1407, 1.0
    %v1409 = vmul.f32 %v1406, %v1253
    %1411 = vrot.lane.b32.xlu0 %v1408, 88
    %v1412 = vpop.permute.xlu0 %1411
    %v1414 = vmul.f32 %v1406, %v1412
    %1416 = vrot.lane.b32.xlu0 %v1414, 20
    %v1417 = vpop.permute.xlu0 %1416
    %v1419 = vadd.f32 %v1409, %v1417
    %v1420 = vtanh.pop %v1419
    %1422 = vrot.lane.b32.xlu0 %v1420, 40
    %v1423 = vpop.permute.xlu0 %1422
    %v1425 = vmul.f32 %v1406, %v1423
    %v1426 = vpack.c.bf16 %v1425, %v1425
    %v1427 = vld [vmem:[#allocation2] sm:$0x3]
    %s1428 = scalar_lea.vmem %s4, 192
    %v1429 = vld [vmem:[%s1428] sm:$0xff]
    %v1430 = vld [vmem:[%s1428 + $0x8] sm:$0xff]
    %v1431 = vld [vmem:[%s1428 + $0x10] sm:$0xf]
    %1433 = vrot.lane.b32.xlu0 %v1425, 68
    %v1434 = vpop.permute.xlu0 %1433
    %v1435 = vsel %vm92, %v1434, 0
    %v1438 = vsel %vm95, %v1431, 0
    %1440 = vmatprep.subr.mxu0 0.0
    %1441 = vmatpush1.msra.mxu0 %v1429
    %1442 = vmatprep.subr.mxu0 0.0
    %1443 = vmatpush1.msra.mxu0 %v1430
    %1444 = vmatprep.subr.mxu0 0.0
    %1445 = vmatpush1.msra.mxu0 %v1438
    %1446 = vmatprep.subr.mxu0 0.0
    %1447 = vmatpush1.msra.mxu0 0.0
    %1448 = vmatprep.subr.mxu0 0.0
    %1449 = vmatpush1.msra.mxu0 0.0
    %1450 = vmatprep.subr.mxu0 0.0
    %1451 = vmatpush1.msra.mxu0 0.0
    %1452 = vmatprep.subr.mxu0 0.0
    %1453 = vmatpush1.msra.mxu0 0.0
    %1454 = vmatprep.subr.mxu0 0.0
    %1455 = vmatpush1.msra.mxu0 0.0
    %1456 = vmatprep.subr.mxu0 0.0
    %1457 = vmatpush1.msra.mxu0 0.0
    %1458 = vmatprep.subr.mxu0 0.0
    %1459 = vmatpush1.msra.mxu0 0.0
    %1460 = vmatprep.subr.mxu0 0.0
    %1461 = vmatpush1.msra.mxu0 0.0
    %1462 = vmatprep.subr.mxu0 0.0
    %1463 = vmatpush1.msra.mxu0 0.0
    %1464 = vmatprep.subr.mxu0 0.0
    %1465 = vmatpush1.msra.mxu0 0.0
    %1466 = vmatprep.subr.mxu0 0.0
    %1467 = vmatpush1.msra.mxu0 0.0
    %1468 = vmatprep.subr.mxu0 0.0
    %1469 = vmatpush1.msra.mxu0 0.0
    %1470 = vmatprep.subr.mxu0 0.0
    %1471 = vmatpush1.msra.mxu0 0.0
    %1472 = vmatprep.subr.mxu0 0.0
    %1473 = vmatpush1.msra.mxu0 0.0
    %1474 = vmatprep.subr.mxu0 0.0
    %1475 = vmatpush1.msra.mxu0 0.0
    %1476 = vmatprep.subr.mxu0 0.0
    %1477 = vmatpush1.msra.mxu0 0.0
    %1478 = vmatprep.subr.mxu0 0.0
    %1479 = vmatpush1.msra.mxu0 0.0
    %1480 = vmatprep.subr.mxu0 0.0
    %1481 = vmatpush1.msra.mxu0 0.0
    %1482 = vmatprep.subr.mxu0 0.0
    %1483 = vmatpush1.msra.mxu0 0.0
    %1484 = vmatprep.subr.mxu0 0.0
    %1485 = vmatpush1.msra.mxu0 0.0
    %1486 = vmatprep.subr.mxu0 0.0
    %1487 = vmatpush1.msra.mxu0 0.0
    %1488 = vmatprep.subr.mxu0 0.0
    %1489 = vmatpush1.msra.mxu0 0.0
    %1490 = vmatprep.subr.mxu0 0.0
    %1491 = vmatpush1.msra.mxu0 0.0
    %1492 = vmatprep.subr.mxu0 0.0
    %1493 = vmatpush1.msra.mxu0 0.0
    %1494 = vmatprep.subr.mxu0 0.0
    %1495 = vmatpush1.msra.mxu0 0.0
    %1496 = vmatprep.subr.mxu0 0.0
    %1497 = vmatpush1.msra.mxu0 0.0
    %1498 = vmatprep.subr.mxu0 0.0
    %1499 = vmatpush1.msra.mxu0 0.0
    %1500 = vmatprep.subr.mxu0 0.0
    %1501 = vmatpush1.msra.mxu0 0.0
    %1502 = vmatprep.subr.mxu0 0.0
    %1503 = vmatpush1.msra.mxu0 0.0
    %1504 = vmatprep.mubr.f32.mxu0 0.0
    %1505 = vmatmul.mubr.f32.gmra.mrb[0].mxu0 %v1435
    %v1506 = vpop.f32.mrb[0].mxu0
    %v1507 = vadd.f32 0.0, %v1506
    %v1508 = vpop.f32.mrb[0].mxu0
    %1509 = vdwg.mxu0
    %v1510 = vadd.f32 %v1427, %v1507
    %1511 = vst.msk [vmem:[#allocation2] sm:$0x3] %vm32, %v1510
    %v1512 = vld [vmem:[%s0] sm:$0x3]
    %1514 = vset.pattern.permute.xlu0 9
    %1515 = vperm.xlu0 %1514, %v1512
    %v1516 = vpop.permute.xlu0 %1515
    %v1518 = vmul.f32 %v1516, %v49
    %v1519 = vadd.f32 %v1518, %v56
    %1521 = vrot.lane.b32.xlu0 %v1426, 68
    %v1522 = vpop.permute.xlu0 %1521
    %v1524 = vsel %vm92, %v1522, 0
    %1526 = vmatprep.subr.bf16.mxu0 0
    %1527 = vmatpush1.bf16.msra.mxu0 %v188
    %1528 = vmatprep.subr.bf16.mxu0 0
    %1529 = vmatpush1.bf16.msra.mxu0 %v196
    %1530 = vmatprep.subr.bf16.mxu0 0
    %1531 = vmatpush1.bf16.msra.mxu0 0
    %1532 = vmatprep.subr.bf16.mxu0 0
    %1533 = vmatpush1.bf16.msra.mxu0 0
    %1534 = vmatprep.subr.bf16.mxu0 0
    %1535 = vmatpush1.bf16.msra.mxu0 0
    %1536 = vmatprep.subr.bf16.mxu0 0
    %1537 = vmatpush1.bf16.msra.mxu0 0
    %1538 = vmatprep.subr.bf16.mxu0 0
    %1539 = vmatpush1.bf16.msra.mxu0 0
    %1540 = vmatprep.subr.bf16.mxu0 0
    %1541 = vmatpush1.bf16.msra.mxu0 0
    %1542 = vmatprep.subr.bf16.mxu0 0
    %1543 = vmatpush1.bf16.msra.mxu0 0
    %1544 = vmatprep.subr.bf16.mxu0 0
    %1545 = vmatpush1.bf16.msra.mxu0 0
    %1546 = vmatprep.subr.bf16.mxu0 0
    %1547 = vmatpush1.bf16.msra.mxu0 0
    %1548 = vmatprep.subr.bf16.mxu0 0
    %1549 = vmatpush1.bf16.msra.mxu0 0
    %1550 = vmatprep.subr.bf16.mxu0 0
    %1551 = vmatpush1.bf16.msra.mxu0 0
    %1552 = vmatprep.subr.bf16.mxu0 0
    %1553 = vmatpush1.bf16.msra.mxu0 0
    %1554 = vmatprep.subr.bf16.mxu0 0
    %1555 = vmatpush1.bf16.msra.mxu0 0
    %1556 = vmatprep.subr.bf16.mxu0 0
    %1557 = vmatpush1.bf16.msra.mxu0 0
    %1558 = vmatprep.mubr.bf16.mxu0 0
    %1559 = vmatmul.mubr.bf16.gmra.mrb[0].mxu0 %v1524
    %v1560 = vpop.f32.mrb[0].mxu0
    %v1561 = vadd.f32 0.0, %v1560
    %v1562 = vpop.f32.mrb[0].mxu0
    %v1563 = vpop.f32.mrb[0].mxu0
    %v1564 = vpop.f32.mrb[0].mxu0
    %1565 = vdwg.mxu0
    %v1566 = vadd.f32 %v1519, %v1561
    %v1567 = vxor.u32 %v1566, 2147483648
    %v1568 = vmul.f32 %v1567, 1.442695
    %v1569 = vpow.pop %v1568
    %v1570 = vadd.f32 %v1569, 1.0
    %v1571 = vrcp.pop %v1570
    %v1572 = vmul.f32 1.0, %v1571
    %v1573 = vmul.f32 %v1572, 2.0
    %v1574 = vsub.f32 %v1573, 1.0
    %v1575 = vmul.f32 %v1572, %v1419
    %1577 = vrot.lane.b32.xlu0 %v1574, 88
    %v1578 = vpop.permute.xlu0 %1577
    %v1580 = vmul.f32 %v1572, %v1578
    %1582 = vrot.lane.b32.xlu0 %v1580, 20
    %v1583 = vpop.permute.xlu0 %1582
    %v1585 = vadd.f32 %v1575, %v1583
    %v1586 = vtanh.pop %v1585
    %1588 = vrot.lane.b32.xlu0 %v1586, 40
    %v1589 = vpop.permute.xlu0 %1588
    %v1591 = vmul.f32 %v1572, %v1589
    %v1592 = vpack.c.bf16 %v1591, %v1591
    %v1593 = vld [vmem:[#allocation2] sm:$0x3]
    %s1594 = scalar_lea.vmem %s4, 216
    %v1595 = vld [vmem:[%s1594] sm:$0xff]
    %v1596 = vld [vmem:[%s1594 + $0x8] sm:$0xff]
    %v1597 = vld [vmem:[%s1594 + $0x10] sm:$0xf]
    %1599 = vrot.lane.b32.xlu0 %v1591, 68
    %v1600 = vpop.permute.xlu0 %1599
    %v1601 = vsel %vm92, %v1600, 0
    %v1604 = vsel %vm95, %v1597, 0
    %1606 = vmatprep.subr.mxu0 0.0
    %1607 = vmatpush1.msra.mxu0 %v1595
    %1608 = vmatprep.subr.mxu0 0.0
    %1609 = vmatpush1.msra.mxu0 %v1596
    %1610 = vmatprep.subr.mxu0 0.0
    %1611 = vmatpush1.msra.mxu0 %v1604
    %1612 = vmatprep.subr.mxu0 0.0
    %1613 = vmatpush1.msra.mxu0 0.0
    %1614 = vmatprep.subr.mxu0 0.0
    %1615 = vmatpush1.msra.mxu0 0.0
    %1616 = vmatprep.subr.mxu0 0.0
    %1617 = vmatpush1.msra.mxu0 0.0
    %1618 = vmatprep.subr.mxu0 0.0
    %1619 = vmatpush1.msra.mxu0 0.0
    %1620 = vmatprep.subr.mxu0 0.0
    %1621 = vmatpush1.msra.mxu0 0.0
    %1622 = vmatprep.subr.mxu0 0.0
    %1623 = vmatpush1.msra.mxu0 0.0
    %1624 = vmatprep.subr.mxu0 0.0
    %1625 = vmatpush1.msra.mxu0 0.0
    %1626 = vmatprep.subr.mxu0 0.0
    %1627 = vmatpush1.msra.mxu0 0.0
    %1628 = vmatprep.subr.mxu0 0.0
    %1629 = vmatpush1.msra.mxu0 0.0
    %1630 = vmatprep.subr.mxu0 0.0
    %1631 = vmatpush1.msra.mxu0 0.0
    %1632 = vmatprep.subr.mxu0 0.0
    %1633 = vmatpush1.msra.mxu0 0.0
    %1634 = vmatprep.subr.mxu0 0.0
    %1635 = vmatpush1.msra.mxu0 0.0
    %1636 = vmatprep.subr.mxu0 0.0
    %1637 = vmatpush1.msra.mxu0 0.0
    %1638 = vmatprep.subr.mxu0 0.0
    %1639 = vmatpush1.msra.mxu0 0.0
    %1640 = vmatprep.subr.mxu0 0.0
    %1641 = vmatpush1.msra.mxu0 0.0
    %1642 = vmatprep.subr.mxu0 0.0
    %1643 = vmatpush1.msra.mxu0 0.0
    %1644 = vmatprep.subr.mxu0 0.0
    %1645 = vmatpush1.msra.mxu0 0.0
    %1646 = vmatprep.subr.mxu0 0.0
    %1647 = vmatpush1.msra.mxu0 0.0
    %1648 = vmatprep.subr.mxu0 0.0
    %1649 = vmatpush1.msra.mxu0 0.0
    %1650 = vmatprep.subr.mxu0 0.0
    %1651 = vmatpush1.msra.mxu0 0.0
    %1652 = vmatprep.subr.mxu0 0.0
    %1653 = vmatpush1.msra.mxu0 0.0
    %1654 = vmatprep.subr.mxu0 0.0
    %1655 = vmatpush1.msra.mxu0 0.0
    %1656 = vmatprep.subr.mxu0 0.0
    %1657 = vmatpush1.msra.mxu0 0.0
    %1658 = vmatprep.subr.mxu0 0.0
    %1659 = vmatpush1.msra.mxu0 0.0
    %1660 = vmatprep.subr.mxu0 0.0
    %1661 = vmatpush1.msra.mxu0 0.0
    %1662 = vmatprep.subr.mxu0 0.0
    %1663 = vmatpush1.msra.mxu0 0.0
    %1664 = vmatprep.subr.mxu0 0.0
    %1665 = vmatpush1.msra.mxu0 0.0
    %1666 = vmatprep.subr.mxu0 0.0
    %1667 = vmatpush1.msra.mxu0 0.0
    %1668 = vmatprep.subr.mxu0 0.0
    %1669 = vmatpush1.msra.mxu0 0.0
    %1670 = vmatprep.mubr.f32.mxu0 0.0
    %1671 = vmatmul.mubr.f32.gmra.mrb[0].mxu0 %v1601
    %v1672 = vpop.f32.mrb[0].mxu0
    %v1673 = vadd.f32 0.0, %v1672
    %v1674 = vpop.f32.mrb[0].mxu0
    %1675 = vdwg.mxu0
    %v1676 = vadd.f32 %v1593, %v1673
    %1677 = vst.msk [vmem:[#allocation2] sm:$0x3] %vm32, %v1676
    %v1678 = vld [vmem:[%s0] sm:$0x3]
    %1680 = vset.pattern.permute.xlu0 10
    %1681 = vperm.xlu0 %1680, %v1678
    %v1682 = vpop.permute.xlu0 %1681
    %v1684 = vmul.f32 %v1682, %v49
    %v1685 = vadd.f32 %v1684, %v56
    %1687 = vrot.lane.b32.xlu0 %v1592, 68
    %v1688 = vpop.permute.xlu0 %1687
    %v1690 = vsel %vm92, %v1688, 0
    %1692 = vmatprep.subr.bf16.mxu0 0
    %1693 = vmatpush1.bf16.msra.mxu0 %v188
    %1694 = vmatprep.subr.bf16.mxu0 0
    %1695 = vmatpush1.bf16.msra.mxu0 %v196
    %1696 = vmatprep.subr.bf16.mxu0 0
    %1697 = vmatpush1.bf16.msra.mxu0 0
    %1698 = vmatprep.subr.bf16.mxu0 0
    %1699 = vmatpush1.bf16.msra.mxu0 0
    %1700 = vmatprep.subr.bf16.mxu0 0
    %1701 = vmatpush1.bf16.msra.mxu0 0
    %1702 = vmatprep.subr.bf16.mxu0 0
    %1703 = vmatpush1.bf16.msra.mxu0 0
    %1704 = vmatprep.subr.bf16.mxu0 0
    %1705 = vmatpush1.bf16.msra.mxu0 0
    %1706 = vmatprep.subr.bf16.mxu0 0
    %1707 = vmatpush1.bf16.msra.mxu0 0
    %1708 = vmatprep.subr.bf16.mxu0 0
    %1709 = vmatpush1.bf16.msra.mxu0 0
    %1710 = vmatprep.subr.bf16.mxu0 0
    %1711 = vmatpush1.bf16.msra.mxu0 0
    %1712 = vmatprep.subr.bf16.mxu0 0
    %1713 = vmatpush1.bf16.msra.mxu0 0
    %1714 = vmatprep.subr.bf16.mxu0 0
    %1715 = vmatpush1.bf16.msra.mxu0 0
    %1716 = vmatprep.subr.bf16.mxu0 0
    %1717 = vmatpush1.bf16.msra.mxu0 0
    %1718 = vmatprep.subr.bf16.mxu0 0
    %1719 = vmatpush1.bf16.msra.mxu0 0
    %1720 = vmatprep.subr.bf16.mxu0 0
    %1721 = vmatpush1.bf16.msra.mxu0 0
    %1722 = vmatprep.subr.bf16.mxu0 0
    %1723 = vmatpush1.bf16.msra.mxu0 0
    %1724 = vmatprep.mubr.bf16.mxu0 0
    %1725 = vmatmul.mubr.bf16.gmra.mrb[0].mxu0 %v1690
    %v1726 = vpop.f32.mrb[0].mxu0
    %v1727 = vadd.f32 0.0, %v1726
    %v1728 = vpop.f32.mrb[0].mxu0
    %v1729 = vpop.f32.mrb[0].mxu0
    %v1730 = vpop.f32.mrb[0].mxu0
    %1731 = vdwg.mxu0
    %v1732 = vadd.f32 %v1685, %v1727
    %v1733 = vxor.u32 %v1732, 2147483648
    %v1734 = vmul.f32 %v1733, 1.442695
    %v1735 = vpow.pop %v1734
    %v1736 = vadd.f32 %v1735, 1.0
    %v1737 = vrcp.pop %v1736
    %v1738 = vmul.f32 1.0, %v1737
    %v1739 = vmul.f32 %v1738, 2.0
    %v1740 = vsub.f32 %v1739, 1.0
    %v1741 = vmul.f32 %v1738, %v1585
    %1743 = vrot.lane.b32.xlu0 %v1740, 88
    %v1744 = vpop.permute.xlu0 %1743
    %v1746 = vmul.f32 %v1738, %v1744
    %1748 = vrot.lane.b32.xlu0 %v1746, 20
    %v1749 = vpop.permute.xlu0 %1748
    %v1751 = vadd.f32 %v1741, %v1749
    %v1752 = vtanh.pop %v1751
    %1754 = vrot.lane.b32.xlu0 %v1752, 40
    %v1755 = vpop.permute.xlu0 %1754
    %v1757 = vmul.f32 %v1738, %v1755
    %v1758 = vpack.c.bf16 %v1757, %v1757
    %v1759 = vld [vmem:[#allocation2] sm:$0x3]
    %s1760 = scalar_lea.vmem %s4, 240
    %v1761 = vld [vmem:[%s1760] sm:$0xff]
    %v1762 = vld [vmem:[%s1760 + $0x8] sm:$0xff]
    %v1763 = vld [vmem:[%s1760 + $0x10] sm:$0xf]
    %1765 = vrot.lane.b32.xlu0 %v1757, 68
    %v1766 = vpop.permute.xlu0 %1765
    %v1767 = vsel %vm92, %v1766, 0
    %v1770 = vsel %vm95, %v1763, 0
    %1772 = vmatprep.subr.mxu0 0.0
    %1773 = vmatpush1.msra.mxu0 %v1761
    %1774 = vmatprep.subr.mxu0 0.0
    %1775 = vmatpush1.msra.mxu0 %v1762
    %1776 = vmatprep.subr.mxu0 0.0
    %1777 = vmatpush1.msra.mxu0 %v1770
    %1778 = vmatprep.subr.mxu0 0.0
    %1779 = vmatpush1.msra.mxu0 0.0
    %1780 = vmatprep.subr.mxu0 0.0
    %1781 = vmatpush1.msra.mxu0 0.0
    %1782 = vmatprep.subr.mxu0 0.0
    %1783 = vmatpush1.msra.mxu0 0.0
    %1784 = vmatprep.subr.mxu0 0.0
    %1785 = vmatpush1.msra.mxu0 0.0
    %1786 = vmatprep.subr.mxu0 0.0
    %1787 = vmatpush1.msra.mxu0 0.0
    %1788 = vmatprep.subr.mxu0 0.0
    %1789 = vmatpush1.msra.mxu0 0.0
    %1790 = vmatprep.subr.mxu0 0.0
    %1791 = vmatpush1.msra.mxu0 0.0
    %1792 = vmatprep.subr.mxu0 0.0
    %1793 = vmatpush1.msra.mxu0 0.0
    %1794 = vmatprep.subr.mxu0 0.0
    %1795 = vmatpush1.msra.mxu0 0.0
    %1796 = vmatprep.subr.mxu0 0.0
    %1797 = vmatpush1.msra.mxu0 0.0
    %1798 = vmatprep.subr.mxu0 0.0
    %1799 = vmatpush1.msra.mxu0 0.0
    %1800 = vmatprep.subr.mxu0 0.0
    %1801 = vmatpush1.msra.mxu0 0.0
    %1802 = vmatprep.subr.mxu0 0.0
    %1803 = vmatpush1.msra.mxu0 0.0
    %1804 = vmatprep.subr.mxu0 0.0
    %1805 = vmatpush1.msra.mxu0 0.0
    %1806 = vmatprep.subr.mxu0 0.0
    %1807 = vmatpush1.msra.mxu0 0.0
    %1808 = vmatprep.subr.mxu0 0.0
    %1809 = vmatpush1.msra.mxu0 0.0
    %1810 = vmatprep.subr.mxu0 0.0
    %1811 = vmatpush1.msra.mxu0 0.0
    %1812 = vmatprep.subr.mxu0 0.0
    %1813 = vmatpush1.msra.mxu0 0.0
    %1814 = vmatprep.subr.mxu0 0.0
    %1815 = vmatpush1.msra.mxu0 0.0
    %1816 = vmatprep.subr.mxu0 0.0
    %1817 = vmatpush1.msra.mxu0 0.0
    %1818 = vmatprep.subr.mxu0 0.0
    %1819 = vmatpush1.msra.mxu0 0.0
    %1820 = vmatprep.subr.mxu0 0.0
    %1821 = vmatpush1.msra.mxu0 0.0
    %1822 = vmatprep.subr.mxu0 0.0
    %1823 = vmatpush1.msra.mxu0 0.0
    %1824 = vmatprep.subr.mxu0 0.0
    %1825 = vmatpush1.msra.mxu0 0.0
    %1826 = vmatprep.subr.mxu0 0.0
    %1827 = vmatpush1.msra.mxu0 0.0
    %1828 = vmatprep.subr.mxu0 0.0
    %1829 = vmatpush1.msra.mxu0 0.0
    %1830 = vmatprep.subr.mxu0 0.0
    %1831 = vmatpush1.msra.mxu0 0.0
    %1832 = vmatprep.subr.mxu0 0.0
    %1833 = vmatpush1.msra.mxu0 0.0
    %1834 = vmatprep.subr.mxu0 0.0
    %1835 = vmatpush1.msra.mxu0 0.0
    %1836 = vmatprep.mubr.f32.mxu0 0.0
    %1837 = vmatmul.mubr.f32.gmra.mrb[0].mxu0 %v1767
    %v1838 = vpop.f32.mrb[0].mxu0
    %v1839 = vadd.f32 0.0, %v1838
    %v1840 = vpop.f32.mrb[0].mxu0
    %1841 = vdwg.mxu0
    %v1842 = vadd.f32 %v1759, %v1839
    %1843 = vst.msk [vmem:[#allocation2] sm:$0x3] %vm32, %v1842
    %v1844 = vld [vmem:[%s0] sm:$0x3]
    %1846 = vset.pattern.permute.xlu0 11
    %1847 = vperm.xlu0 %1846, %v1844
    %v1848 = vpop.permute.xlu0 %1847
    %v1850 = vmul.f32 %v1848, %v49
    %v1851 = vadd.f32 %v1850, %v56
    %1853 = vrot.lane.b32.xlu0 %v1758, 68
    %v1854 = vpop.permute.xlu0 %1853
    %v1856 = vsel %vm92, %v1854, 0
    %1858 = vmatprep.subr.bf16.mxu0 0
    %1859 = vmatpush1.bf16.msra.mxu0 %v188
    %1860 = vmatprep.subr.bf16.mxu0 0
    %1861 = vmatpush1.bf16.msra.mxu0 %v196
    %1862 = vmatprep.subr.bf16.mxu0 0
    %1863 = vmatpush1.bf16.msra.mxu0 0
    %1864 = vmatprep.subr.bf16.mxu0 0
    %1865 = vmatpush1.bf16.msra.mxu0 0
    %1866 = vmatprep.subr.bf16.mxu0 0
    %1867 = vmatpush1.bf16.msra.mxu0 0
    %1868 = vmatprep.subr.bf16.mxu0 0
    %1869 = vmatpush1.bf16.msra.mxu0 0
    %1870 = vmatprep.subr.bf16.mxu0 0
    %1871 = vmatpush1.bf16.msra.mxu0 0
    %1872 = vmatprep.subr.bf16.mxu0 0
    %1873 = vmatpush1.bf16.msra.mxu0 0
    %1874 = vmatprep.subr.bf16.mxu0 0
    %1875 = vmatpush1.bf16.msra.mxu0 0
    %1876 = vmatprep.subr.bf16.mxu0 0
    %1877 = vmatpush1.bf16.msra.mxu0 0
    %1878 = vmatprep.subr.bf16.mxu0 0
    %1879 = vmatpush1.bf16.msra.mxu0 0
    %1880 = vmatprep.subr.bf16.mxu0 0
    %1881 = vmatpush1.bf16.msra.mxu0 0
    %1882 = vmatprep.subr.bf16.mxu0 0
    %1883 = vmatpush1.bf16.msra.mxu0 0
    %1884 = vmatprep.subr.bf16.mxu0 0
    %1885 = vmatpush1.bf16.msra.mxu0 0
    %1886 = vmatprep.subr.bf16.mxu0 0
    %1887 = vmatpush1.bf16.msra.mxu0 0
    %1888 = vmatprep.subr.bf16.mxu0 0
    %1889 = vmatpush1.bf16.msra.mxu0 0
    %1890 = vmatprep.mubr.bf16.mxu0 0
    %1891 = vmatmul.mubr.bf16.gmra.mrb[0].mxu0 %v1856
    %v1892 = vpop.f32.mrb[0].mxu0
    %v1893 = vadd.f32 0.0, %v1892
    %v1894 = vpop.f32.mrb[0].mxu0
    %v1895 = vpop.f32.mrb[0].mxu0
    %v1896 = vpop.f32.mrb[0].mxu0
    %1897 = vdwg.mxu0
    %v1898 = vadd.f32 %v1851, %v1893
    %v1899 = vxor.u32 %v1898, 2147483648
    %v1900 = vmul.f32 %v1899, 1.442695
    %v1901 = vpow.pop %v1900
    %v1902 = vadd.f32 %v1901, 1.0
    %v1903 = vrcp.pop %v1902
    %v1904 = vmul.f32 1.0, %v1903
    %v1905 = vmul.f32 %v1904, 2.0
    %v1906 = vsub.f32 %v1905, 1.0
    %v1907 = vmul.f32 %v1904, %v1751
    %1909 = vrot.lane.b32.xlu0 %v1906, 88
    %v1910 = vpop.permute.xlu0 %1909
    %v1912 = vmul.f32 %v1904, %v1910
    %1914 = vrot.lane.b32.xlu0 %v1912, 20
    %v1915 = vpop.permute.xlu0 %1914
    %v1917 = vadd.f32 %v1907, %v1915
    %v1918 = vtanh.pop %v1917
    %1920 = vrot.lane.b32.xlu0 %v1918, 40
    %v1921 = vpop.permute.xlu0 %1920
    %v1923 = vmul.f32 %v1904, %v1921
    %v1924 = vpack.c.bf16 %v1923, %v1923
    %v1925 = vld [vmem:[#allocation2] sm:$0x3]
    %s1926 = scalar_lea.vmem %s4, 264
    %v1927 = vld [vmem:[%s1926] sm:$0xff]
    %v1928 = vld [vmem:[%s1926 + $0x8] sm:$0xff]
    %v1929 = vld [vmem:[%s1926 + $0x10] sm:$0xf]
    %1931 = vrot.lane.b32.xlu0 %v1923, 68
    %v1932 = vpop.permute.xlu0 %1931
    %v1933 = vsel %vm92, %v1932, 0
    %v1936 = vsel %vm95, %v1929, 0
    %1938 = vmatprep.subr.mxu0 0.0
    %1939 = vmatpush1.msra.mxu0 %v1927
    %1940 = vmatprep.subr.mxu0 0.0
    %1941 = vmatpush1.msra.mxu0 %v1928
    %1942 = vmatprep.subr.mxu0 0.0
    %1943 = vmatpush1.msra.mxu0 %v1936
    %1944 = vmatprep.subr.mxu0 0.0
    %1945 = vmatpush1.msra.mxu0 0.0
    %1946 = vmatprep.subr.mxu0 0.0
    %1947 = vmatpush1.msra.mxu0 0.0
    %1948 = vmatprep.subr.mxu0 0.0
    %1949 = vmatpush1.msra.mxu0 0.0
    %1950 = vmatprep.subr.mxu0 0.0
    %1951 = vmatpush1.msra.mxu0 0.0
    %1952 = vmatprep.subr.mxu0 0.0
    %1953 = vmatpush1.msra.mxu0 0.0
    %1954 = vmatprep.subr.mxu0 0.0
    %1955 = vmatpush1.msra.mxu0 0.0
    %1956 = vmatprep.subr.mxu0 0.0
    %1957 = vmatpush1.msra.mxu0 0.0
    %1958 = vmatprep.subr.mxu0 0.0
    %1959 = vmatpush1.msra.mxu0 0.0
    %1960 = vmatprep.subr.mxu0 0.0
    %1961 = vmatpush1.msra.mxu0 0.0
    %1962 = vmatprep.subr.mxu0 0.0
    %1963 = vmatpush1.msra.mxu0 0.0
    %1964 = vmatprep.subr.mxu0 0.0
    %1965 = vmatpush1.msra.mxu0 0.0
    %1966 = vmatprep.subr.mxu0 0.0
    %1967 = vmatpush1.msra.mxu0 0.0
    %1968 = vmatprep.subr.mxu0 0.0
    %1969 = vmatpush1.msra.mxu0 0.0
    %1970 = vmatprep.subr.mxu0 0.0
    %1971 = vmatpush1.msra.mxu0 0.0
    %1972 = vmatprep.subr.mxu0 0.0
    %1973 = vmatpush1.msra.mxu0 0.0
    %1974 = vmatprep.subr.mxu0 0.0
    %1975 = vmatpush1.msra.mxu0 0.0
    %1976 = vmatprep.subr.mxu0 0.0
    %1977 = vmatpush1.msra.mxu0 0.0
    %1978 = vmatprep.subr.mxu0 0.0
    %1979 = vmatpush1.msra.mxu0 0.0
    %1980 = vmatprep.subr.mxu0 0.0
    %1981 = vmatpush1.msra.mxu0 0.0
    %1982 = vmatprep.subr.mxu0 0.0
    %1983 = vmatpush1.msra.mxu0 0.0
    %1984 = vmatprep.subr.mxu0 0.0
    %1985 = vmatpush1.msra.mxu0 0.0
    %1986 = vmatprep.subr.mxu0 0.0
    %1987 = vmatpush1.msra.mxu0 0.0
    %1988 = vmatprep.subr.mxu0 0.0
    %1989 = vmatpush1.msra.mxu0 0.0
    %1990 = vmatprep.subr.mxu0 0.0
    %1991 = vmatpush1.msra.mxu0 0.0
    %1992 = vmatprep.subr.mxu0 0.0
    %1993 = vmatpush1.msra.mxu0 0.0
    %1994 = vmatprep.subr.mxu0 0.0
    %1995 = vmatpush1.msra.mxu0 0.0
    %1996 = vmatprep.subr.mxu0 0.0
    %1997 = vmatpush1.msra.mxu0 0.0
    %1998 = vmatprep.subr.mxu0 0.0
    %1999 = vmatpush1.msra.mxu0 0.0
    %2000 = vmatprep.subr.mxu0 0.0
    %2001 = vmatpush1.msra.mxu0 0.0
    %2002 = vmatprep.mubr.f32.mxu0 0.0
    %2003 = vmatmul.mubr.f32.gmra.mrb[0].mxu0 %v1933
    %v2004 = vpop.f32.mrb[0].mxu0
    %v2005 = vadd.f32 0.0, %v2004
    %v2006 = vpop.f32.mrb[0].mxu0
    %2007 = vdwg.mxu0
    %v2008 = vadd.f32 %v1925, %v2005
    %2009 = vst.msk [vmem:[#allocation2] sm:$0x3] %vm32, %v2008
    %v2010 = vld [vmem:[%s0] sm:$0x3]
    %2012 = vset.pattern.permute.xlu0 12
    %2013 = vperm.xlu0 %2012, %v2010
    %v2014 = vpop.permute.xlu0 %2013
    %v2016 = vmul.f32 %v2014, %v49
    %v2017 = vadd.f32 %v2016, %v56
    %2019 = vrot.lane.b32.xlu0 %v1924, 68
    %v2020 = vpop.permute.xlu0 %2019
    %v2022 = vsel %vm92, %v2020, 0
    %2024 = vmatprep.subr.bf16.mxu0 0
    %2025 = vmatpush1.bf16.msra.mxu0 %v188
    %2026 = vmatprep.subr.bf16.mxu0 0
    %2027 = vmatpush1.bf16.msra.mxu0 %v196
    %2028 = vmatprep.subr.bf16.mxu0 0
    %2029 = vmatpush1.bf16.msra.mxu0 0
    %2030 = vmatprep.subr.bf16.mxu0 0
    %2031 = vmatpush1.bf16.msra.mxu0 0
    %2032 = vmatprep.subr.bf16.mxu0 0
    %2033 = vmatpush1.bf16.msra.mxu0 0
    %2034 = vmatprep.subr.bf16.mxu0 0
    %2035 = vmatpush1.bf16.msra.mxu0 0
    %2036 = vmatprep.subr.bf16.mxu0 0
    %2037 = vmatpush1.bf16.msra.mxu0 0
    %2038 = vmatprep.subr.bf16.mxu0 0
    %2039 = vmatpush1.bf16.msra.mxu0 0
    %2040 = vmatprep.subr.bf16.mxu0 0
    %2041 = vmatpush1.bf16.msra.mxu0 0
    %2042 = vmatprep.subr.bf16.mxu0 0
    %2043 = vmatpush1.bf16.msra.mxu0 0
    %2044 = vmatprep.subr.bf16.mxu0 0
    %2045 = vmatpush1.bf16.msra.mxu0 0
    %2046 = vmatprep.subr.bf16.mxu0 0
    %2047 = vmatpush1.bf16.msra.mxu0 0
    %2048 = vmatprep.subr.bf16.mxu0 0
    %2049 = vmatpush1.bf16.msra.mxu0 0
    %2050 = vmatprep.subr.bf16.mxu0 0
    %2051 = vmatpush1.bf16.msra.mxu0 0
    %2052 = vmatprep.subr.bf16.mxu0 0
    %2053 = vmatpush1.bf16.msra.mxu0 0
    %2054 = vmatprep.subr.bf16.mxu0 0
    %2055 = vmatpush1.bf16.msra.mxu0 0
    %2056 = vmatprep.mubr.bf16.mxu0 0
    %2057 = vmatmul.mubr.bf16.gmra.mrb[0].mxu0 %v2022
    %v2058 = vpop.f32.mrb[0].mxu0
    %v2059 = vadd.f32 0.0, %v2058
    %v2060 = vpop.f32.mrb[0].mxu0
    %v2061 = vpop.f32.mrb[0].mxu0
    %v2062 = vpop.f32.mrb[0].mxu0
    %2063 = vdwg.mxu0
    %v2064 = vadd.f32 %v2017, %v2059
    %v2065 = vxor.u32 %v2064, 2147483648
    %v2066 = vmul.f32 %v2065, 1.442695
    %v2067 = vpow.pop %v2066
    %v2068 = vadd.f32 %v2067, 1.0
    %v2069 = vrcp.pop %v2068
    %v2070 = vmul.f32 1.0, %v2069
    %v2071 = vmul.f32 %v2070, 2.0
    %v2072 = vsub.f32 %v2071, 1.0
    %v2073 = vmul.f32 %v2070, %v1917
    %2075 = vrot.lane.b32.xlu0 %v2072, 88
    %v2076 = vpop.permute.xlu0 %2075
    %v2078 = vmul.f32 %v2070, %v2076
    %2080 = vrot.lane.b32.xlu0 %v2078, 20
    %v2081 = vpop.permute.xlu0 %2080
    %v2083 = vadd.f32 %v2073, %v2081
    %v2084 = vtanh.pop %v2083
    %2086 = vrot.lane.b32.xlu0 %v2084, 40
    %v2087 = vpop.permute.xlu0 %2086
    %v2089 = vmul.f32 %v2070, %v2087
    %v2090 = vpack.c.bf16 %v2089, %v2089
    %v2091 = vld [vmem:[#allocation2] sm:$0x3]
    %s2092 = scalar_lea.vmem %s4, 288
    %v2093 = vld [vmem:[%s2092] sm:$0xff]
    %v2094 = vld [vmem:[%s2092 + $0x8] sm:$0xff]
    %v2095 = vld [vmem:[%s2092 + $0x10] sm:$0xf]
    %2097 = vrot.lane.b32.xlu0 %v2089, 68
    %v2098 = vpop.permute.xlu0 %2097
    %v2099 = vsel %vm92, %v2098, 0
    %v2102 = vsel %vm95, %v2095, 0
    %2104 = vmatprep.subr.mxu0 0.0
    %2105 = vmatpush1.msra.mxu0 %v2093
    %2106 = vmatprep.subr.mxu0 0.0
    %2107 = vmatpush1.msra.mxu0 %v2094
    %2108 = vmatprep.subr.mxu0 0.0
    %2109 = vmatpush1.msra.mxu0 %v2102
    %2110 = vmatprep.subr.mxu0 0.0
    %2111 = vmatpush1.msra.mxu0 0.0
    %2112 = vmatprep.subr.mxu0 0.0
    %2113 = vmatpush1.msra.mxu0 0.0
    %2114 = vmatprep.subr.mxu0 0.0
    %2115 = vmatpush1.msra.mxu0 0.0
    %2116 = vmatprep.subr.mxu0 0.0
    %2117 = vmatpush1.msra.mxu0 0.0
    %2118 = vmatprep.subr.mxu0 0.0
    %2119 = vmatpush1.msra.mxu0 0.0
    %2120 = vmatprep.subr.mxu0 0.0
    %2121 = vmatpush1.msra.mxu0 0.0
    %2122 = vmatprep.subr.mxu0 0.0
    %2123 = vmatpush1.msra.mxu0 0.0
    %2124 = vmatprep.subr.mxu0 0.0
    %2125 = vmatpush1.msra.mxu0 0.0
    %2126 = vmatprep.subr.mxu0 0.0
    %2127 = vmatpush1.msra.mxu0 0.0
    %2128 = vmatprep.subr.mxu0 0.0
    %2129 = vmatpush1.msra.mxu0 0.0
    %2130 = vmatprep.subr.mxu0 0.0
    %2131 = vmatpush1.msra.mxu0 0.0
    %2132 = vmatprep.subr.mxu0 0.0
    %2133 = vmatpush1.msra.mxu0 0.0
    %2134 = vmatprep.subr.mxu0 0.0
    %2135 = vmatpush1.msra.mxu0 0.0
    %2136 = vmatprep.subr.mxu0 0.0
    %2137 = vmatpush1.msra.mxu0 0.0
    %2138 = vmatprep.subr.mxu0 0.0
    %2139 = vmatpush1.msra.mxu0 0.0
    %2140 = vmatprep.subr.mxu0 0.0
    %2141 = vmatpush1.msra.mxu0 0.0
    %2142 = vmatprep.subr.mxu0 0.0
    %2143 = vmatpush1.msra.mxu0 0.0
    %2144 = vmatprep.subr.mxu0 0.0
    %2145 = vmatpush1.msra.mxu0 0.0
    %2146 = vmatprep.subr.mxu0 0.0
    %2147 = vmatpush1.msra.mxu0 0.0
    %2148 = vmatprep.subr.mxu0 0.0
    %2149 = vmatpush1.msra.mxu0 0.0
    %2150 = vmatprep.subr.mxu0 0.0
    %2151 = vmatpush1.msra.mxu0 0.0
    %2152 = vmatprep.subr.mxu0 0.0
    %2153 = vmatpush1.msra.mxu0 0.0
    %2154 = vmatprep.subr.mxu0 0.0
    %2155 = vmatpush1.msra.mxu0 0.0
    %2156 = vmatprep.subr.mxu0 0.0
    %2157 = vmatpush1.msra.mxu0 0.0
    %2158 = vmatprep.subr.mxu0 0.0
    %2159 = vmatpush1.msra.mxu0 0.0
    %2160 = vmatprep.subr.mxu0 0.0
    %2161 = vmatpush1.msra.mxu0 0.0
    %2162 = vmatprep.subr.mxu0 0.0
    %2163 = vmatpush1.msra.mxu0 0.0
    %2164 = vmatprep.subr.mxu0 0.0
    %2165 = vmatpush1.msra.mxu0 0.0
    %2166 = vmatprep.subr.mxu0 0.0
    %2167 = vmatpush1.msra.mxu0 0.0
    %2168 = vmatprep.mubr.f32.mxu0 0.0
    %2169 = vmatmul.mubr.f32.gmra.mrb[0].mxu0 %v2099
    %v2170 = vpop.f32.mrb[0].mxu0
    %v2171 = vadd.f32 0.0, %v2170
    %v2172 = vpop.f32.mrb[0].mxu0
    %2173 = vdwg.mxu0
    %v2174 = vadd.f32 %v2091, %v2171
    %2175 = vst.msk [vmem:[#allocation2] sm:$0x3] %vm32, %v2174
    %v2176 = vld [vmem:[%s0] sm:$0x3]
    %2178 = vset.pattern.permute.xlu0 13
    %2179 = vperm.xlu0 %2178, %v2176
    %v2180 = vpop.permute.xlu0 %2179
    %v2182 = vmul.f32 %v2180, %v49
    %v2183 = vadd.f32 %v2182, %v56
    %2185 = vrot.lane.b32.xlu0 %v2090, 68
    %v2186 = vpop.permute.xlu0 %2185
    %v2188 = vsel %vm92, %v2186, 0
    %2190 = vmatprep.subr.bf16.mxu0 0
    %2191 = vmatpush1.bf16.msra.mxu0 %v188
    %2192 = vmatprep.subr.bf16.mxu0 0
    %2193 = vmatpush1.bf16.msra.mxu0 %v196
    %2194 = vmatprep.subr.bf16.mxu0 0
    %2195 = vmatpush1.bf16.msra.mxu0 0
    %2196 = vmatprep.subr.bf16.mxu0 0
    %2197 = vmatpush1.bf16.msra.mxu0 0
    %2198 = vmatprep.subr.bf16.mxu0 0
    %2199 = vmatpush1.bf16.msra.mxu0 0
    %2200 = vmatprep.subr.bf16.mxu0 0
    %2201 = vmatpush1.bf16.msra.mxu0 0
    %2202 = vmatprep.subr.bf16.mxu0 0
    %2203 = vmatpush1.bf16.msra.mxu0 0
    %2204 = vmatprep.subr.bf16.mxu0 0
    %2205 = vmatpush1.bf16.msra.mxu0 0
    %2206 = vmatprep.subr.bf16.mxu0 0
    %2207 = vmatpush1.bf16.msra.mxu0 0
    %2208 = vmatprep.subr.bf16.mxu0 0
    %2209 = vmatpush1.bf16.msra.mxu0 0
    %2210 = vmatprep.subr.bf16.mxu0 0
    %2211 = vmatpush1.bf16.msra.mxu0 0
    %2212 = vmatprep.subr.bf16.mxu0 0
    %2213 = vmatpush1.bf16.msra.mxu0 0
    %2214 = vmatprep.subr.bf16.mxu0 0
    %2215 = vmatpush1.bf16.msra.mxu0 0
    %2216 = vmatprep.subr.bf16.mxu0 0
    %2217 = vmatpush1.bf16.msra.mxu0 0
    %2218 = vmatprep.subr.bf16.mxu0 0
    %2219 = vmatpush1.bf16.msra.mxu0 0
    %2220 = vmatprep.subr.bf16.mxu0 0
    %2221 = vmatpush1.bf16.msra.mxu0 0
    %2222 = vmatprep.mubr.bf16.mxu0 0
    %2223 = vmatmul.mubr.bf16.gmra.mrb[0].mxu0 %v2188
    %v2224 = vpop.f32.mrb[0].mxu0
    %v2225 = vadd.f32 0.0, %v2224
    %v2226 = vpop.f32.mrb[0].mxu0
    %v2227 = vpop.f32.mrb[0].mxu0
    %v2228 = vpop.f32.mrb[0].mxu0
    %2229 = vdwg.mxu0
    %v2230 = vadd.f32 %v2183, %v2225
    %v2231 = vxor.u32 %v2230, 2147483648
    %v2232 = vmul.f32 %v2231, 1.442695
    %v2233 = vpow.pop %v2232
    %v2234 = vadd.f32 %v2233, 1.0
    %v2235 = vrcp.pop %v2234
    %v2236 = vmul.f32 1.0, %v2235
    %v2237 = vmul.f32 %v2236, 2.0
    %v2238 = vsub.f32 %v2237, 1.0
    %v2239 = vmul.f32 %v2236, %v2083
    %2241 = vrot.lane.b32.xlu0 %v2238, 88
    %v2242 = vpop.permute.xlu0 %2241
    %v2244 = vmul.f32 %v2236, %v2242
    %2246 = vrot.lane.b32.xlu0 %v2244, 20
    %v2247 = vpop.permute.xlu0 %2246
    %v2249 = vadd.f32 %v2239, %v2247
    %v2250 = vtanh.pop %v2249
    %2252 = vrot.lane.b32.xlu0 %v2250, 40
    %v2253 = vpop.permute.xlu0 %2252
    %v2255 = vmul.f32 %v2236, %v2253
    %v2256 = vpack.c.bf16 %v2255, %v2255
    %v2257 = vld [vmem:[#allocation2] sm:$0x3]
    %s2258 = scalar_lea.vmem %s4, 312
    %v2259 = vld [vmem:[%s2258] sm:$0xff]
    %v2260 = vld [vmem:[%s2258 + $0x8] sm:$0xff]
    %v2261 = vld [vmem:[%s2258 + $0x10] sm:$0xf]
    %2263 = vrot.lane.b32.xlu0 %v2255, 68
    %v2264 = vpop.permute.xlu0 %2263
    %v2265 = vsel %vm92, %v2264, 0
    %v2268 = vsel %vm95, %v2261, 0
    %2270 = vmatprep.subr.mxu0 0.0
    %2271 = vmatpush1.msra.mxu0 %v2259
    %2272 = vmatprep.subr.mxu0 0.0
    %2273 = vmatpush1.msra.mxu0 %v2260
    %2274 = vmatprep.subr.mxu0 0.0
    %2275 = vmatpush1.msra.mxu0 %v2268
    %2276 = vmatprep.subr.mxu0 0.0
    %2277 = vmatpush1.msra.mxu0 0.0
    %2278 = vmatprep.subr.mxu0 0.0
    %2279 = vmatpush1.msra.mxu0 0.0
    %2280 = vmatprep.subr.mxu0 0.0
    %2281 = vmatpush1.msra.mxu0 0.0
    %2282 = vmatprep.subr.mxu0 0.0
    %2283 = vmatpush1.msra.mxu0 0.0
    %2284 = vmatprep.subr.mxu0 0.0
    %2285 = vmatpush1.msra.mxu0 0.0
    %2286 = vmatprep.subr.mxu0 0.0
    %2287 = vmatpush1.msra.mxu0 0.0
    %2288 = vmatprep.subr.mxu0 0.0
    %2289 = vmatpush1.msra.mxu0 0.0
    %2290 = vmatprep.subr.mxu0 0.0
    %2291 = vmatpush1.msra.mxu0 0.0
    %2292 = vmatprep.subr.mxu0 0.0
    %2293 = vmatpush1.msra.mxu0 0.0
    %2294 = vmatprep.subr.mxu0 0.0
    %2295 = vmatpush1.msra.mxu0 0.0
    %2296 = vmatprep.subr.mxu0 0.0
    %2297 = vmatpush1.msra.mxu0 0.0
    %2298 = vmatprep.subr.mxu0 0.0
    %2299 = vmatpush1.msra.mxu0 0.0
    %2300 = vmatprep.subr.mxu0 0.0
    %2301 = vmatpush1.msra.mxu0 0.0
    %2302 = vmatprep.subr.mxu0 0.0
    %2303 = vmatpush1.msra.mxu0 0.0
    %2304 = vmatprep.subr.mxu0 0.0
    %2305 = vmatpush1.msra.mxu0 0.0
    %2306 = vmatprep.subr.mxu0 0.0
    %2307 = vmatpush1.msra.mxu0 0.0
    %2308 = vmatprep.subr.mxu0 0.0
    %2309 = vmatpush1.msra.mxu0 0.0
    %2310 = vmatprep.subr.mxu0 0.0
    %2311 = vmatpush1.msra.mxu0 0.0
    %2312 = vmatprep.subr.mxu0 0.0
    %2313 = vmatpush1.msra.mxu0 0.0
    %2314 = vmatprep.subr.mxu0 0.0
    %2315 = vmatpush1.msra.mxu0 0.0
    %2316 = vmatprep.subr.mxu0 0.0
    %2317 = vmatpush1.msra.mxu0 0.0
    %2318 = vmatprep.subr.mxu0 0.0
    %2319 = vmatpush1.msra.mxu0 0.0
    %2320 = vmatprep.subr.mxu0 0.0
    %2321 = vmatpush1.msra.mxu0 0.0
    %2322 = vmatprep.subr.mxu0 0.0
    %2323 = vmatpush1.msra.mxu0 0.0
    %2324 = vmatprep.subr.mxu0 0.0
    %2325 = vmatpush1.msra.mxu0 0.0
    %2326 = vmatprep.subr.mxu0 0.0
    %2327 = vmatpush1.msra.mxu0 0.0
    %2328 = vmatprep.subr.mxu0 0.0
    %2329 = vmatpush1.msra.mxu0 0.0
    %2330 = vmatprep.subr.mxu0 0.0
    %2331 = vmatpush1.msra.mxu0 0.0
    %2332 = vmatprep.subr.mxu0 0.0
    %2333 = vmatpush1.msra.mxu0 0.0
    %2334 = vmatprep.mubr.f32.mxu0 0.0
    %2335 = vmatmul.mubr.f32.gmra.mrb[0].mxu0 %v2265
    %v2336 = vpop.f32.mrb[0].mxu0
    %v2337 = vadd.f32 0.0, %v2336
    %v2338 = vpop.f32.mrb[0].mxu0
    %2339 = vdwg.mxu0
    %v2340 = vadd.f32 %v2257, %v2337
    %2341 = vst.msk [vmem:[#allocation2] sm:$0x3] %vm32, %v2340
    %v2342 = vld [vmem:[%s0] sm:$0x3]
    %2344 = vset.pattern.permute.xlu0 14
    %2345 = vperm.xlu0 %2344, %v2342
    %v2346 = vpop.permute.xlu0 %2345
    %v2348 = vmul.f32 %v2346, %v49
    %v2349 = vadd.f32 %v2348, %v56
    %2351 = vrot.lane.b32.xlu0 %v2256, 68
    %v2352 = vpop.permute.xlu0 %2351
    %v2354 = vsel %vm92, %v2352, 0
    %2356 = vmatprep.subr.bf16.mxu0 0
    %2357 = vmatpush1.bf16.msra.mxu0 %v188
    %2358 = vmatprep.subr.bf16.mxu0 0
    %2359 = vmatpush1.bf16.msra.mxu0 %v196
    %2360 = vmatprep.subr.bf16.mxu0 0
    %2361 = vmatpush1.bf16.msra.mxu0 0
    %2362 = vmatprep.subr.bf16.mxu0 0
    %2363 = vmatpush1.bf16.msra.mxu0 0
    %2364 = vmatprep.subr.bf16.mxu0 0
    %2365 = vmatpush1.bf16.msra.mxu0 0
    %2366 = vmatprep.subr.bf16.mxu0 0
    %2367 = vmatpush1.bf16.msra.mxu0 0
    %2368 = vmatprep.subr.bf16.mxu0 0
    %2369 = vmatpush1.bf16.msra.mxu0 0
    %2370 = vmatprep.subr.bf16.mxu0 0
    %2371 = vmatpush1.bf16.msra.mxu0 0
    %2372 = vmatprep.subr.bf16.mxu0 0
    %2373 = vmatpush1.bf16.msra.mxu0 0
    %2374 = vmatprep.subr.bf16.mxu0 0
    %2375 = vmatpush1.bf16.msra.mxu0 0
    %2376 = vmatprep.subr.bf16.mxu0 0
    %2377 = vmatpush1.bf16.msra.mxu0 0
    %2378 = vmatprep.subr.bf16.mxu0 0
    %2379 = vmatpush1.bf16.msra.mxu0 0
    %2380 = vmatprep.subr.bf16.mxu0 0
    %2381 = vmatpush1.bf16.msra.mxu0 0
    %2382 = vmatprep.subr.bf16.mxu0 0
    %2383 = vmatpush1.bf16.msra.mxu0 0
    %2384 = vmatprep.subr.bf16.mxu0 0
    %2385 = vmatpush1.bf16.msra.mxu0 0
    %2386 = vmatprep.subr.bf16.mxu0 0
    %2387 = vmatpush1.bf16.msra.mxu0 0
    %2388 = vmatprep.mubr.bf16.mxu0 0
    %2389 = vmatmul.mubr.bf16.gmra.mrb[0].mxu0 %v2354
    %v2390 = vpop.f32.mrb[0].mxu0
    %v2391 = vadd.f32 0.0, %v2390
    %v2392 = vpop.f32.mrb[0].mxu0
    %v2393 = vpop.f32.mrb[0].mxu0
    %v2394 = vpop.f32.mrb[0].mxu0
    %2395 = vdwg.mxu0
    %v2396 = vadd.f32 %v2349, %v2391
    %v2397 = vxor.u32 %v2396, 2147483648
    %v2398 = vmul.f32 %v2397, 1.442695
    %v2399 = vpow.pop %v2398
    %v2400 = vadd.f32 %v2399, 1.0
    %v2401 = vrcp.pop %v2400
    %v2402 = vmul.f32 1.0, %v2401
    %v2403 = vmul.f32 %v2402, 2.0
    %v2404 = vsub.f32 %v2403, 1.0
    %v2405 = vmul.f32 %v2402, %v2249
    %2407 = vrot.lane.b32.xlu0 %v2404, 88
    %v2408 = vpop.permute.xlu0 %2407
    %v2410 = vmul.f32 %v2402, %v2408
    %2412 = vrot.lane.b32.xlu0 %v2410, 20
    %v2413 = vpop.permute.xlu0 %2412
    %v2415 = vadd.f32 %v2405, %v2413
    %v2416 = vtanh.pop %v2415
    %2418 = vrot.lane.b32.xlu0 %v2416, 40
    %v2419 = vpop.permute.xlu0 %2418
    %v2421 = vmul.f32 %v2402, %v2419
    %v2422 = vpack.c.bf16 %v2421, %v2421
    %v2423 = vld [vmem:[#allocation2] sm:$0x3]
    %s2424 = scalar_lea.vmem %s4, 336
    %v2425 = vld [vmem:[%s2424] sm:$0xff]
    %v2426 = vld [vmem:[%s2424 + $0x8] sm:$0xff]
    %v2427 = vld [vmem:[%s2424 + $0x10] sm:$0xf]
    %2429 = vrot.lane.b32.xlu0 %v2421, 68
    %v2430 = vpop.permute.xlu0 %2429
    %v2431 = vsel %vm92, %v2430, 0
    %v2434 = vsel %vm95, %v2427, 0
    %2436 = vmatprep.subr.mxu0 0.0
    %2437 = vmatpush1.msra.mxu0 %v2425
    %2438 = vmatprep.subr.mxu0 0.0
    %2439 = vmatpush1.msra.mxu0 %v2426
    %2440 = vmatprep.subr.mxu0 0.0
    %2441 = vmatpush1.msra.mxu0 %v2434
    %2442 = vmatprep.subr.mxu0 0.0
    %2443 = vmatpush1.msra.mxu0 0.0
    %2444 = vmatprep.subr.mxu0 0.0
    %2445 = vmatpush1.msra.mxu0 0.0
    %2446 = vmatprep.subr.mxu0 0.0
    %2447 = vmatpush1.msra.mxu0 0.0
    %2448 = vmatprep.subr.mxu0 0.0
    %2449 = vmatpush1.msra.mxu0 0.0
    %2450 = vmatprep.subr.mxu0 0.0
    %2451 = vmatpush1.msra.mxu0 0.0
    %2452 = vmatprep.subr.mxu0 0.0
    %2453 = vmatpush1.msra.mxu0 0.0
    %2454 = vmatprep.subr.mxu0 0.0
    %2455 = vmatpush1.msra.mxu0 0.0
    %2456 = vmatprep.subr.mxu0 0.0
    %2457 = vmatpush1.msra.mxu0 0.0
    %2458 = vmatprep.subr.mxu0 0.0
    %2459 = vmatpush1.msra.mxu0 0.0
    %2460 = vmatprep.subr.mxu0 0.0
    %2461 = vmatpush1.msra.mxu0 0.0
    %2462 = vmatprep.subr.mxu0 0.0
    %2463 = vmatpush1.msra.mxu0 0.0
    %2464 = vmatprep.subr.mxu0 0.0
    %2465 = vmatpush1.msra.mxu0 0.0
    %2466 = vmatprep.subr.mxu0 0.0
    %2467 = vmatpush1.msra.mxu0 0.0
    %2468 = vmatprep.subr.mxu0 0.0
    %2469 = vmatpush1.msra.mxu0 0.0
    %2470 = vmatprep.subr.mxu0 0.0
    %2471 = vmatpush1.msra.mxu0 0.0
    %2472 = vmatprep.subr.mxu0 0.0
    %2473 = vmatpush1.msra.mxu0 0.0
    %2474 = vmatprep.subr.mxu0 0.0
    %2475 = vmatpush1.msra.mxu0 0.0
    %2476 = vmatprep.subr.mxu0 0.0
    %2477 = vmatpush1.msra.mxu0 0.0
    %2478 = vmatprep.subr.mxu0 0.0
    %2479 = vmatpush1.msra.mxu0 0.0
    %2480 = vmatprep.subr.mxu0 0.0
    %2481 = vmatpush1.msra.mxu0 0.0
    %2482 = vmatprep.subr.mxu0 0.0
    %2483 = vmatpush1.msra.mxu0 0.0
    %2484 = vmatprep.subr.mxu0 0.0
    %2485 = vmatpush1.msra.mxu0 0.0
    %2486 = vmatprep.subr.mxu0 0.0
    %2487 = vmatpush1.msra.mxu0 0.0
    %2488 = vmatprep.subr.mxu0 0.0
    %2489 = vmatpush1.msra.mxu0 0.0
    %2490 = vmatprep.subr.mxu0 0.0
    %2491 = vmatpush1.msra.mxu0 0.0
    %2492 = vmatprep.subr.mxu0 0.0
    %2493 = vmatpush1.msra.mxu0 0.0
    %2494 = vmatprep.subr.mxu0 0.0
    %2495 = vmatpush1.msra.mxu0 0.0
    %2496 = vmatprep.subr.mxu0 0.0
    %2497 = vmatpush1.msra.mxu0 0.0
    %2498 = vmatprep.subr.mxu0 0.0
    %2499 = vmatpush1.msra.mxu0 0.0
    %2500 = vmatprep.mubr.f32.mxu0 0.0
    %2501 = vmatmul.mubr.f32.gmra.mrb[0].mxu0 %v2431
    %v2502 = vpop.f32.mrb[0].mxu0
    %v2503 = vadd.f32 0.0, %v2502
    %v2504 = vpop.f32.mrb[0].mxu0
    %2505 = vdwg.mxu0
    %v2506 = vadd.f32 %v2423, %v2503
    %2507 = vst.msk [vmem:[#allocation2] sm:$0x3] %vm32, %v2506
    %v2508 = vld [vmem:[%s0] sm:$0x3]
    %2510 = vset.pattern.permute.xlu0 15
    %2511 = vperm.xlu0 %2510, %v2508
    %v2512 = vpop.permute.xlu0 %2511
    %v2514 = vmul.f32 %v2512, %v49
    %v2515 = vadd.f32 %v2514, %v56
    %2517 = vrot.lane.b32.xlu0 %v2422, 68
    %v2518 = vpop.permute.xlu0 %2517
    %v2520 = vsel %vm92, %v2518, 0
    %2522 = vmatprep.subr.bf16.mxu0 0
    %2523 = vmatpush1.bf16.msra.mxu0 %v188
    %2524 = vmatprep.subr.bf16.mxu0 0
    %2525 = vmatpush1.bf16.msra.mxu0 %v196
    %2526 = vmatprep.subr.bf16.mxu0 0
    %2527 = vmatpush1.bf16.msra.mxu0 0
    %2528 = vmatprep.subr.bf16.mxu0 0
    %2529 = vmatpush1.bf16.msra.mxu0 0
    %2530 = vmatprep.subr.bf16.mxu0 0
    %2531 = vmatpush1.bf16.msra.mxu0 0
    %2532 = vmatprep.subr.bf16.mxu0 0
    %2533 = vmatpush1.bf16.msra.mxu0 0
    %2534 = vmatprep.subr.bf16.mxu0 0
    %2535 = vmatpush1.bf16.msra.mxu0 0
    %2536 = vmatprep.subr.bf16.mxu0 0
    %2537 = vmatpush1.bf16.msra.mxu0 0
    %2538 = vmatprep.subr.bf16.mxu0 0
    %2539 = vmatpush1.bf16.msra.mxu0 0
    %2540 = vmatprep.subr.bf16.mxu0 0
    %2541 = vmatpush1.bf16.msra.mxu0 0
    %2542 = vmatprep.subr.bf16.mxu0 0
    %2543 = vmatpush1.bf16.msra.mxu0 0
    %2544 = vmatprep.subr.bf16.mxu0 0
    %2545 = vmatpush1.bf16.msra.mxu0 0
    %2546 = vmatprep.subr.bf16.mxu0 0
    %2547 = vmatpush1.bf16.msra.mxu0 0
    %2548 = vmatprep.subr.bf16.mxu0 0
    %2549 = vmatpush1.bf16.msra.mxu0 0
    %2550 = vmatprep.subr.bf16.mxu0 0
    %2551 = vmatpush1.bf16.msra.mxu0 0
    %2552 = vmatprep.subr.bf16.mxu0 0
    %2553 = vmatpush1.bf16.msra.mxu0 0
    %2554 = vmatprep.mubr.bf16.mxu0 0
    %2555 = vmatmul.mubr.bf16.gmra.mrb[0].mxu0 %v2520
    %v2556 = vpop.f32.mrb[0].mxu0
    %v2557 = vadd.f32 0.0, %v2556
    %v2558 = vpop.f32.mrb[0].mxu0
    %v2559 = vpop.f32.mrb[0].mxu0
    %v2560 = vpop.f32.mrb[0].mxu0
    %2561 = vdwg.mxu0
    %v2562 = vadd.f32 %v2515, %v2557
    %v2563 = vxor.u32 %v2562, 2147483648
    %v2564 = vmul.f32 %v2563, 1.442695
    %v2565 = vpow.pop %v2564
    %v2566 = vadd.f32 %v2565, 1.0
    %v2567 = vrcp.pop %v2566
    %v2568 = vmul.f32 1.0, %v2567
    %v2569 = vmul.f32 %v2568, 2.0
    %v2570 = vsub.f32 %v2569, 1.0
    %v2571 = vmul.f32 %v2568, %v2415
    %2573 = vrot.lane.b32.xlu0 %v2570, 88
    %v2574 = vpop.permute.xlu0 %2573
    %v2576 = vmul.f32 %v2568, %v2574
    %2578 = vrot.lane.b32.xlu0 %v2576, 20
    %v2579 = vpop.permute.xlu0 %2578
    %v2581 = vadd.f32 %v2571, %v2579
    %v2582 = vtanh.pop %v2581
    %2584 = vrot.lane.b32.xlu0 %v2582, 40
    %v2585 = vpop.permute.xlu0 %2584
    %v2587 = vmul.f32 %v2568, %v2585
    %v2588 = vpack.c.bf16 %v2587, %v2587
    %v2589 = vld [vmem:[#allocation2] sm:$0x3]
    %s2590 = scalar_lea.vmem %s4, 360
    %v2591 = vld [vmem:[%s2590] sm:$0xff]
    %v2592 = vld [vmem:[%s2590 + $0x8] sm:$0xff]
    %v2593 = vld [vmem:[%s2590 + $0x10] sm:$0xf]
    %2595 = vrot.lane.b32.xlu0 %v2587, 68
    %v2596 = vpop.permute.xlu0 %2595
    %v2597 = vsel %vm92, %v2596, 0
    %v2600 = vsel %vm95, %v2593, 0
    %2602 = vmatprep.subr.mxu0 0.0
    %2603 = vmatpush1.msra.mxu0 %v2591
    %2604 = vmatprep.subr.mxu0 0.0
    %2605 = vmatpush1.msra.mxu0 %v2592
    %2606 = vmatprep.subr.mxu0 0.0
    %2607 = vmatpush1.msra.mxu0 %v2600
    %2608 = vmatprep.subr.mxu0 0.0
    %2609 = vmatpush1.msra.mxu0 0.0
    %2610 = vmatprep.subr.mxu0 0.0
    %2611 = vmatpush1.msra.mxu0 0.0
    %2612 = vmatprep.subr.mxu0 0.0
    %2613 = vmatpush1.msra.mxu0 0.0
    %2614 = vmatprep.subr.mxu0 0.0
    %2615 = vmatpush1.msra.mxu0 0.0
    %2616 = vmatprep.subr.mxu0 0.0
    %2617 = vmatpush1.msra.mxu0 0.0
    %2618 = vmatprep.subr.mxu0 0.0
    %2619 = vmatpush1.msra.mxu0 0.0
    %2620 = vmatprep.subr.mxu0 0.0
    %2621 = vmatpush1.msra.mxu0 0.0
    %2622 = vmatprep.subr.mxu0 0.0
    %2623 = vmatpush1.msra.mxu0 0.0
    %2624 = vmatprep.subr.mxu0 0.0
    %2625 = vmatpush1.msra.mxu0 0.0
    %2626 = vmatprep.subr.mxu0 0.0
    %2627 = vmatpush1.msra.mxu0 0.0
    %2628 = vmatprep.subr.mxu0 0.0
    %2629 = vmatpush1.msra.mxu0 0.0
    %2630 = vmatprep.subr.mxu0 0.0
    %2631 = vmatpush1.msra.mxu0 0.0
    %2632 = vmatprep.subr.mxu0 0.0
    %2633 = vmatpush1.msra.mxu0 0.0
    %2634 = vmatprep.subr.mxu0 0.0
    %2635 = vmatpush1.msra.mxu0 0.0
    %2636 = vmatprep.subr.mxu0 0.0
    %2637 = vmatpush1.msra.mxu0 0.0
    %2638 = vmatprep.subr.mxu0 0.0
    %2639 = vmatpush1.msra.mxu0 0.0
    %2640 = vmatprep.subr.mxu0 0.0
    %2641 = vmatpush1.msra.mxu0 0.0
    %2642 = vmatprep.subr.mxu0 0.0
    %2643 = vmatpush1.msra.mxu0 0.0
    %2644 = vmatprep.subr.mxu0 0.0
    %2645 = vmatpush1.msra.mxu0 0.0
    %2646 = vmatprep.subr.mxu0 0.0
    %2647 = vmatpush1.msra.mxu0 0.0
    %2648 = vmatprep.subr.mxu0 0.0
    %2649 = vmatpush1.msra.mxu0 0.0
    %2650 = vmatprep.subr.mxu0 0.0
    %2651 = vmatpush1.msra.mxu0 0.0
    %2652 = vmatprep.subr.mxu0 0.0
    %2653 = vmatpush1.msra.mxu0 0.0
    %2654 = vmatprep.subr.mxu0 0.0
    %2655 = vmatpush1.msra.mxu0 0.0
    %2656 = vmatprep.subr.mxu0 0.0
    %2657 = vmatpush1.msra.mxu0 0.0
    %2658 = vmatprep.subr.mxu0 0.0
    %2659 = vmatpush1.msra.mxu0 0.0
    %2660 = vmatprep.subr.mxu0 0.0
    %2661 = vmatpush1.msra.mxu0 0.0
    %2662 = vmatprep.subr.mxu0 0.0
    %2663 = vmatpush1.msra.mxu0 0.0
    %2664 = vmatprep.subr.mxu0 0.0
    %2665 = vmatpush1.msra.mxu0 0.0
    %2666 = vmatprep.mubr.f32.mxu0 0.0
    %2667 = vmatmul.mubr.f32.gmra.mrb[0].mxu0 %v2597
    %v2668 = vpop.f32.mrb[0].mxu0
    %v2669 = vadd.f32 0.0, %v2668
    %v2670 = vpop.f32.mrb[0].mxu0
    %2671 = vdwg.mxu0
    %v2672 = vadd.f32 %v2589, %v2669
    %2673 = vst.msk [vmem:[#allocation2] sm:$0x3] %vm32, %v2672
    %v2674 = vld [vmem:[%s0] sm:$0x3]
    %2676 = vset.pattern.permute.xlu0 16
    %2677 = vperm.xlu0 %2676, %v2674
    %v2678 = vpop.permute.xlu0 %2677
    %v2680 = vmul.f32 %v2678, %v49
    %v2681 = vadd.f32 %v2680, %v56
    %2683 = vrot.lane.b32.xlu0 %v2588, 68
    %v2684 = vpop.permute.xlu0 %2683
    %v2686 = vsel %vm92, %v2684, 0
    %2688 = vmatprep.subr.bf16.mxu0 0
    %2689 = vmatpush1.bf16.msra.mxu0 %v188
    %2690 = vmatprep.subr.bf16.mxu0 0
    %2691 = vmatpush1.bf16.msra.mxu0 %v196
    %2692 = vmatprep.subr.bf16.mxu0 0
    %2693 = vmatpush1.bf16.msra.mxu0 0
    %2694 = vmatprep.subr.bf16.mxu0 0
    %2695 = vmatpush1.bf16.msra.mxu0 0
    %2696 = vmatprep.subr.bf16.mxu0 0
    %2697 = vmatpush1.bf16.msra.mxu0 0
    %2698 = vmatprep.subr.bf16.mxu0 0
    %2699 = vmatpush1.bf16.msra.mxu0 0
    %2700 = vmatprep.subr.bf16.mxu0 0
    %2701 = vmatpush1.bf16.msra.mxu0 0
    %2702 = vmatprep.subr.bf16.mxu0 0
    %2703 = vmatpush1.bf16.msra.mxu0 0
    %2704 = vmatprep.subr.bf16.mxu0 0
    %2705 = vmatpush1.bf16.msra.mxu0 0
    %2706 = vmatprep.subr.bf16.mxu0 0
    %2707 = vmatpush1.bf16.msra.mxu0 0
    %2708 = vmatprep.subr.bf16.mxu0 0
    %2709 = vmatpush1.bf16.msra.mxu0 0
    %2710 = vmatprep.subr.bf16.mxu0 0
    %2711 = vmatpush1.bf16.msra.mxu0 0
    %2712 = vmatprep.subr.bf16.mxu0 0
    %2713 = vmatpush1.bf16.msra.mxu0 0
    %2714 = vmatprep.subr.bf16.mxu0 0
    %2715 = vmatpush1.bf16.msra.mxu0 0
    %2716 = vmatprep.subr.bf16.mxu0 0
    %2717 = vmatpush1.bf16.msra.mxu0 0
    %2718 = vmatprep.subr.bf16.mxu0 0
    %2719 = vmatpush1.bf16.msra.mxu0 0
    %2720 = vmatprep.mubr.bf16.mxu0 0
    %2721 = vmatmul.mubr.bf16.gmra.mrb[0].mxu0 %v2686
    %v2722 = vpop.f32.mrb[0].mxu0
    %v2723 = vadd.f32 0.0, %v2722
    %v2724 = vpop.f32.mrb[0].mxu0
    %v2725 = vpop.f32.mrb[0].mxu0
    %v2726 = vpop.f32.mrb[0].mxu0
    %2727 = vdwg.mxu0
    %v2728 = vadd.f32 %v2681, %v2723
    %v2729 = vxor.u32 %v2728, 2147483648
    %v2730 = vmul.f32 %v2729, 1.442695
    %v2731 = vpow.pop %v2730
    %v2732 = vadd.f32 %v2731, 1.0
    %v2733 = vrcp.pop %v2732
    %v2734 = vmul.f32 1.0, %v2733
    %v2735 = vmul.f32 %v2734, 2.0
    %v2736 = vsub.f32 %v2735, 1.0
    %v2737 = vmul.f32 %v2734, %v2581
    %2739 = vrot.lane.b32.xlu0 %v2736, 88
    %v2740 = vpop.permute.xlu0 %2739
    %v2742 = vmul.f32 %v2734, %v2740
    %2744 = vrot.lane.b32.xlu0 %v2742, 20
    %v2745 = vpop.permute.xlu0 %2744
    %v2747 = vadd.f32 %v2737, %v2745
    %v2748 = vtanh.pop %v2747
    %2750 = vrot.lane.b32.xlu0 %v2748, 40
    %v2751 = vpop.permute.xlu0 %2750
    %v2753 = vmul.f32 %v2734, %v2751
    %v2754 = vpack.c.bf16 %v2753, %v2753
    %v2755 = vld [vmem:[#allocation2] sm:$0x3]
    %s2756 = scalar_lea.vmem %s4, 384
    %v2757 = vld [vmem:[%s2756] sm:$0xff]
    %v2758 = vld [vmem:[%s2756 + $0x8] sm:$0xff]
    %v2759 = vld [vmem:[%s2756 + $0x10] sm:$0xf]
    %2761 = vrot.lane.b32.xlu0 %v2753, 68
    %v2762 = vpop.permute.xlu0 %2761
    %v2763 = vsel %vm92, %v2762, 0
    %v2766 = vsel %vm95, %v2759, 0
    %2768 = vmatprep.subr.mxu0 0.0
    %2769 = vmatpush1.msra.mxu0 %v2757
    %2770 = vmatprep.subr.mxu0 0.0
    %2771 = vmatpush1.msra.mxu0 %v2758
    %2772 = vmatprep.subr.mxu0 0.0
    %2773 = vmatpush1.msra.mxu0 %v2766
    %2774 = vmatprep.subr.mxu0 0.0
    %2775 = vmatpush1.msra.mxu0 0.0
    %2776 = vmatprep.subr.mxu0 0.0
    %2777 = vmatpush1.msra.mxu0 0.0
    %2778 = vmatprep.subr.mxu0 0.0
    %2779 = vmatpush1.msra.mxu0 0.0
    %2780 = vmatprep.subr.mxu0 0.0
    %2781 = vmatpush1.msra.mxu0 0.0
    %2782 = vmatprep.subr.mxu0 0.0
    %2783 = vmatpush1.msra.mxu0 0.0
    %2784 = vmatprep.subr.mxu0 0.0
    %2785 = vmatpush1.msra.mxu0 0.0
    %2786 = vmatprep.subr.mxu0 0.0
    %2787 = vmatpush1.msra.mxu0 0.0
    %2788 = vmatprep.subr.mxu0 0.0
    %2789 = vmatpush1.msra.mxu0 0.0
    %2790 = vmatprep.subr.mxu0 0.0
    %2791 = vmatpush1.msra.mxu0 0.0
    %2792 = vmatprep.subr.mxu0 0.0
    %2793 = vmatpush1.msra.mxu0 0.0
    %2794 = vmatprep.subr.mxu0 0.0
    %2795 = vmatpush1.msra.mxu0 0.0
    %2796 = vmatprep.subr.mxu0 0.0
    %2797 = vmatpush1.msra.mxu0 0.0
    %2798 = vmatprep.subr.mxu0 0.0
    %2799 = vmatpush1.msra.mxu0 0.0
    %2800 = vmatprep.subr.mxu0 0.0
    %2801 = vmatpush1.msra.mxu0 0.0
    %2802 = vmatprep.subr.mxu0 0.0
    %2803 = vmatpush1.msra.mxu0 0.0
    %2804 = vmatprep.subr.mxu0 0.0
    %2805 = vmatpush1.msra.mxu0 0.0
    %2806 = vmatprep.subr.mxu0 0.0
    %2807 = vmatpush1.msra.mxu0 0.0
    %2808 = vmatprep.subr.mxu0 0.0
    %2809 = vmatpush1.msra.mxu0 0.0
    %2810 = vmatprep.subr.mxu0 0.0
    %2811 = vmatpush1.msra.mxu0 0.0
    %2812 = vmatprep.subr.mxu0 0.0
    %2813 = vmatpush1.msra.mxu0 0.0
    %2814 = vmatprep.subr.mxu0 0.0
    %2815 = vmatpush1.msra.mxu0 0.0
    %2816 = vmatprep.subr.mxu0 0.0
    %2817 = vmatpush1.msra.mxu0 0.0
    %2818 = vmatprep.subr.mxu0 0.0
    %2819 = vmatpush1.msra.mxu0 0.0
    %2820 = vmatprep.subr.mxu0 0.0
    %2821 = vmatpush1.msra.mxu0 0.0
    %2822 = vmatprep.subr.mxu0 0.0
    %2823 = vmatpush1.msra.mxu0 0.0
    %2824 = vmatprep.subr.mxu0 0.0
    %2825 = vmatpush1.msra.mxu0 0.0
    %2826 = vmatprep.subr.mxu0 0.0
    %2827 = vmatpush1.msra.mxu0 0.0
    %2828 = vmatprep.subr.mxu0 0.0
    %2829 = vmatpush1.msra.mxu0 0.0
    %2830 = vmatprep.subr.mxu0 0.0
    %2831 = vmatpush1.msra.mxu0 0.0
    %2832 = vmatprep.mubr.f32.mxu0 0.0
    %2833 = vmatmul.mubr.f32.gmra.mrb[0].mxu0 %v2763
    %v2834 = vpop.f32.mrb[0].mxu0
    %v2835 = vadd.f32 0.0, %v2834
    %v2836 = vpop.f32.mrb[0].mxu0
    %2837 = vdwg.mxu0
    %v2838 = vadd.f32 %v2755, %v2835
    %2839 = vst.msk [vmem:[#allocation2] sm:$0x3] %vm32, %v2838
    %v2840 = vld [vmem:[%s0] sm:$0x3]
    %2842 = vset.pattern.permute.xlu0 17
    %2843 = vperm.xlu0 %2842, %v2840
    %v2844 = vpop.permute.xlu0 %2843
    %v2846 = vmul.f32 %v2844, %v49
    %v2847 = vadd.f32 %v2846, %v56
    %2849 = vrot.lane.b32.xlu0 %v2754, 68
    %v2850 = vpop.permute.xlu0 %2849
    %v2852 = vsel %vm92, %v2850, 0
    %2854 = vmatprep.subr.bf16.mxu0 0
    %2855 = vmatpush1.bf16.msra.mxu0 %v188
    %2856 = vmatprep.subr.bf16.mxu0 0
    %2857 = vmatpush1.bf16.msra.mxu0 %v196
    %2858 = vmatprep.subr.bf16.mxu0 0
    %2859 = vmatpush1.bf16.msra.mxu0 0
    %2860 = vmatprep.subr.bf16.mxu0 0
    %2861 = vmatpush1.bf16.msra.mxu0 0
    %2862 = vmatprep.subr.bf16.mxu0 0
    %2863 = vmatpush1.bf16.msra.mxu0 0
    %2864 = vmatprep.subr.bf16.mxu0 0
    %2865 = vmatpush1.bf16.msra.mxu0 0
    %2866 = vmatprep.subr.bf16.mxu0 0
    %2867 = vmatpush1.bf16.msra.mxu0 0
    %2868 = vmatprep.subr.bf16.mxu0 0
    %2869 = vmatpush1.bf16.msra.mxu0 0
    %2870 = vmatprep.subr.bf16.mxu0 0
    %2871 = vmatpush1.bf16.msra.mxu0 0
    %2872 = vmatprep.subr.bf16.mxu0 0
    %2873 = vmatpush1.bf16.msra.mxu0 0
    %2874 = vmatprep.subr.bf16.mxu0 0
    %2875 = vmatpush1.bf16.msra.mxu0 0
    %2876 = vmatprep.subr.bf16.mxu0 0
    %2877 = vmatpush1.bf16.msra.mxu0 0
    %2878 = vmatprep.subr.bf16.mxu0 0
    %2879 = vmatpush1.bf16.msra.mxu0 0
    %2880 = vmatprep.subr.bf16.mxu0 0
    %2881 = vmatpush1.bf16.msra.mxu0 0
    %2882 = vmatprep.subr.bf16.mxu0 0
    %2883 = vmatpush1.bf16.msra.mxu0 0
    %2884 = vmatprep.subr.bf16.mxu0 0
    %2885 = vmatpush1.bf16.msra.mxu0 0
    %2886 = vmatprep.mubr.bf16.mxu0 0
    %2887 = vmatmul.mubr.bf16.gmra.mrb[0].mxu0 %v2852
    %v2888 = vpop.f32.mrb[0].mxu0
    %v2889 = vadd.f32 0.0, %v2888
    %v2890 = vpop.f32.mrb[0].mxu0
    %v2891 = vpop.f32.mrb[0].mxu0
    %v2892 = vpop.f32.mrb[0].mxu0
    %2893 = vdwg.mxu0
    %v2894 = vadd.f32 %v2847, %v2889
    %v2895 = vxor.u32 %v2894, 2147483648
    %v2896 = vmul.f32 %v2895, 1.442695
    %v2897 = vpow.pop %v2896
    %v2898 = vadd.f32 %v2897, 1.0
    %v2899 = vrcp.pop %v2898
    %v2900 = vmul.f32 1.0, %v2899
    %v2901 = vmul.f32 %v2900, 2.0
    %v2902 = vsub.f32 %v2901, 1.0
    %v2903 = vmul.f32 %v2900, %v2747
    %2905 = vrot.lane.b32.xlu0 %v2902, 88
    %v2906 = vpop.permute.xlu0 %2905
    %v2908 = vmul.f32 %v2900, %v2906
    %2910 = vrot.lane.b32.xlu0 %v2908, 20
    %v2911 = vpop.permute.xlu0 %2910
    %v2913 = vadd.f32 %v2903, %v2911
    %v2914 = vtanh.pop %v2913
    %2916 = vrot.lane.b32.xlu0 %v2914, 40
    %v2917 = vpop.permute.xlu0 %2916
    %v2919 = vmul.f32 %v2900, %v2917
    %v2920 = vpack.c.bf16 %v2919, %v2919
    %v2921 = vld [vmem:[#allocation2] sm:$0x3]
    %s2922 = scalar_lea.vmem %s4, 408
    %v2923 = vld [vmem:[%s2922] sm:$0xff]
    %v2924 = vld [vmem:[%s2922 + $0x8] sm:$0xff]
    %v2925 = vld [vmem:[%s2922 + $0x10] sm:$0xf]
    %2927 = vrot.lane.b32.xlu0 %v2919, 68
    %v2928 = vpop.permute.xlu0 %2927
    %v2929 = vsel %vm92, %v2928, 0
    %v2932 = vsel %vm95, %v2925, 0
    %2934 = vmatprep.subr.mxu0 0.0
    %2935 = vmatpush1.msra.mxu0 %v2923
    %2936 = vmatprep.subr.mxu0 0.0
    %2937 = vmatpush1.msra.mxu0 %v2924
    %2938 = vmatprep.subr.mxu0 0.0
    %2939 = vmatpush1.msra.mxu0 %v2932
    %2940 = vmatprep.subr.mxu0 0.0
    %2941 = vmatpush1.msra.mxu0 0.0
    %2942 = vmatprep.subr.mxu0 0.0
    %2943 = vmatpush1.msra.mxu0 0.0
    %2944 = vmatprep.subr.mxu0 0.0
    %2945 = vmatpush1.msra.mxu0 0.0
    %2946 = vmatprep.subr.mxu0 0.0
    %2947 = vmatpush1.msra.mxu0 0.0
    %2948 = vmatprep.subr.mxu0 0.0
    %2949 = vmatpush1.msra.mxu0 0.0
    %2950 = vmatprep.subr.mxu0 0.0
    %2951 = vmatpush1.msra.mxu0 0.0
    %2952 = vmatprep.subr.mxu0 0.0
    %2953 = vmatpush1.msra.mxu0 0.0
    %2954 = vmatprep.subr.mxu0 0.0
    %2955 = vmatpush1.msra.mxu0 0.0
    %2956 = vmatprep.subr.mxu0 0.0
    %2957 = vmatpush1.msra.mxu0 0.0
    %2958 = vmatprep.subr.mxu0 0.0
    %2959 = vmatpush1.msra.mxu0 0.0
    %2960 = vmatprep.subr.mxu0 0.0
    %2961 = vmatpush1.msra.mxu0 0.0
    %2962 = vmatprep.subr.mxu0 0.0
    %2963 = vmatpush1.msra.mxu0 0.0
    %2964 = vmatprep.subr.mxu0 0.0
    %2965 = vmatpush1.msra.mxu0 0.0
    %2966 = vmatprep.subr.mxu0 0.0
    %2967 = vmatpush1.msra.mxu0 0.0
    %2968 = vmatprep.subr.mxu0 0.0
    %2969 = vmatpush1.msra.mxu0 0.0
    %2970 = vmatprep.subr.mxu0 0.0
    %2971 = vmatpush1.msra.mxu0 0.0
    %2972 = vmatprep.subr.mxu0 0.0
    %2973 = vmatpush1.msra.mxu0 0.0
    %2974 = vmatprep.subr.mxu0 0.0
    %2975 = vmatpush1.msra.mxu0 0.0
    %2976 = vmatprep.subr.mxu0 0.0
    %2977 = vmatpush1.msra.mxu0 0.0
    %2978 = vmatprep.subr.mxu0 0.0
    %2979 = vmatpush1.msra.mxu0 0.0
    %2980 = vmatprep.subr.mxu0 0.0
    %2981 = vmatpush1.msra.mxu0 0.0
    %2982 = vmatprep.subr.mxu0 0.0
    %2983 = vmatpush1.msra.mxu0 0.0
    %2984 = vmatprep.subr.mxu0 0.0
    %2985 = vmatpush1.msra.mxu0 0.0
    %2986 = vmatprep.subr.mxu0 0.0
    %2987 = vmatpush1.msra.mxu0 0.0
    %2988 = vmatprep.subr.mxu0 0.0
    %2989 = vmatpush1.msra.mxu0 0.0
    %2990 = vmatprep.subr.mxu0 0.0
    %2991 = vmatpush1.msra.mxu0 0.0
    %2992 = vmatprep.subr.mxu0 0.0
    %2993 = vmatpush1.msra.mxu0 0.0
    %2994 = vmatprep.subr.mxu0 0.0
    %2995 = vmatpush1.msra.mxu0 0.0
    %2996 = vmatprep.subr.mxu0 0.0
    %2997 = vmatpush1.msra.mxu0 0.0
    %2998 = vmatprep.mubr.f32.mxu0 0.0
    %2999 = vmatmul.mubr.f32.gmra.mrb[0].mxu0 %v2929
    %v3000 = vpop.f32.mrb[0].mxu0
    %v3001 = vadd.f32 0.0, %v3000
    %v3002 = vpop.f32.mrb[0].mxu0
    %3003 = vdwg.mxu0
    %v3004 = vadd.f32 %v2921, %v3001
    %3005 = vst.msk [vmem:[#allocation2] sm:$0x3] %vm32, %v3004
    %v3006 = vld [vmem:[%s0] sm:$0x3]
    %3008 = vset.pattern.permute.xlu0 18
    %3009 = vperm.xlu0 %3008, %v3006
    %v3010 = vpop.permute.xlu0 %3009
    %v3012 = vmul.f32 %v3010, %v49
    %v3013 = vadd.f32 %v3012, %v56
    %3015 = vrot.lane.b32.xlu0 %v2920, 68
    %v3016 = vpop.permute.xlu0 %3015
    %v3018 = vsel %vm92, %v3016, 0
    %3020 = vmatprep.subr.bf16.mxu0 0
    %3021 = vmatpush1.bf16.msra.mxu0 %v188
    %3022 = vmatprep.subr.bf16.mxu0 0
    %3023 = vmatpush1.bf16.msra.mxu0 %v196
    %3024 = vmatprep.subr.bf16.mxu0 0
    %3025 = vmatpush1.bf16.msra.mxu0 0
    %3026 = vmatprep.subr.bf16.mxu0 0
    %3027 = vmatpush1.bf16.msra.mxu0 0
    %3028 = vmatprep.subr.bf16.mxu0 0
    %3029 = vmatpush1.bf16.msra.mxu0 0
    %3030 = vmatprep.subr.bf16.mxu0 0
    %3031 = vmatpush1.bf16.msra.mxu0 0
    %3032 = vmatprep.subr.bf16.mxu0 0
    %3033 = vmatpush1.bf16.msra.mxu0 0
    %3034 = vmatprep.subr.bf16.mxu0 0
    %3035 = vmatpush1.bf16.msra.mxu0 0
    %3036 = vmatprep.subr.bf16.mxu0 0
    %3037 = vmatpush1.bf16.msra.mxu0 0
    %3038 = vmatprep.subr.bf16.mxu0 0
    %3039 = vmatpush1.bf16.msra.mxu0 0
    %3040 = vmatprep.subr.bf16.mxu0 0
    %3041 = vmatpush1.bf16.msra.mxu0 0
    %3042 = vmatprep.subr.bf16.mxu0 0
    %3043 = vmatpush1.bf16.msra.mxu0 0
    %3044 = vmatprep.subr.bf16.mxu0 0
    %3045 = vmatpush1.bf16.msra.mxu0 0
    %3046 = vmatprep.subr.bf16.mxu0 0
    %3047 = vmatpush1.bf16.msra.mxu0 0
    %3048 = vmatprep.subr.bf16.mxu0 0
    %3049 = vmatpush1.bf16.msra.mxu0 0
    %3050 = vmatprep.subr.bf16.mxu0 0
    %3051 = vmatpush1.bf16.msra.mxu0 0
    %3052 = vmatprep.mubr.bf16.mxu0 0
    %3053 = vmatmul.mubr.bf16.gmra.mrb[0].mxu0 %v3018
    %v3054 = vpop.f32.mrb[0].mxu0
    %v3055 = vadd.f32 0.0, %v3054
    %v3056 = vpop.f32.mrb[0].mxu0
    %v3057 = vpop.f32.mrb[0].mxu0
    %v3058 = vpop.f32.mrb[0].mxu0
    %3059 = vdwg.mxu0
    %v3060 = vadd.f32 %v3013, %v3055
    %v3061 = vxor.u32 %v3060, 2147483648
    %v3062 = vmul.f32 %v3061, 1.442695
    %v3063 = vpow.pop %v3062
    %v3064 = vadd.f32 %v3063, 1.0
    %v3065 = vrcp.pop %v3064
    %v3066 = vmul.f32 1.0, %v3065
    %v3067 = vmul.f32 %v3066, 2.0
    %v3068 = vsub.f32 %v3067, 1.0
    %v3069 = vmul.f32 %v3066, %v2913
    %3071 = vrot.lane.b32.xlu0 %v3068, 88
    %v3072 = vpop.permute.xlu0 %3071
    %v3074 = vmul.f32 %v3066, %v3072
    %3076 = vrot.lane.b32.xlu0 %v3074, 20
    %v3077 = vpop.permute.xlu0 %3076
    %v3079 = vadd.f32 %v3069, %v3077
    %v3080 = vtanh.pop %v3079
    %3082 = vrot.lane.b32.xlu0 %v3080, 40
    %v3083 = vpop.permute.xlu0 %3082
    %v3085 = vmul.f32 %v3066, %v3083
    %v3086 = vpack.c.bf16 %v3085, %v3085
    %v3087 = vld [vmem:[#allocation2] sm:$0x3]
    %s3088 = scalar_lea.vmem %s4, 432
    %v3089 = vld [vmem:[%s3088] sm:$0xff]
    %v3090 = vld [vmem:[%s3088 + $0x8] sm:$0xff]
    %v3091 = vld [vmem:[%s3088 + $0x10] sm:$0xf]
    %3093 = vrot.lane.b32.xlu0 %v3085, 68
    %v3094 = vpop.permute.xlu0 %3093
    %v3095 = vsel %vm92, %v3094, 0
    %v3098 = vsel %vm95, %v3091, 0
    %3100 = vmatprep.subr.mxu0 0.0
    %3101 = vmatpush1.msra.mxu0 %v3089
    %3102 = vmatprep.subr.mxu0 0.0
    %3103 = vmatpush1.msra.mxu0 %v3090
    %3104 = vmatprep.subr.mxu0 0.0
    %3105 = vmatpush1.msra.mxu0 %v3098
    %3106 = vmatprep.subr.mxu0 0.0
    %3107 = vmatpush1.msra.mxu0 0.0
    %3108 = vmatprep.subr.mxu0 0.0
    %3109 = vmatpush1.msra.mxu0 0.0
    %3110 = vmatprep.subr.mxu0 0.0
    %3111 = vmatpush1.msra.mxu0 0.0
    %3112 = vmatprep.subr.mxu0 0.0
    %3113 = vmatpush1.msra.mxu0 0.0
    %3114 = vmatprep.subr.mxu0 0.0
    %3115 = vmatpush1.msra.mxu0 0.0
    %3116 = vmatprep.subr.mxu0 0.0
    %3117 = vmatpush1.msra.mxu0 0.0
    %3118 = vmatprep.subr.mxu0 0.0
    %3119 = vmatpush1.msra.mxu0 0.0
    %3120 = vmatprep.subr.mxu0 0.0
    %3121 = vmatpush1.msra.mxu0 0.0
    %3122 = vmatprep.subr.mxu0 0.0
    %3123 = vmatpush1.msra.mxu0 0.0
    %3124 = vmatprep.subr.mxu0 0.0
    %3125 = vmatpush1.msra.mxu0 0.0
    %3126 = vmatprep.subr.mxu0 0.0
    %3127 = vmatpush1.msra.mxu0 0.0
    %3128 = vmatprep.subr.mxu0 0.0
    %3129 = vmatpush1.msra.mxu0 0.0
    %3130 = vmatprep.subr.mxu0 0.0
    %3131 = vmatpush1.msra.mxu0 0.0
    %3132 = vmatprep.subr.mxu0 0.0
    %3133 = vmatpush1.msra.mxu0 0.0
    %3134 = vmatprep.subr.mxu0 0.0
    %3135 = vmatpush1.msra.mxu0 0.0
    %3136 = vmatprep.subr.mxu0 0.0
    %3137 = vmatpush1.msra.mxu0 0.0
    %3138 = vmatprep.subr.mxu0 0.0
    %3139 = vmatpush1.msra.mxu0 0.0
    %3140 = vmatprep.subr.mxu0 0.0
    %3141 = vmatpush1.msra.mxu0 0.0
    %3142 = vmatprep.subr.mxu0 0.0
    %3143 = vmatpush1.msra.mxu0 0.0
    %3144 = vmatprep.subr.mxu0 0.0
    %3145 = vmatpush1.msra.mxu0 0.0
    %3146 = vmatprep.subr.mxu0 0.0
    %3147 = vmatpush1.msra.mxu0 0.0
    %3148 = vmatprep.subr.mxu0 0.0
    %3149 = vmatpush1.msra.mxu0 0.0
    %3150 = vmatprep.subr.mxu0 0.0
    %3151 = vmatpush1.msra.mxu0 0.0
    %3152 = vmatprep.subr.mxu0 0.0
    %3153 = vmatpush1.msra.mxu0 0.0
    %3154 = vmatprep.subr.mxu0 0.0
    %3155 = vmatpush1.msra.mxu0 0.0
    %3156 = vmatprep.subr.mxu0 0.0
    %3157 = vmatpush1.msra.mxu0 0.0
    %3158 = vmatprep.subr.mxu0 0.0
    %3159 = vmatpush1.msra.mxu0 0.0
    %3160 = vmatprep.subr.mxu0 0.0
    %3161 = vmatpush1.msra.mxu0 0.0
    %3162 = vmatprep.subr.mxu0 0.0
    %3163 = vmatpush1.msra.mxu0 0.0
    %3164 = vmatprep.mubr.f32.mxu0 0.0
    %3165 = vmatmul.mubr.f32.gmra.mrb[0].mxu0 %v3095
    %v3166 = vpop.f32.mrb[0].mxu0
    %v3167 = vadd.f32 0.0, %v3166
    %v3168 = vpop.f32.mrb[0].mxu0
    %3169 = vdwg.mxu0
    %v3170 = vadd.f32 %v3087, %v3167
    %3171 = vst.msk [vmem:[#allocation2] sm:$0x3] %vm32, %v3170
    %v3172 = vld [vmem:[%s0] sm:$0x3]
    %3174 = vset.pattern.permute.xlu0 19
    %3175 = vperm.xlu0 %3174, %v3172
    %v3176 = vpop.permute.xlu0 %3175
    %v3178 = vmul.f32 %v3176, %v49
    %v3179 = vadd.f32 %v3178, %v56
    %3181 = vrot.lane.b32.xlu0 %v3086, 68
    %v3182 = vpop.permute.xlu0 %3181
    %v3184 = vsel %vm92, %v3182, 0
    %3186 = vmatprep.subr.bf16.mxu0 0
    %3187 = vmatpush1.bf16.msra.mxu0 %v188
    %3188 = vmatprep.subr.bf16.mxu0 0
    %3189 = vmatpush1.bf16.msra.mxu0 %v196
    %3190 = vmatprep.subr.bf16.mxu0 0
    %3191 = vmatpush1.bf16.msra.mxu0 0
    %3192 = vmatprep.subr.bf16.mxu0 0
    %3193 = vmatpush1.bf16.msra.mxu0 0
    %3194 = vmatprep.subr.bf16.mxu0 0
    %3195 = vmatpush1.bf16.msra.mxu0 0
    %3196 = vmatprep.subr.bf16.mxu0 0
    %3197 = vmatpush1.bf16.msra.mxu0 0
    %3198 = vmatprep.subr.bf16.mxu0 0
    %3199 = vmatpush1.bf16.msra.mxu0 0
    %3200 = vmatprep.subr.bf16.mxu0 0
    %3201 = vmatpush1.bf16.msra.mxu0 0
    %3202 = vmatprep.subr.bf16.mxu0 0
    %3203 = vmatpush1.bf16.msra.mxu0 0
    %3204 = vmatprep.subr.bf16.mxu0 0
    %3205 = vmatpush1.bf16.msra.mxu0 0
    %3206 = vmatprep.subr.bf16.mxu0 0
    %3207 = vmatpush1.bf16.msra.mxu0 0
    %3208 = vmatprep.subr.bf16.mxu0 0
    %3209 = vmatpush1.bf16.msra.mxu0 0
    %3210 = vmatprep.subr.bf16.mxu0 0
    %3211 = vmatpush1.bf16.msra.mxu0 0
    %3212 = vmatprep.subr.bf16.mxu0 0
    %3213 = vmatpush1.bf16.msra.mxu0 0
    %3214 = vmatprep.subr.bf16.mxu0 0
    %3215 = vmatpush1.bf16.msra.mxu0 0
    %3216 = vmatprep.subr.bf16.mxu0 0
    %3217 = vmatpush1.bf16.msra.mxu0 0
    %3218 = vmatprep.mubr.bf16.mxu0 0
    %3219 = vmatmul.mubr.bf16.gmra.mrb[0].mxu0 %v3184
    %v3220 = vpop.f32.mrb[0].mxu0
    %v3221 = vadd.f32 0.0, %v3220
    %v3222 = vpop.f32.mrb[0].mxu0
    %v3223 = vpop.f32.mrb[0].mxu0
    %v3224 = vpop.f32.mrb[0].mxu0
    %3225 = vdwg.mxu0
    %v3226 = vadd.f32 %v3179, %v3221
    %v3227 = vxor.u32 %v3226, 2147483648
    %v3228 = vmul.f32 %v3227, 1.442695
    %v3229 = vpow.pop %v3228
    %v3230 = vadd.f32 %v3229, 1.0
    %v3231 = vrcp.pop %v3230
    %v3232 = vmul.f32 1.0, %v3231
    %v3233 = vmul.f32 %v3232, 2.0
    %v3234 = vsub.f32 %v3233, 1.0
    %v3235 = vmul.f32 %v3232, %v3079
    %3237 = vrot.lane.b32.xlu0 %v3234, 88
    %v3238 = vpop.permute.xlu0 %3237
    %v3240 = vmul.f32 %v3232, %v3238
    %3242 = vrot.lane.b32.xlu0 %v3240, 20
    %v3243 = vpop.permute.xlu0 %3242
    %v3245 = vadd.f32 %v3235, %v3243
    %v3246 = vtanh.pop %v3245
    %3248 = vrot.lane.b32.xlu0 %v3246, 40
    %v3249 = vpop.permute.xlu0 %3248
    %v3251 = vmul.f32 %v3232, %v3249
    %v3252 = vpack.c.bf16 %v3251, %v3251
    %v3253 = vld [vmem:[#allocation2] sm:$0x3]
    %s3254 = scalar_lea.vmem %s4, 456
    %v3255 = vld [vmem:[%s3254] sm:$0xff]
    %v3256 = vld [vmem:[%s3254 + $0x8] sm:$0xff]
    %v3257 = vld [vmem:[%s3254 + $0x10] sm:$0xf]
    %3259 = vrot.lane.b32.xlu0 %v3251, 68
    %v3260 = vpop.permute.xlu0 %3259
    %v3261 = vsel %vm92, %v3260, 0
    %v3264 = vsel %vm95, %v3257, 0
    %3266 = vmatprep.subr.mxu0 0.0
    %3267 = vmatpush1.msra.mxu0 %v3255
    %3268 = vmatprep.subr.mxu0 0.0
    %3269 = vmatpush1.msra.mxu0 %v3256
    %3270 = vmatprep.subr.mxu0 0.0
    %3271 = vmatpush1.msra.mxu0 %v3264
    %3272 = vmatprep.subr.mxu0 0.0
    %3273 = vmatpush1.msra.mxu0 0.0
    %3274 = vmatprep.subr.mxu0 0.0
    %3275 = vmatpush1.msra.mxu0 0.0
    %3276 = vmatprep.subr.mxu0 0.0
    %3277 = vmatpush1.msra.mxu0 0.0
    %3278 = vmatprep.subr.mxu0 0.0
    %3279 = vmatpush1.msra.mxu0 0.0
    %3280 = vmatprep.subr.mxu0 0.0
    %3281 = vmatpush1.msra.mxu0 0.0
    %3282 = vmatprep.subr.mxu0 0.0
    %3283 = vmatpush1.msra.mxu0 0.0
    %3284 = vmatprep.subr.mxu0 0.0
    %3285 = vmatpush1.msra.mxu0 0.0
    %3286 = vmatprep.subr.mxu0 0.0
    %3287 = vmatpush1.msra.mxu0 0.0
    %3288 = vmatprep.subr.mxu0 0.0
    %3289 = vmatpush1.msra.mxu0 0.0
    %3290 = vmatprep.subr.mxu0 0.0
    %3291 = vmatpush1.msra.mxu0 0.0
    %3292 = vmatprep.subr.mxu0 0.0
    %3293 = vmatpush1.msra.mxu0 0.0
    %3294 = vmatprep.subr.mxu0 0.0
    %3295 = vmatpush1.msra.mxu0 0.0
    %3296 = vmatprep.subr.mxu0 0.0
    %3297 = vmatpush1.msra.mxu0 0.0
    %3298 = vmatprep.subr.mxu0 0.0
    %3299 = vmatpush1.msra.mxu0 0.0
    %3300 = vmatprep.subr.mxu0 0.0
    %3301 = vmatpush1.msra.mxu0 0.0
    %3302 = vmatprep.subr.mxu0 0.0
    %3303 = vmatpush1.msra.mxu0 0.0
    %3304 = vmatprep.subr.mxu0 0.0
    %3305 = vmatpush1.msra.mxu0 0.0
    %3306 = vmatprep.subr.mxu0 0.0
    %3307 = vmatpush1.msra.mxu0 0.0
    %3308 = vmatprep.subr.mxu0 0.0
    %3309 = vmatpush1.msra.mxu0 0.0
    %3310 = vmatprep.subr.mxu0 0.0
    %3311 = vmatpush1.msra.mxu0 0.0
    %3312 = vmatprep.subr.mxu0 0.0
    %3313 = vmatpush1.msra.mxu0 0.0
    %3314 = vmatprep.subr.mxu0 0.0
    %3315 = vmatpush1.msra.mxu0 0.0
    %3316 = vmatprep.subr.mxu0 0.0
    %3317 = vmatpush1.msra.mxu0 0.0
    %3318 = vmatprep.subr.mxu0 0.0
    %3319 = vmatpush1.msra.mxu0 0.0
    %3320 = vmatprep.subr.mxu0 0.0
    %3321 = vmatpush1.msra.mxu0 0.0
    %3322 = vmatprep.subr.mxu0 0.0
    %3323 = vmatpush1.msra.mxu0 0.0
    %3324 = vmatprep.subr.mxu0 0.0
    %3325 = vmatpush1.msra.mxu0 0.0
    %3326 = vmatprep.subr.mxu0 0.0
    %3327 = vmatpush1.msra.mxu0 0.0
    %3328 = vmatprep.subr.mxu0 0.0
    %3329 = vmatpush1.msra.mxu0 0.0
    %3330 = vmatprep.mubr.f32.mxu0 0.0
    %3331 = vmatmul.mubr.f32.gmra.mrb[0].mxu0 %v3261
    %v3332 = vpop.f32.mrb[0].mxu0
    %v3333 = vadd.f32 0.0, %v3332
    %v3334 = vpop.f32.mrb[0].mxu0
    %3335 = vdwg.mxu0
    %v3336 = vadd.f32 %v3253, %v3333
    %3337 = vst.msk [vmem:[#allocation2] sm:$0x3] %vm32, %v3336
    %v3338 = vld [vmem:[%s0] sm:$0x3]
    %3340 = vset.pattern.permute.xlu0 20
    %3341 = vperm.xlu0 %3340, %v3338
    %v3342 = vpop.permute.xlu0 %3341
    %v3344 = vmul.f32 %v3342, %v49
    %v3345 = vadd.f32 %v3344, %v56
    %3347 = vrot.lane.b32.xlu0 %v3252, 68
    %v3348 = vpop.permute.xlu0 %3347
    %v3350 = vsel %vm92, %v3348, 0
    %3352 = vmatprep.subr.bf16.mxu0 0
    %3353 = vmatpush1.bf16.msra.mxu0 %v188
    %3354 = vmatprep.subr.bf16.mxu0 0
    %3355 = vmatpush1.bf16.msra.mxu0 %v196
    %3356 = vmatprep.subr.bf16.mxu0 0
    %3357 = vmatpush1.bf16.msra.mxu0 0
    %3358 = vmatprep.subr.bf16.mxu0 0
    %3359 = vmatpush1.bf16.msra.mxu0 0
    %3360 = vmatprep.subr.bf16.mxu0 0
    %3361 = vmatpush1.bf16.msra.mxu0 0
    %3362 = vmatprep.subr.bf16.mxu0 0
    %3363 = vmatpush1.bf16.msra.mxu0 0
    %3364 = vmatprep.subr.bf16.mxu0 0
    %3365 = vmatpush1.bf16.msra.mxu0 0
    %3366 = vmatprep.subr.bf16.mxu0 0
    %3367 = vmatpush1.bf16.msra.mxu0 0
    %3368 = vmatprep.subr.bf16.mxu0 0
    %3369 = vmatpush1.bf16.msra.mxu0 0
    %3370 = vmatprep.subr.bf16.mxu0 0
    %3371 = vmatpush1.bf16.msra.mxu0 0
    %3372 = vmatprep.subr.bf16.mxu0 0
    %3373 = vmatpush1.bf16.msra.mxu0 0
    %3374 = vmatprep.subr.bf16.mxu0 0
    %3375 = vmatpush1.bf16.msra.mxu0 0
    %3376 = vmatprep.subr.bf16.mxu0 0
    %3377 = vmatpush1.bf16.msra.mxu0 0
    %3378 = vmatprep.subr.bf16.mxu0 0
    %3379 = vmatpush1.bf16.msra.mxu0 0
    %3380 = vmatprep.subr.bf16.mxu0 0
    %3381 = vmatpush1.bf16.msra.mxu0 0
    %3382 = vmatprep.subr.bf16.mxu0 0
    %3383 = vmatpush1.bf16.msra.mxu0 0
    %3384 = vmatprep.mubr.bf16.mxu0 0
    %3385 = vmatmul.mubr.bf16.gmra.mrb[0].mxu0 %v3350
    %v3386 = vpop.f32.mrb[0].mxu0
    %v3387 = vadd.f32 0.0, %v3386
    %v3388 = vpop.f32.mrb[0].mxu0
    %v3389 = vpop.f32.mrb[0].mxu0
    %v3390 = vpop.f32.mrb[0].mxu0
    %3391 = vdwg.mxu0
    %v3392 = vadd.f32 %v3345, %v3387
    %v3393 = vxor.u32 %v3392, 2147483648
    %v3394 = vmul.f32 %v3393, 1.442695
    %v3395 = vpow.pop %v3394
    %v3396 = vadd.f32 %v3395, 1.0
    %v3397 = vrcp.pop %v3396
    %v3398 = vmul.f32 1.0, %v3397
    %v3399 = vmul.f32 %v3398, 2.0
    %v3400 = vsub.f32 %v3399, 1.0
    %v3401 = vmul.f32 %v3398, %v3245
    %3403 = vrot.lane.b32.xlu0 %v3400, 88
    %v3404 = vpop.permute.xlu0 %3403
    %v3406 = vmul.f32 %v3398, %v3404
    %3408 = vrot.lane.b32.xlu0 %v3406, 20
    %v3409 = vpop.permute.xlu0 %3408
    %v3411 = vadd.f32 %v3401, %v3409
    %v3412 = vtanh.pop %v3411
    %3414 = vrot.lane.b32.xlu0 %v3412, 40
    %v3415 = vpop.permute.xlu0 %3414
    %v3417 = vmul.f32 %v3398, %v3415
    %v3418 = vpack.c.bf16 %v3417, %v3417
    %v3419 = vld [vmem:[#allocation2] sm:$0x3]
    %s3420 = scalar_lea.vmem %s4, 480
    %v3421 = vld [vmem:[%s3420] sm:$0xff]
    %v3422 = vld [vmem:[%s3420 + $0x8] sm:$0xff]
    %v3423 = vld [vmem:[%s3420 + $0x10] sm:$0xf]
    %3425 = vrot.lane.b32.xlu0 %v3417, 68
    %v3426 = vpop.permute.xlu0 %3425
    %v3427 = vsel %vm92, %v3426, 0
    %v3430 = vsel %vm95, %v3423, 0
    %3432 = vmatprep.subr.mxu0 0.0
    %3433 = vmatpush1.msra.mxu0 %v3421
    %3434 = vmatprep.subr.mxu0 0.0
    %3435 = vmatpush1.msra.mxu0 %v3422
    %3436 = vmatprep.subr.mxu0 0.0
    %3437 = vmatpush1.msra.mxu0 %v3430
    %3438 = vmatprep.subr.mxu0 0.0
    %3439 = vmatpush1.msra.mxu0 0.0
    %3440 = vmatprep.subr.mxu0 0.0
    %3441 = vmatpush1.msra.mxu0 0.0
    %3442 = vmatprep.subr.mxu0 0.0
    %3443 = vmatpush1.msra.mxu0 0.0
    %3444 = vmatprep.subr.mxu0 0.0
    %3445 = vmatpush1.msra.mxu0 0.0
    %3446 = vmatprep.subr.mxu0 0.0
    %3447 = vmatpush1.msra.mxu0 0.0
    %3448 = vmatprep.subr.mxu0 0.0
    %3449 = vmatpush1.msra.mxu0 0.0
    %3450 = vmatprep.subr.mxu0 0.0
    %3451 = vmatpush1.msra.mxu0 0.0
    %3452 = vmatprep.subr.mxu0 0.0
    %3453 = vmatpush1.msra.mxu0 0.0
    %3454 = vmatprep.subr.mxu0 0.0
    %3455 = vmatpush1.msra.mxu0 0.0
    %3456 = vmatprep.subr.mxu0 0.0
    %3457 = vmatpush1.msra.mxu0 0.0
    %3458 = vmatprep.subr.mxu0 0.0
    %3459 = vmatpush1.msra.mxu0 0.0
    %3460 = vmatprep.subr.mxu0 0.0
    %3461 = vmatpush1.msra.mxu0 0.0
    %3462 = vmatprep.subr.mxu0 0.0
    %3463 = vmatpush1.msra.mxu0 0.0
    %3464 = vmatprep.subr.mxu0 0.0
    %3465 = vmatpush1.msra.mxu0 0.0
    %3466 = vmatprep.subr.mxu0 0.0
    %3467 = vmatpush1.msra.mxu0 0.0
    %3468 = vmatprep.subr.mxu0 0.0
    %3469 = vmatpush1.msra.mxu0 0.0
    %3470 = vmatprep.subr.mxu0 0.0
    %3471 = vmatpush1.msra.mxu0 0.0
    %3472 = vmatprep.subr.mxu0 0.0
    %3473 = vmatpush1.msra.mxu0 0.0
    %3474 = vmatprep.subr.mxu0 0.0
    %3475 = vmatpush1.msra.mxu0 0.0
    %3476 = vmatprep.subr.mxu0 0.0
    %3477 = vmatpush1.msra.mxu0 0.0
    %3478 = vmatprep.subr.mxu0 0.0
    %3479 = vmatpush1.msra.mxu0 0.0
    %3480 = vmatprep.subr.mxu0 0.0
    %3481 = vmatpush1.msra.mxu0 0.0
    %3482 = vmatprep.subr.mxu0 0.0
    %3483 = vmatpush1.msra.mxu0 0.0
    %3484 = vmatprep.subr.mxu0 0.0
    %3485 = vmatpush1.msra.mxu0 0.0
    %3486 = vmatprep.subr.mxu0 0.0
    %3487 = vmatpush1.msra.mxu0 0.0
    %3488 = vmatprep.subr.mxu0 0.0
    %3489 = vmatpush1.msra.mxu0 0.0
    %3490 = vmatprep.subr.mxu0 0.0
    %3491 = vmatpush1.msra.mxu0 0.0
    %3492 = vmatprep.subr.mxu0 0.0
    %3493 = vmatpush1.msra.mxu0 0.0
    %3494 = vmatprep.subr.mxu0 0.0
    %3495 = vmatpush1.msra.mxu0 0.0
    %3496 = vmatprep.mubr.f32.mxu0 0.0
    %3497 = vmatmul.mubr.f32.gmra.mrb[0].mxu0 %v3427
    %v3498 = vpop.f32.mrb[0].mxu0
    %v3499 = vadd.f32 0.0, %v3498
    %v3500 = vpop.f32.mrb[0].mxu0
    %3501 = vdwg.mxu0
    %v3502 = vadd.f32 %v3419, %v3499
    %3503 = vst.msk [vmem:[#allocation2] sm:$0x3] %vm32, %v3502
    %v3504 = vld [vmem:[%s0] sm:$0x3]
    %3506 = vset.pattern.permute.xlu0 21
    %3507 = vperm.xlu0 %3506, %v3504
    %v3508 = vpop.permute.xlu0 %3507
    %v3510 = vmul.f32 %v3508, %v49
    %v3511 = vadd.f32 %v3510, %v56
    %3513 = vrot.lane.b32.xlu0 %v3418, 68
    %v3514 = vpop.permute.xlu0 %3513
    %v3516 = vsel %vm92, %v3514, 0
    %3518 = vmatprep.subr.bf16.mxu0 0
    %3519 = vmatpush1.bf16.msra.mxu0 %v188
    %3520 = vmatprep.subr.bf16.mxu0 0
    %3521 = vmatpush1.bf16.msra.mxu0 %v196
    %3522 = vmatprep.subr.bf16.mxu0 0
    %3523 = vmatpush1.bf16.msra.mxu0 0
    %3524 = vmatprep.subr.bf16.mxu0 0
    %3525 = vmatpush1.bf16.msra.mxu0 0
    %3526 = vmatprep.subr.bf16.mxu0 0
    %3527 = vmatpush1.bf16.msra.mxu0 0
    %3528 = vmatprep.subr.bf16.mxu0 0
    %3529 = vmatpush1.bf16.msra.mxu0 0
    %3530 = vmatprep.subr.bf16.mxu0 0
    %3531 = vmatpush1.bf16.msra.mxu0 0
    %3532 = vmatprep.subr.bf16.mxu0 0
    %3533 = vmatpush1.bf16.msra.mxu0 0
    %3534 = vmatprep.subr.bf16.mxu0 0
    %3535 = vmatpush1.bf16.msra.mxu0 0
    %3536 = vmatprep.subr.bf16.mxu0 0
    %3537 = vmatpush1.bf16.msra.mxu0 0
    %3538 = vmatprep.subr.bf16.mxu0 0
    %3539 = vmatpush1.bf16.msra.mxu0 0
    %3540 = vmatprep.subr.bf16.mxu0 0
    %3541 = vmatpush1.bf16.msra.mxu0 0
    %3542 = vmatprep.subr.bf16.mxu0 0
    %3543 = vmatpush1.bf16.msra.mxu0 0
    %3544 = vmatprep.subr.bf16.mxu0 0
    %3545 = vmatpush1.bf16.msra.mxu0 0
    %3546 = vmatprep.subr.bf16.mxu0 0
    %3547 = vmatpush1.bf16.msra.mxu0 0
    %3548 = vmatprep.subr.bf16.mxu0 0
    %3549 = vmatpush1.bf16.msra.mxu0 0
    %3550 = vmatprep.mubr.bf16.mxu0 0
    %3551 = vmatmul.mubr.bf16.gmra.mrb[0].mxu0 %v3516
    %v3552 = vpop.f32.mrb[0].mxu0
    %v3553 = vadd.f32 0.0, %v3552
    %v3554 = vpop.f32.mrb[0].mxu0
    %v3555 = vpop.f32.mrb[0].mxu0
    %v3556 = vpop.f32.mrb[0].mxu0
    %3557 = vdwg.mxu0
    %v3558 = vadd.f32 %v3511, %v3553
    %v3559 = vxor.u32 %v3558, 2147483648
    %v3560 = vmul.f32 %v3559, 1.442695
    %v3561 = vpow.pop %v3560
    %v3562 = vadd.f32 %v3561, 1.0
    %v3563 = vrcp.pop %v3562
    %v3564 = vmul.f32 1.0, %v3563
    %v3565 = vmul.f32 %v3564, 2.0
    %v3566 = vsub.f32 %v3565, 1.0
    %v3567 = vmul.f32 %v3564, %v3411
    %3569 = vrot.lane.b32.xlu0 %v3566, 88
    %v3570 = vpop.permute.xlu0 %3569
    %v3572 = vmul.f32 %v3564, %v3570
    %3574 = vrot.lane.b32.xlu0 %v3572, 20
    %v3575 = vpop.permute.xlu0 %3574
    %v3577 = vadd.f32 %v3567, %v3575
    %v3578 = vtanh.pop %v3577
    %3580 = vrot.lane.b32.xlu0 %v3578, 40
    %v3581 = vpop.permute.xlu0 %3580
    %v3583 = vmul.f32 %v3564, %v3581
    %v3584 = vpack.c.bf16 %v3583, %v3583
    %v3585 = vld [vmem:[#allocation2] sm:$0x3]
    %s3586 = scalar_lea.vmem %s4, 504
    %v3587 = vld [vmem:[%s3586] sm:$0xff]
    %v3588 = vld [vmem:[%s3586 + $0x8] sm:$0xff]
    %v3589 = vld [vmem:[%s3586 + $0x10] sm:$0xf]
    %3591 = vrot.lane.b32.xlu0 %v3583, 68
    %v3592 = vpop.permute.xlu0 %3591
    %v3593 = vsel %vm92, %v3592, 0
    %v3596 = vsel %vm95, %v3589, 0
    %3598 = vmatprep.subr.mxu0 0.0
    %3599 = vmatpush1.msra.mxu0 %v3587
    %3600 = vmatprep.subr.mxu0 0.0
    %3601 = vmatpush1.msra.mxu0 %v3588
    %3602 = vmatprep.subr.mxu0 0.0
    %3603 = vmatpush1.msra.mxu0 %v3596
    %3604 = vmatprep.subr.mxu0 0.0
    %3605 = vmatpush1.msra.mxu0 0.0
    %3606 = vmatprep.subr.mxu0 0.0
    %3607 = vmatpush1.msra.mxu0 0.0
    %3608 = vmatprep.subr.mxu0 0.0
    %3609 = vmatpush1.msra.mxu0 0.0
    %3610 = vmatprep.subr.mxu0 0.0
    %3611 = vmatpush1.msra.mxu0 0.0
    %3612 = vmatprep.subr.mxu0 0.0
    %3613 = vmatpush1.msra.mxu0 0.0
    %3614 = vmatprep.subr.mxu0 0.0
    %3615 = vmatpush1.msra.mxu0 0.0
    %3616 = vmatprep.subr.mxu0 0.0
    %3617 = vmatpush1.msra.mxu0 0.0
    %3618 = vmatprep.subr.mxu0 0.0
    %3619 = vmatpush1.msra.mxu0 0.0
    %3620 = vmatprep.subr.mxu0 0.0
    %3621 = vmatpush1.msra.mxu0 0.0
    %3622 = vmatprep.subr.mxu0 0.0
    %3623 = vmatpush1.msra.mxu0 0.0
    %3624 = vmatprep.subr.mxu0 0.0
    %3625 = vmatpush1.msra.mxu0 0.0
    %3626 = vmatprep.subr.mxu0 0.0
    %3627 = vmatpush1.msra.mxu0 0.0
    %3628 = vmatprep.subr.mxu0 0.0
    %3629 = vmatpush1.msra.mxu0 0.0
    %3630 = vmatprep.subr.mxu0 0.0
    %3631 = vmatpush1.msra.mxu0 0.0
    %3632 = vmatprep.subr.mxu0 0.0
    %3633 = vmatpush1.msra.mxu0 0.0
    %3634 = vmatprep.subr.mxu0 0.0
    %3635 = vmatpush1.msra.mxu0 0.0
    %3636 = vmatprep.subr.mxu0 0.0
    %3637 = vmatpush1.msra.mxu0 0.0
    %3638 = vmatprep.subr.mxu0 0.0
    %3639 = vmatpush1.msra.mxu0 0.0
    %3640 = vmatprep.subr.mxu0 0.0
    %3641 = vmatpush1.msra.mxu0 0.0
    %3642 = vmatprep.subr.mxu0 0.0
    %3643 = vmatpush1.msra.mxu0 0.0
    %3644 = vmatprep.subr.mxu0 0.0
    %3645 = vmatpush1.msra.mxu0 0.0
    %3646 = vmatprep.subr.mxu0 0.0
    %3647 = vmatpush1.msra.mxu0 0.0
    %3648 = vmatprep.subr.mxu0 0.0
    %3649 = vmatpush1.msra.mxu0 0.0
    %3650 = vmatprep.subr.mxu0 0.0
    %3651 = vmatpush1.msra.mxu0 0.0
    %3652 = vmatprep.subr.mxu0 0.0
    %3653 = vmatpush1.msra.mxu0 0.0
    %3654 = vmatprep.subr.mxu0 0.0
    %3655 = vmatpush1.msra.mxu0 0.0
    %3656 = vmatprep.subr.mxu0 0.0
    %3657 = vmatpush1.msra.mxu0 0.0
    %3658 = vmatprep.subr.mxu0 0.0
    %3659 = vmatpush1.msra.mxu0 0.0
    %3660 = vmatprep.subr.mxu0 0.0
    %3661 = vmatpush1.msra.mxu0 0.0
    %3662 = vmatprep.mubr.f32.mxu0 0.0
    %3663 = vmatmul.mubr.f32.gmra.mrb[0].mxu0 %v3593
    %v3664 = vpop.f32.mrb[0].mxu0
    %v3665 = vadd.f32 0.0, %v3664
    %v3666 = vpop.f32.mrb[0].mxu0
    %3667 = vdwg.mxu0
    %v3668 = vadd.f32 %v3585, %v3665
    %3669 = vst.msk [vmem:[#allocation2] sm:$0x3] %vm32, %v3668
    %v3670 = vld [vmem:[%s0] sm:$0x3]
    %3672 = vset.pattern.permute.xlu0 22
    %3673 = vperm.xlu0 %3672, %v3670
    %v3674 = vpop.permute.xlu0 %3673
    %v3676 = vmul.f32 %v3674, %v49
    %v3677 = vadd.f32 %v3676, %v56
    %3679 = vrot.lane.b32.xlu0 %v3584, 68
    %v3680 = vpop.permute.xlu0 %3679
    %v3682 = vsel %vm92, %v3680, 0
    %3684 = vmatprep.subr.bf16.mxu0 0
    %3685 = vmatpush1.bf16.msra.mxu0 %v188
    %3686 = vmatprep.subr.bf16.mxu0 0
    %3687 = vmatpush1.bf16.msra.mxu0 %v196
    %3688 = vmatprep.subr.bf16.mxu0 0
    %3689 = vmatpush1.bf16.msra.mxu0 0
    %3690 = vmatprep.subr.bf16.mxu0 0
    %3691 = vmatpush1.bf16.msra.mxu0 0
    %3692 = vmatprep.subr.bf16.mxu0 0
    %3693 = vmatpush1.bf16.msra.mxu0 0
    %3694 = vmatprep.subr.bf16.mxu0 0
    %3695 = vmatpush1.bf16.msra.mxu0 0
    %3696 = vmatprep.subr.bf16.mxu0 0
    %3697 = vmatpush1.bf16.msra.mxu0 0
    %3698 = vmatprep.subr.bf16.mxu0 0
    %3699 = vmatpush1.bf16.msra.mxu0 0
    %3700 = vmatprep.subr.bf16.mxu0 0
    %3701 = vmatpush1.bf16.msra.mxu0 0
    %3702 = vmatprep.subr.bf16.mxu0 0
    %3703 = vmatpush1.bf16.msra.mxu0 0
    %3704 = vmatprep.subr.bf16.mxu0 0
    %3705 = vmatpush1.bf16.msra.mxu0 0
    %3706 = vmatprep.subr.bf16.mxu0 0
    %3707 = vmatpush1.bf16.msra.mxu0 0
    %3708 = vmatprep.subr.bf16.mxu0 0
    %3709 = vmatpush1.bf16.msra.mxu0 0
    %3710 = vmatprep.subr.bf16.mxu0 0
    %3711 = vmatpush1.bf16.msra.mxu0 0
    %3712 = vmatprep.subr.bf16.mxu0 0
    %3713 = vmatpush1.bf16.msra.mxu0 0
    %3714 = vmatprep.subr.bf16.mxu0 0
    %3715 = vmatpush1.bf16.msra.mxu0 0
    %3716 = vmatprep.mubr.bf16.mxu0 0
    %3717 = vmatmul.mubr.bf16.gmra.mrb[0].mxu0 %v3682
    %v3718 = vpop.f32.mrb[0].mxu0
    %v3719 = vadd.f32 0.0, %v3718
    %v3720 = vpop.f32.mrb[0].mxu0
    %v3721 = vpop.f32.mrb[0].mxu0
    %v3722 = vpop.f32.mrb[0].mxu0
    %3723 = vdwg.mxu0
    %v3724 = vadd.f32 %v3677, %v3719
    %v3725 = vxor.u32 %v3724, 2147483648
    %v3726 = vmul.f32 %v3725, 1.442695
    %v3727 = vpow.pop %v3726
    %v3728 = vadd.f32 %v3727, 1.0
    %v3729 = vrcp.pop %v3728
    %v3730 = vmul.f32 1.0, %v3729
    %v3731 = vmul.f32 %v3730, 2.0
    %v3732 = vsub.f32 %v3731, 1.0
    %v3733 = vmul.f32 %v3730, %v3577
    %3735 = vrot.lane.b32.xlu0 %v3732, 88
    %v3736 = vpop.permute.xlu0 %3735
    %v3738 = vmul.f32 %v3730, %v3736
    %3740 = vrot.lane.b32.xlu0 %v3738, 20
    %v3741 = vpop.permute.xlu0 %3740
    %v3743 = vadd.f32 %v3733, %v3741
    %v3744 = vtanh.pop %v3743
    %3746 = vrot.lane.b32.xlu0 %v3744, 40
    %v3747 = vpop.permute.xlu0 %3746
    %v3749 = vmul.f32 %v3730, %v3747
    %v3750 = vpack.c.bf16 %v3749, %v3749
    %v3751 = vld [vmem:[#allocation2] sm:$0x3]
    %s3752 = scalar_lea.vmem %s4, 528
    %v3753 = vld [vmem:[%s3752] sm:$0xff]
    %v3754 = vld [vmem:[%s3752 + $0x8] sm:$0xff]
    %v3755 = vld [vmem:[%s3752 + $0x10] sm:$0xf]
    %3757 = vrot.lane.b32.xlu0 %v3749, 68
    %v3758 = vpop.permute.xlu0 %3757
    %v3759 = vsel %vm92, %v3758, 0
    %v3762 = vsel %vm95, %v3755, 0
    %3764 = vmatprep.subr.mxu0 0.0
    %3765 = vmatpush1.msra.mxu0 %v3753
    %3766 = vmatprep.subr.mxu0 0.0
    %3767 = vmatpush1.msra.mxu0 %v3754
    %3768 = vmatprep.subr.mxu0 0.0
    %3769 = vmatpush1.msra.mxu0 %v3762
    %3770 = vmatprep.subr.mxu0 0.0
    %3771 = vmatpush1.msra.mxu0 0.0
    %3772 = vmatprep.subr.mxu0 0.0
    %3773 = vmatpush1.msra.mxu0 0.0
    %3774 = vmatprep.subr.mxu0 0.0
    %3775 = vmatpush1.msra.mxu0 0.0
    %3776 = vmatprep.subr.mxu0 0.0
    %3777 = vmatpush1.msra.mxu0 0.0
    %3778 = vmatprep.subr.mxu0 0.0
    %3779 = vmatpush1.msra.mxu0 0.0
    %3780 = vmatprep.subr.mxu0 0.0
    %3781 = vmatpush1.msra.mxu0 0.0
    %3782 = vmatprep.subr.mxu0 0.0
    %3783 = vmatpush1.msra.mxu0 0.0
    %3784 = vmatprep.subr.mxu0 0.0
    %3785 = vmatpush1.msra.mxu0 0.0
    %3786 = vmatprep.subr.mxu0 0.0
    %3787 = vmatpush1.msra.mxu0 0.0
    %3788 = vmatprep.subr.mxu0 0.0
    %3789 = vmatpush1.msra.mxu0 0.0
    %3790 = vmatprep.subr.mxu0 0.0
    %3791 = vmatpush1.msra.mxu0 0.0
    %3792 = vmatprep.subr.mxu0 0.0
    %3793 = vmatpush1.msra.mxu0 0.0
    %3794 = vmatprep.subr.mxu0 0.0
    %3795 = vmatpush1.msra.mxu0 0.0
    %3796 = vmatprep.subr.mxu0 0.0
    %3797 = vmatpush1.msra.mxu0 0.0
    %3798 = vmatprep.subr.mxu0 0.0
    %3799 = vmatpush1.msra.mxu0 0.0
    %3800 = vmatprep.subr.mxu0 0.0
    %3801 = vmatpush1.msra.mxu0 0.0
    %3802 = vmatprep.subr.mxu0 0.0
    %3803 = vmatpush1.msra.mxu0 0.0
    %3804 = vmatprep.subr.mxu0 0.0
    %3805 = vmatpush1.msra.mxu0 0.0
    %3806 = vmatprep.subr.mxu0 0.0
    %3807 = vmatpush1.msra.mxu0 0.0
    %3808 = vmatprep.subr.mxu0 0.0
    %3809 = vmatpush1.msra.mxu0 0.0
    %3810 = vmatprep.subr.mxu0 0.0
    %3811 = vmatpush1.msra.mxu0 0.0
    %3812 = vmatprep.subr.mxu0 0.0
    %3813 = vmatpush1.msra.mxu0 0.0
    %3814 = vmatprep.subr.mxu0 0.0
    %3815 = vmatpush1.msra.mxu0 0.0
    %3816 = vmatprep.subr.mxu0 0.0
    %3817 = vmatpush1.msra.mxu0 0.0
    %3818 = vmatprep.subr.mxu0 0.0
    %3819 = vmatpush1.msra.mxu0 0.0
    %3820 = vmatprep.subr.mxu0 0.0
    %3821 = vmatpush1.msra.mxu0 0.0
    %3822 = vmatprep.subr.mxu0 0.0
    %3823 = vmatpush1.msra.mxu0 0.0
    %3824 = vmatprep.subr.mxu0 0.0
    %3825 = vmatpush1.msra.mxu0 0.0
    %3826 = vmatprep.subr.mxu0 0.0
    %3827 = vmatpush1.msra.mxu0 0.0
    %3828 = vmatprep.mubr.f32.mxu0 0.0
    %3829 = vmatmul.mubr.f32.gmra.mrb[0].mxu0 %v3759
    %v3830 = vpop.f32.mrb[0].mxu0
    %v3831 = vadd.f32 0.0, %v3830
    %v3832 = vpop.f32.mrb[0].mxu0
    %3833 = vdwg.mxu0
    %v3834 = vadd.f32 %v3751, %v3831
    %3835 = vst.msk [vmem:[#allocation2] sm:$0x3] %vm32, %v3834
    %v3836 = vld [vmem:[%s0] sm:$0x3]
    %3838 = vset.pattern.permute.xlu0 23
    %3839 = vperm.xlu0 %3838, %v3836
    %v3840 = vpop.permute.xlu0 %3839
    %v3842 = vmul.f32 %v3840, %v49
    %v3843 = vadd.f32 %v3842, %v56
    %3845 = vrot.lane.b32.xlu0 %v3750, 68
    %v3846 = vpop.permute.xlu0 %3845
    %v3848 = vsel %vm92, %v3846, 0
    %3850 = vmatprep.subr.bf16.mxu0 0
    %3851 = vmatpush1.bf16.msra.mxu0 %v188
    %3852 = vmatprep.subr.bf16.mxu0 0
    %3853 = vmatpush1.bf16.msra.mxu0 %v196
    %3854 = vmatprep.subr.bf16.mxu0 0
    %3855 = vmatpush1.bf16.msra.mxu0 0
    %3856 = vmatprep.subr.bf16.mxu0 0
    %3857 = vmatpush1.bf16.msra.mxu0 0
    %3858 = vmatprep.subr.bf16.mxu0 0
    %3859 = vmatpush1.bf16.msra.mxu0 0
    %3860 = vmatprep.subr.bf16.mxu0 0
    %3861 = vmatpush1.bf16.msra.mxu0 0
    %3862 = vmatprep.subr.bf16.mxu0 0
    %3863 = vmatpush1.bf16.msra.mxu0 0
    %3864 = vmatprep.subr.bf16.mxu0 0
    %3865 = vmatpush1.bf16.msra.mxu0 0
    %3866 = vmatprep.subr.bf16.mxu0 0
    %3867 = vmatpush1.bf16.msra.mxu0 0
    %3868 = vmatprep.subr.bf16.mxu0 0
    %3869 = vmatpush1.bf16.msra.mxu0 0
    %3870 = vmatprep.subr.bf16.mxu0 0
    %3871 = vmatpush1.bf16.msra.mxu0 0
    %3872 = vmatprep.subr.bf16.mxu0 0
    %3873 = vmatpush1.bf16.msra.mxu0 0
    %3874 = vmatprep.subr.bf16.mxu0 0
    %3875 = vmatpush1.bf16.msra.mxu0 0
    %3876 = vmatprep.subr.bf16.mxu0 0
    %3877 = vmatpush1.bf16.msra.mxu0 0
    %3878 = vmatprep.subr.bf16.mxu0 0
    %3879 = vmatpush1.bf16.msra.mxu0 0
    %3880 = vmatprep.subr.bf16.mxu0 0
    %3881 = vmatpush1.bf16.msra.mxu0 0
    %3882 = vmatprep.mubr.bf16.mxu0 0
    %3883 = vmatmul.mubr.bf16.gmra.mrb[0].mxu0 %v3848
    %v3884 = vpop.f32.mrb[0].mxu0
    %v3885 = vadd.f32 0.0, %v3884
    %v3886 = vpop.f32.mrb[0].mxu0
    %v3887 = vpop.f32.mrb[0].mxu0
    %v3888 = vpop.f32.mrb[0].mxu0
    %3889 = vdwg.mxu0
    %v3890 = vadd.f32 %v3843, %v3885
    %v3891 = vxor.u32 %v3890, 2147483648
    %v3892 = vmul.f32 %v3891, 1.442695
    %v3893 = vpow.pop %v3892
    %v3894 = vadd.f32 %v3893, 1.0
    %v3895 = vrcp.pop %v3894
    %v3896 = vmul.f32 1.0, %v3895
    %v3897 = vmul.f32 %v3896, 2.0
    %v3898 = vsub.f32 %v3897, 1.0
    %v3899 = vmul.f32 %v3896, %v3743
    %3901 = vrot.lane.b32.xlu0 %v3898, 88
    %v3902 = vpop.permute.xlu0 %3901
    %v3904 = vmul.f32 %v3896, %v3902
    %3906 = vrot.lane.b32.xlu0 %v3904, 20
    %v3907 = vpop.permute.xlu0 %3906
    %v3909 = vadd.f32 %v3899, %v3907
    %v3910 = vtanh.pop %v3909
    %3912 = vrot.lane.b32.xlu0 %v3910, 40
    %v3913 = vpop.permute.xlu0 %3912
    %v3915 = vmul.f32 %v3896, %v3913
    %v3916 = vld [vmem:[#allocation2] sm:$0x3]
    %s3917 = scalar_lea.vmem %s4, 552
    %v3918 = vld [vmem:[%s3917] sm:$0xff]
    %v3919 = vld [vmem:[%s3917 + $0x8] sm:$0xff]
    %v3920 = vld [vmem:[%s3917 + $0x10] sm:$0xf]
    %3922 = vrot.lane.b32.xlu0 %v3915, 68
    %v3923 = vpop.permute.xlu0 %3922
    %v3924 = vsel %vm92, %v3923, 0
    %v3927 = vsel %vm95, %v3920, 0
    %3929 = vmatprep.subr.mxu0 0.0
    %3930 = vmatpush1.msra.mxu0 %v3918
    %3931 = vmatprep.subr.mxu0 0.0
    %3932 = vmatpush1.msra.mxu0 %v3919
    %3933 = vmatprep.subr.mxu0 0.0
    %3934 = vmatpush1.msra.mxu0 %v3927
    %3935 = vmatprep.subr.mxu0 0.0
    %3936 = vmatpush1.msra.mxu0 0.0
    %3937 = vmatprep.subr.mxu0 0.0
    %3938 = vmatpush1.msra.mxu0 0.0
    %3939 = vmatprep.subr.mxu0 0.0
    %3940 = vmatpush1.msra.mxu0 0.0
    %3941 = vmatprep.subr.mxu0 0.0
    %3942 = vmatpush1.msra.mxu0 0.0
    %3943 = vmatprep.subr.mxu0 0.0
    %3944 = vmatpush1.msra.mxu0 0.0
    %3945 = vmatprep.subr.mxu0 0.0
    %3946 = vmatpush1.msra.mxu0 0.0
    %3947 = vmatprep.subr.mxu0 0.0
    %3948 = vmatpush1.msra.mxu0 0.0
    %3949 = vmatprep.subr.mxu0 0.0
    %3950 = vmatpush1.msra.mxu0 0.0
    %3951 = vmatprep.subr.mxu0 0.0
    %3952 = vmatpush1.msra.mxu0 0.0
    %3953 = vmatprep.subr.mxu0 0.0
    %3954 = vmatpush1.msra.mxu0 0.0
    %3955 = vmatprep.subr.mxu0 0.0
    %3956 = vmatpush1.msra.mxu0 0.0
    %3957 = vmatprep.subr.mxu0 0.0
    %3958 = vmatpush1.msra.mxu0 0.0
    %3959 = vmatprep.subr.mxu0 0.0
    %3960 = vmatpush1.msra.mxu0 0.0
    %3961 = vmatprep.subr.mxu0 0.0
    %3962 = vmatpush1.msra.mxu0 0.0
    %3963 = vmatprep.subr.mxu0 0.0
    %3964 = vmatpush1.msra.mxu0 0.0
    %3965 = vmatprep.subr.mxu0 0.0
    %3966 = vmatpush1.msra.mxu0 0.0
    %3967 = vmatprep.subr.mxu0 0.0
    %3968 = vmatpush1.msra.mxu0 0.0
    %3969 = vmatprep.subr.mxu0 0.0
    %3970 = vmatpush1.msra.mxu0 0.0
    %3971 = vmatprep.subr.mxu0 0.0
    %3972 = vmatpush1.msra.mxu0 0.0
    %3973 = vmatprep.subr.mxu0 0.0
    %3974 = vmatpush1.msra.mxu0 0.0
    %3975 = vmatprep.subr.mxu0 0.0
    %3976 = vmatpush1.msra.mxu0 0.0
    %3977 = vmatprep.subr.mxu0 0.0
    %3978 = vmatpush1.msra.mxu0 0.0
    %3979 = vmatprep.subr.mxu0 0.0
    %3980 = vmatpush1.msra.mxu0 0.0
    %3981 = vmatprep.subr.mxu0 0.0
    %3982 = vmatpush1.msra.mxu0 0.0
    %3983 = vmatprep.subr.mxu0 0.0
    %3984 = vmatpush1.msra.mxu0 0.0
    %3985 = vmatprep.subr.mxu0 0.0
    %3986 = vmatpush1.msra.mxu0 0.0
    %3987 = vmatprep.subr.mxu0 0.0
    %3988 = vmatpush1.msra.mxu0 0.0
    %3989 = vmatprep.subr.mxu0 0.0
    %3990 = vmatpush1.msra.mxu0 0.0
    %3991 = vmatprep.subr.mxu0 0.0
    %3992 = vmatpush1.msra.mxu0 0.0
    %3993 = vmatprep.mubr.f32.mxu0 0.0
    %3994 = vmatmul.mubr.f32.gmra.mrb[0].mxu0 %v3924
    %v3995 = vpop.f32.mrb[0].mxu0
    %v3996 = vadd.f32 0.0, %v3995
    %v3997 = vpop.f32.mrb[0].mxu0
    %3998 = vdwg.mxu0
    %v3999 = vadd.f32 %v3916, %v3996
    %4000 = vst.msk [vmem:[#allocation2] sm:$0x3] %vm32, %v3999
    // Predicated region
    $region26: #{lstm_model_forward.1} parent=1 // pred_check
      _
    $region27: #{lstm_model_forward.1} parent=1 // pred_check_branch
      %4002 = sbr.rel (0) target = $region29
    $region28: #{lstm_model_forward.1} parent=1 // pred_region
      %s4004 = ssub.s32 32, 32
      %4005 = vsyncadd [#allocation3], %s4004
      %s4007 = sshll.u32 [#allocation2], 4
      %s4008 = int_to_ptr.vmem [resolvable:$true] %s4007
      %4010 = dma.vmem_to_hbm [thread:$0]  %s4008, 32, %s6, [#allocation3]
    $region29: #{lstm_model_forward.1} parent=1 // pred_fallthru
      _
    // Predicated region
    $region30: #{lstm_model_forward.1} parent=1 // pred_check
      _
    $region31: #{lstm_model_forward.1} parent=1 // pred_check_branch
      %4012 = sbr.rel (0) target = $region33
    $region32: #{lstm_model_forward.1} parent=1 // pred_region
      %4013 = dma.done [#allocation3], 32
    $region33: #{lstm_model_forward.1} parent=1 // pred_fallthru
      _
    %4014 = vsyncpa [#allocation3], 1

</llo_original>
